<compile_context>
chip_gen: v5e
topology: v5e:2x2
jax: 0.10.0
libtpu: 0.0.40
codegen_flags: <defaults>
</compile_context>

<pallas_src>
import functools
import math

import jax
import jax.numpy as jnp
from jax.experimental import pallas as pl
from jax.experimental.pallas import tpu as pltpu

LN_EPS = 1e-12
MM_DTYPE = jnp.bfloat16          # MXU operand / matmul-only activation dtype


def _mm(x):
    # no-op if x is already bf16 (convert_element_type short-circuits)
    return x.astype(MM_DTYPE)


def _fit_tile(dim, nominal, align):
    """Largest tile <= nominal that divides `dim` and is a multiple of `align`;
    falls back to the full dim (always legal: block == array extent)."""
    t = min(nominal, dim)
    t = (t // align) * align
    while t >= align:
        if dim % t == 0:
            return t
        t -= align
    return dim


# ----------------------------- Pallas kernels ------------------------------

def _matmul_kernel(x_ref, w_ref, b_ref, o_ref, acc_ref, *, gelu):
    k = pl.program_id(2)

    @pl.when(k == 0)
    def _():
        acc_ref[...] = jnp.zeros_like(acc_ref)

    acc_ref[...] += jnp.dot(_mm(x_ref[...]), w_ref[...],
                            preferred_element_type=jnp.float32)

    @pl.when(k == pl.num_programs(2) - 1)
    def _():
        y = acc_ref[...] + b_ref[...]
        if gelu:
            # TODO(synk): HF BERT uses erf-based gelu; tanh approx differs ~1e-3.
            c = 0.7978845608028654  # sqrt(2/pi)
            y = 0.5 * y * (1.0 + jnp.tanh(c * (y + 0.044715 * y * y * y)))
        o_ref[...] = y.astype(o_ref.dtype)


def _matmul_res_ln_kernel(x_ref, w_ref, b_ref, r_ref, g_ref, beta_ref,
                          o_ref, acc_ref):
    """LayerNorm(residual + x @ w + b), LN fused into the matmul epilogue."""
    k = pl.program_id(1)

    @pl.when(k == 0)
    def _():
        acc_ref[...] = jnp.zeros_like(acc_ref)

    acc_ref[...] += jnp.dot(_mm(x_ref[...]), w_ref[...],
                            preferred_element_type=jnp.float32)

    @pl.when(k == pl.num_programs(1) - 1)
    def _():
        y = acc_ref[...] + b_ref[...] + r_ref[...]
        mu = jnp.mean(y, axis=-1, keepdims=True)
        var = jnp.mean(jnp.square(y - mu), axis=-1, keepdims=True)
        o_ref[...] = ((y - mu) * jax.lax.rsqrt(var + LN_EPS)
                      * g_ref[...] + beta_ref[...]).astype(o_ref.dtype)


def _embed_ln_kernel(x_ref, pos_ref, type_ref, g_ref, b_ref, o_ref):
    """LayerNorm(word/inputs_embeds + pos_emb + type_emb), fully fused."""
    x = x_ref[...] + pos_ref[...] + type_ref[...]
    mu = jnp.mean(x, axis=-1, keepdims=True)
    var = jnp.mean(jnp.square(x - mu), axis=-1, keepdims=True)
    o_ref[...] = (x - mu) * jax.lax.rsqrt(var + LN_EPS) * g_ref[...] + b_ref[...]


def _attn_kernel(q_ref, k_ref, v_ref, m_ref, o_ref, *, scale):
    """One (batch, head) pair; q/k/v: (S, Dh) bf16, m: (1, S) additive f32."""
    # TODO(synk): for very long S (>~2k) tile the query dim flash-style so the
    # (S, S) f32 score intermediate stays inside v7x's VMEM budget.
    q = q_ref[...] * scale                                   # scale folded into q
    s = jax.lax.dot_general(q, k_ref[...], (((1,), (1,)), ((), ())),
                            preferred_element_type=jnp.float32)   # (S, S)
    s = s + m_ref[...]
    s = s - jnp.max(s, axis=-1, keepdims=True)
    p = jnp.exp(s)
    p = p * pl.reciprocal(jnp.sum(p, axis=-1, keepdims=True), approx=True)
    o_ref[...] = jnp.dot(p.astype(v_ref.dtype), v_ref[...],
                         preferred_element_type=jnp.float32).astype(o_ref.dtype)


def _pool_head_kernel(h_ref, m_ref, w_ref, b_ref, o_ref, *, hidden):
    """Masked mean-pool + CLS concat + head linear + softmax, one batch row."""
    h = h_ref[...]                                           # (S, H)
    m = m_ref[...]                                           # (1, S) 0/1 mask
    num = jnp.dot(m, h, preferred_element_type=jnp.float32)  # (1, H)
    den = jnp.maximum(jnp.sum(m), 1e-9)                      # torch.clamp(min=1e-9)
    mean = num / den
    cls_info = h_ref[0:1, :]                                 # output[:, 0, :]
    # head([mean, cls_info]) == mean @ W[:H] + cls_info @ W[H:] + b
    logits = (jnp.dot(mean, w_ref[0:hidden, :],
                      preferred_element_type=jnp.float32)
              + jnp.dot(cls_info, w_ref[hidden:2 * hidden, :],
                        preferred_element_type=jnp.float32)
              + b_ref[...])
    logits = logits - jnp.max(logits, axis=-1, keepdims=True)
    e = jnp.exp(logits)
    o_ref[...] = e / jnp.sum(e, axis=-1, keepdims=True)


# ----------------------------- Pallas wrappers ------------------------------

def linear(x, w, b, *, gelu=False, out_dtype=jnp.float32,
           tm=512, tn=256, tk=1536):
    """(M, K) @ (K, N) + b, optional fused tanh-GELU; tiled + pipelined.
    w is bf16 in HBM; output dtype configurable (bf16 for matmul-only uses)."""
    M, K = x.shape
    N = w.shape[1]
    tm = _fit_tile(M, tm, 16)     # 16-sublane alignment covers bf16 x / out
    tn = _fit_tile(N, tn, 128)
    tk = _fit_tile(K, tk, 256)    # whole-K where it fits; 256-wide MXU passes
    grid = (M // tm, N // tn, K // tk)
    return pl.pallas_call(
        functools.partial(_matmul_kernel, gelu=gelu),
        out_shape=jax.ShapeDtypeStruct((M, N), out_dtype),
        grid=grid,
        in_specs=[pl.BlockSpec((tm, tk), lambda i, j, k: (i, k)),
                  pl.BlockSpec((tk, tn), lambda i, j, k: (k, j)),
                  pl.BlockSpec((1, tn), lambda i, j, k: (0, j))],
        out_specs=pl.BlockSpec((tm, tn), lambda i, j, k: (i, j)),
        scratch_shapes=[pltpu.VMEM((tm, tn), jnp.float32)],
        compiler_params=pltpu.CompilerParams(
            dimension_semantics=("parallel", "parallel", "arbitrary")),
    )(x, w, b.reshape(1, N))


def linear_residual_ln(x, w, b, residual, gamma, beta, *, tm=512, tk=1536):
    """LayerNorm(residual + x @ w + b).  Output feature dim (=H) kept whole so
    the fused LN epilogue sees complete rows; M and K are tiled.
    tm<=512 keeps the full-N f32 residual/out/acc tiles inside v7x's 32 MiB
    scoped VMEM default."""
    M, K = x.shape
    N = w.shape[1]
    tm = _fit_tile(M, tm, 16)
    tk = _fit_tile(K, tk, 256)
    grid = (M // tm, K // tk)
    return pl.pallas_call(
        _matmul_res_ln_kernel,
        out_shape=jax.ShapeDtypeStruct((M, N), jnp.float32),
        grid=grid,
        in_specs=[pl.BlockSpec((tm, tk), lambda i, k: (i, k)),
                  pl.BlockSpec((tk, N), lambda i, k: (k, 0)),
                  pl.BlockSpec((1, N), lambda i, k: (0, 0)),
                  pl.BlockSpec((tm, N), lambda i, k: (i, 0)),
                  pl.BlockSpec((1, N), lambda i, k: (0, 0)),
                  pl.BlockSpec((1, N), lambda i, k: (0, 0))],
        out_specs=pl.BlockSpec((tm, N), lambda i, k: (i, 0)),
        scratch_shapes=[pltpu.VMEM((tm, N), jnp.float32)],
        compiler_params=pltpu.CompilerParams(
            dimension_semantics=("parallel", "arbitrary")),
    )(x, w, b.reshape(1, N), residual, gamma.reshape(1, N), beta.reshape(1, N))


def embed_layernorm(x, pos_emb, type_row, gamma, beta, *, ts=256):
    """x: (B, S, H) word / video embeddings; fused +pos +type +LayerNorm."""
    B, S, H = x.shape
    ts = _fit_tile(S, ts, 8)
    grid = (B, S // ts)
    return pl.pallas_call(
        _embed_ln_kernel,
        out_shape=jax.ShapeDtypeStruct((B, S, H), jnp.float32),
        grid=grid,
        in_specs=[pl.BlockSpec((pl.Squeezed(), ts, H), lambda b, s: (b, s, 0)),
                  pl.BlockSpec((ts, H), lambda b, s: (s, 0)),
                  pl.BlockSpec((1, H), lambda b, s: (0, 0)),
                  pl.BlockSpec((1, H), lambda b, s: (0, 0)),
                  pl.BlockSpec((1, H), lambda b, s: (0, 0))],
        out_specs=pl.BlockSpec((pl.Squeezed(), ts, H), lambda b, s: (b, s, 0)),
        compiler_params=pltpu.CompilerParams(
            dimension_semantics=("parallel", "parallel")),
    )(x, pos_emb[:S], type_row.reshape(1, H),
      gamma.reshape(1, H), beta.reshape(1, H))


def attention(qkv, add_mask, num_heads, scale):
    """qkv: (B, S, 3H) bf16 fused projections; add_mask: (B, 1, S) additive f32.
    Runs on a (B, num_heads) parallel grid; each step sees whole (S, Dh)
    q/k/v blocks (Dh is a full array axis -> no masked lane slicing)."""
    B, S, H3 = qkv.shape
    H = H3 // 3
    Dh = H // num_heads
    # (B, S, 3H) -> (3, B, nH, S, Dh); one XLA transpose of the bf16 tensor.
    qkv5 = qkv.reshape(B, S, 3, num_heads, Dh).transpose(2, 0, 3, 1, 4)
    sq = pl.Squeezed()
    ctx = pl.pallas_call(
        functools.partial(_attn_kernel, scale=scale),
        out_shape=jax.ShapeDtypeStruct((B, num_heads, S, Dh), MM_DTYPE),
        grid=(B, num_heads),
        in_specs=[
            pl.BlockSpec((sq, sq, sq, S, Dh), lambda b, h: (0, b, h, 0, 0)),  # q
            pl.BlockSpec((sq, sq, sq, S, Dh), lambda b, h: (1, b, h, 0, 0)),  # k
            pl.BlockSpec((sq, sq, sq, S, Dh), lambda b, h: (2, b, h, 0, 0)),  # v
            pl.BlockSpec((sq, 1, S), lambda b, h: (b, 0, 0)),                 # mask
        ],
        out_specs=pl.BlockSpec((sq, sq, S, Dh), lambda b, h: (b, h, 0, 0)),
        compiler_params=pltpu.CompilerParams(
            dimension_semantics=("parallel", "parallel")),
    )(qkv5, qkv5, qkv5, add_mask)
    # (B, nH, S, Dh) -> (B, S, H)
    return ctx.transpose(0, 2, 1, 3).reshape(B, S, H)


def pooled_head(h, mask, w, b):
    """h: (B, S, H), mask: (B, S) -> softmax(head([mean_pool, cls])) (B, L)."""
    B, S, H = h.shape
    L = w.shape[1]
    out = pl.pallas_call(
        functools.partial(_pool_head_kernel, hidden=H),
        out_shape=jax.ShapeDtypeStruct((B, 1, L), jnp.float32),
        grid=(B,),
        in_specs=[pl.BlockSpec((pl.Squeezed(), S, H), lambda b: (b, 0, 0)),
                  pl.BlockSpec((pl.Squeezed(), 1, S), lambda b: (b, 0, 0)),
                  pl.BlockSpec((2 * H, L), lambda b: (0, 0)),
                  pl.BlockSpec((1, L), lambda b: (0, 0))],
        out_specs=pl.BlockSpec((pl.Squeezed(), 1, L), lambda b: (b, 0, 0)),
        compiler_params=pltpu.CompilerParams(
            dimension_semantics=("parallel",)),
    )(h, mask.reshape(B, 1, S), w, b.reshape(1, L))
    return out.reshape(B, L)


# ------------------------------ model (glue) --------------------------------

def init_params(key, cfg):
    H, I, L = cfg["hidden"], cfg["intermediate"], cfg["num_labels"]
    keys = iter(jax.random.split(key, 128))

    def nrm(shape, dtype=jnp.float32):
        return (0.02 * jax.random.normal(next(keys), shape)).astype(dtype)

    zeros = lambda s: jnp.zeros(s, jnp.float32)
    ones = lambda s: jnp.ones(s, jnp.float32)

    # Matmul weights are stored bf16 in HBM; biases / LN params / embeddings
    # / classification head stay f32.
    p = {
        "word_emb": nrm((cfg["vocab"], H)),
        "pos_emb": nrm((cfg["max_pos"], H)),
        "type_emb": nrm((2, H)),
        "emb_ln_g": ones((H,)), "emb_ln_b": zeros((H,)),
        "video_fc_w": nrm((cfg["video_dim"], H), MM_DTYPE),
        "video_fc_b": zeros((H,)),
        "head_w": nrm((2 * H, L)), "head_b": zeros((L,)),
        "layers": [],
    }
    for _ in range(cfg["layers"]):
        p["layers"].append({
            # fused Q/K/V projection: [q_w | k_w | v_w] along the output dim
            "qkv_w": nrm((H, 3 * H), MM_DTYPE), "qkv_b": zeros((3 * H,)),
            "o_w": nrm((H, H), MM_DTYPE), "o_b": zeros((H,)),
            "ln1_g": ones((H,)), "ln1_b": zeros((H,)),
            "i_w": nrm((H, I), MM_DTYPE), "i_b": zeros((I,)),
            "o2_w": nrm((I, H), MM_DTYPE), "o2_b": zeros((H,)),
            "ln2_g": ones((H,)), "ln2_b": zeros((H,)),
        })
    return p


def bert_embeddings(p, inputs_embeds, token_type):
    """BertEmbeddings: word/pos/type sum + LayerNorm, fused (dropout=identity)."""
    return embed_layernorm(inputs_embeds, p["pos_emb"], p["type_emb"][token_type],
                           p["emb_ln_g"], p["emb_ln_b"])


def encoder_layer(lp, h, add_mask, num_heads):
    B, S, H = h.shape
    x2 = h.reshape(B * S, H)                                          # f32 residual

    qkv = linear(x2, lp["qkv_w"], lp["qkv_b"], out_dtype=MM_DTYPE)    # (M, 3H) bf16
    ctx = attention(qkv.reshape(B, S, 3 * H), add_mask, num_heads,
                    1.0 / math.sqrt(H // num_heads))                  # (B, S, H) bf16
    h1 = linear_residual_ln(ctx.reshape(B * S, H), lp["o_w"], lp["o_b"],
                            x2, lp["ln1_g"], lp["ln1_b"])             # attn + LN, f32
    inter = linear(h1, lp["i_w"], lp["i_b"], gelu=True,
                   out_dtype=MM_DTYPE)                                # (M, I) bf16
    h2 = linear_residual_ln(inter, lp["o2_w"], lp["o2_b"],
                            h1, lp["ln2_g"], lp["ln2_b"])             # FFN + LN, f32
    return h2.reshape(B, S, H)


def wx_forward(p, cfg, input_ids, attention_mask, video_input, video_mask):
    H = cfg["hidden"]
    # --- BertVideoModel ---
    # TODO(synk): word-embedding gather stays in XLA (no clean Pallas gather here)
    text_x = jnp.take(p["word_emb"], input_ids, axis=0)               # (B, St, H)
    text_emb = bert_embeddings(p, text_x, token_type=0)

    Bv, Sv, Dv = video_input.shape
    vfeat = linear(video_input.reshape(Bv * Sv, Dv),
                   p["video_fc_w"], p["video_fc_b"]).reshape(Bv, Sv, H)
    video_emb = bert_embeddings(p, vfeat, token_type=1)

    h = jnp.concatenate([text_emb, video_emb], axis=1)                # (B, S_tot, H)
    mask = jnp.concatenate([attention_mask, video_mask],
                           axis=1).astype(jnp.float32)                # (B, S_tot)
    add_mask = ((1.0 - mask) * -10000.0)[:, None, :]                  # (B, 1, S_tot)

    for lp in p["layers"]:
        h = encoder_layer(lp, h, add_mask, cfg["heads"])

    # --- WXDataModelV2 head: dropouts are identity at inference, so the five
    # logits branches collapse to a single head matmul + softmax ---
    probs = pooled_head(h, mask, p["head_w"], p["head_b"])
    # TODO(synk): cross-entropy loss path (labels is None in this run -> loss = 0)
    loss = jnp.float32(0.0)
    return probs, loss


# --------------------------------- driver -----------------------------------

if __name__ == "__main__":
    cfg = dict(hidden=32, heads=4, layers=2, intermediate=64,
               vocab=100, max_pos=64, num_labels=3, video_dim=768)
    B, S_TEXT, S_VIDEO = 2, 8, 4

    key = jax.random.PRNGKey(0)
    kp, k_ids, k_vid = jax.random.split(key, 3)
    params = init_params(kp, cfg)

    input_ids = jax.random.randint(k_ids, (B, S_TEXT), 0, cfg["vocab"])
    attention_mask = jnp.ones((B, S_TEXT), jnp.float32).at[1, 6:].set(0.0)
    video_input = jax.random.normal(k_vid, (B, S_VIDEO, cfg["video_dim"]),
                                    jnp.float32)
    video_mask = jnp.ones((B, S_VIDEO), jnp.float32).at[1, 3:].set(0.0)

    fwd = jax.jit(functools.partial(wx_forward, params, cfg))
    logits, loss = fwd(input_ids, attention_mask, video_input, video_mask)
    jax.block_until_ready(logits)

    assert logits.shape == (B, cfg["num_labels"])
    assert bool(jnp.all(jnp.isfinite(logits)))
    # softmax rows sum to 1 (final softmax uses exact division)
    assert bool(jnp.allclose(jnp.sum(logits, axis=-1), 1.0, atol=1e-5))
    print("KERNEL_OK")
</pallas_src>

<mosaic_0001>
module attributes {stable_mosaic.version = 11 : i64} {
  func.func @_embed_ln_kernel(%arg0: i32, %arg1: i32, %arg2: memref<1x4x32xf32, #tpu.memory_space<vmem>>, %arg3: memref<4x32xf32, #tpu.memory_space<vmem>>, %arg4: memref<1x32xf32, #tpu.memory_space<vmem>>, %arg5: memref<1x32xf32, #tpu.memory_space<vmem>>, %arg6: memref<1x32xf32, #tpu.memory_space<vmem>>, %arg7: memref<1x4x32xf32, #tpu.memory_space<vmem>>) attributes {dimension_semantics = [#tpu.dimension_semantics<parallel>, #tpu.dimension_semantics<parallel>], iteration_bounds = array<i64: 2, 1>, scalar_prefetch = 0 : i64, scratch_operands = 0 : i64, tpu.core_type = #tpu.core_type<tc>, window_params = [{transform_indices = @transform_0, window_bounds = array<i64: 1, 4, 32>}, {transform_indices = @transform_1, window_bounds = array<i64: 4, 32>}, {pipeline_mode = #tpu.pipeline_mode<synchronous>, transform_indices = @transform_2, window_bounds = array<i64: 1, 32>}, {pipeline_mode = #tpu.pipeline_mode<synchronous>, transform_indices = @transform_3, window_bounds = array<i64: 1, 32>}, {pipeline_mode = #tpu.pipeline_mode<synchronous>, transform_indices = @transform_4, window_bounds = array<i64: 1, 32>}, {transform_indices = @transform_5, window_bounds = array<i64: 1, 4, 32>}]} {
    %c0 = arith.constant 0 : index
    %c0_0 = arith.constant 0 : index
    %c0_1 = arith.constant 0 : index
    %0 = vector.load %arg2[%c0, %c0_0, %c0_1] : memref<1x4x32xf32, #tpu.memory_space<vmem>>, vector<1x4x32xf32>
    %1 = vector.shape_cast %0 : vector<1x4x32xf32> to vector<4x32xf32>
    %c0_2 = arith.constant 0 : index
    %c0_3 = arith.constant 0 : index
    %2 = vector.load %arg3[%c0_2, %c0_3] : memref<4x32xf32, #tpu.memory_space<vmem>>, vector<4x32xf32>
    %3 = arith.addf %1, %2 : vector<4x32xf32>
    %c0_4 = arith.constant 0 : index
    %c0_5 = arith.constant 0 : index
    %4 = vector.load %arg4[%c0_4, %c0_5] : memref<1x32xf32, #tpu.memory_space<vmem>>, vector<1x32xf32>
    %5 = vector.broadcast %4 : vector<1x32xf32> to vector<4x32xf32>
    %6 = arith.addf %3, %5 : vector<4x32xf32>
    %cst = arith.constant dense<0.000000e+00> : vector<4xf32>
    %7 = vector.multi_reduction <add>, %6, %cst [1] : vector<4x32xf32> to vector<4xf32>
    %8 = vector.shape_cast %7 : vector<4xf32> to vector<4x1xf32>
    %cst_6 = arith.constant 3.200000e+01 : f32
    %9 = vector.broadcast %cst_6 : f32 to vector<4x1xf32>
    %10 = arith.divf %8, %9 : vector<4x1xf32>
    %11 = vector.broadcast %10 : vector<4x1xf32> to vector<4x32xf32>
    %12 = arith.subf %6, %11 : vector<4x32xf32>
    %13 = arith.mulf %12, %12 : vector<4x32xf32>
    %cst_7 = arith.constant dense<0.000000e+00> : vector<4xf32>
    %14 = vector.multi_reduction <add>, %13, %cst_7 [1] : vector<4x32xf32> to vector<4xf32>
    %15 = vector.shape_cast %14 : vector<4xf32> to vector<4x1xf32>
    %cst_8 = arith.constant 3.200000e+01 : f32
    %16 = vector.broadcast %cst_8 : f32 to vector<4x1xf32>
    %17 = arith.divf %15, %16 : vector<4x1xf32>
    %18 = vector.broadcast %10 : vector<4x1xf32> to vector<4x32xf32>
    %19 = arith.subf %6, %18 : vector<4x32xf32>
    %cst_9 = arith.constant 9.99999996E-13 : f32
    %20 = vector.broadcast %cst_9 : f32 to vector<4x1xf32>
    %21 = arith.addf %17, %20 : vector<4x1xf32>
    %22 = math.rsqrt %21 : vector<4x1xf32>
    %23 = vector.broadcast %22 : vector<4x1xf32> to vector<4x32xf32>
    %24 = arith.mulf %19, %23 : vector<4x32xf32>
    %c0_10 = arith.constant 0 : index
    %c0_11 = arith.constant 0 : index
    %25 = vector.load %arg5[%c0_10, %c0_11] : memref<1x32xf32, #tpu.memory_space<vmem>>, vector<1x32xf32>
    %26 = vector.broadcast %25 : vector<1x32xf32> to vector<4x32xf32>
    %27 = arith.mulf %24, %26 : vector<4x32xf32>
    %c0_12 = arith.constant 0 : index
    %c0_13 = arith.constant 0 : index
    %28 = vector.load %arg6[%c0_12, %c0_13] : memref<1x32xf32, #tpu.memory_space<vmem>>, vector<1x32xf32>
    %29 = vector.broadcast %28 : vector<1x32xf32> to vector<4x32xf32>
    %30 = arith.addf %27, %29 : vector<4x32xf32>
    %c0_14 = arith.constant 0 : index
    %c0_15 = arith.constant 0 : index
    %c0_16 = arith.constant 0 : index
    %31 = vector.load %arg7[%c0_14, %c0_15, %c0_16] : memref<1x4x32xf32, #tpu.memory_space<vmem>>, vector<1x4x32xf32>
    %32 = vector.shape_cast %31 : vector<1x4x32xf32> to vector<4x32xf32>
    %33 = vector.shape_cast %30 : vector<4x32xf32> to vector<1x4x32xf32>
    tpu.vector_store %arg7[%c0_14, %c0_15, %c0_16], %33 {strides = array<i32>} : memref<1x4x32xf32, #tpu.memory_space<vmem>>, vector<1x4x32xf32>,
    return
  }
  func.func @transform_0(%arg0: i32, %arg1: i32) -> (i32, i32, i32) {
    %c0_i32 = arith.constant 0 : i32
    %c0_i32_0 = arith.constant 0 : i32
    return %arg0, %arg1, %c0_i32 : i32, i32, i32
  }
  func.func @transform_1(%arg0: i32, %arg1: i32) -> (i32, i32) {
    %c0_i32 = arith.constant 0 : i32
    %c0_i32_0 = arith.constant 0 : i32
    return %arg1, %c0_i32 : i32, i32
  }
  func.func @transform_2(%arg0: i32, %arg1: i32) -> (i32, i32) {
    %c0_i32 = arith.constant 0 : i32
    %c0_i32_0 = arith.constant 0 : i32
    %c0_i32_1 = arith.constant 0 : i32
    return %c0_i32, %c0_i32_0 : i32, i32
  }
  func.func @transform_3(%arg0: i32, %arg1: i32) -> (i32, i32) {
    %c0_i32 = arith.constant 0 : i32
    %c0_i32_0 = arith.constant 0 : i32
    %c0_i32_1 = arith.constant 0 : i32
    return %c0_i32, %c0_i32_0 : i32, i32
  }
  func.func @transform_4(%arg0: i32, %arg1: i32) -> (i32, i32) {
    %c0_i32 = arith.constant 0 : i32
    %c0_i32_0 = arith.constant 0 : i32
    %c0_i32_1 = arith.constant 0 : i32
    return %c0_i32, %c0_i32_0 : i32, i32
  }
  func.func @transform_5(%arg0: i32, %arg1: i32) -> (i32, i32, i32) {
    %c0_i32 = arith.constant 0 : i32
    %c0_i32_0 = arith.constant 0 : i32
    return %arg0, %arg1, %c0_i32 : i32, i32, i32
  }
}

module attributes {stable_mosaic.version = 11 : i64} {
  func.func @_matmul_kernel(%arg0: i32, %arg1: i32, %arg2: i32, %arg3: memref<8x768xf32, #tpu.memory_space<vmem>>, %arg4: memref<768x32xbf16, #tpu.memory_space<vmem>>, %arg5: memref<1x32xf32, #tpu.memory_space<vmem>>, %arg6: memref<8x32xf32, #tpu.memory_space<vmem>>, %arg7: memref<8x32xf32, #tpu.memory_space<vmem>>) attributes {dimension_semantics = [#tpu.dimension_semantics<parallel>, #tpu.dimension_semantics<parallel>, #tpu.dimension_semantics<arbitrary>], iteration_bounds = array<i64: 1, 1, 1>, scalar_prefetch = 0 : i64, scratch_operands = 1 : i64, tpu.core_type = #tpu.core_type<tc>, window_params = [{transform_indices = @transform_0, window_bounds = array<i64: 8, 768>}, {transform_indices = @transform_1, window_bounds = array<i64: 768, 32>}, {transform_indices = @transform_2, window_bounds = array<i64: 1, 32>}, {transform_indices = @transform_3, window_bounds = array<i64: 8, 32>}]} {
    %c0_i32 = arith.constant 0 : i32
    %0 = arith.cmpi eq, %arg2, %c0_i32 : i32
    %1 = arith.extui %0 : i1 to i32
    %c0_i32_0 = arith.constant 0 : i32
    %2 = arith.cmpi ne, %1, %c0_i32_0 : i32
    scf.if %2 {
      %cst_10 = arith.constant 0.000000e+00 : f32
      %13 = vector.broadcast %cst_10 : f32 to vector<8x32xf32>
      %c0_11 = arith.constant 0 : index
      %c0_12 = arith.constant 0 : index
      %14 = vector.load %arg7[%c0_11, %c0_12] : memref<8x32xf32, #tpu.memory_space<vmem>>, vector<8x32xf32>
      tpu.vector_store %arg7[%c0_11, %c0_12], %13 {strides = array<i32>} : memref<8x32xf32, #tpu.memory_space<vmem>>, vector<8x32xf32>,
    } else {
    }
    %c0 = arith.constant 0 : index
    %c0_1 = arith.constant 0 : index
    %3 = vector.load %arg7[%c0, %c0_1] : memref<8x32xf32, #tpu.memory_space<vmem>>, vector<8x32xf32>
    %c0_2 = arith.constant 0 : index
    %c0_3 = arith.constant 0 : index
    %4 = vector.load %arg3[%c0_2, %c0_3] : memref<8x768xf32, #tpu.memory_space<vmem>>, vector<8x768xf32>
    %5 = arith.truncf %4 : vector<8x768xf32> to vector<8x768xbf16>
    %c0_4 = arith.constant 0 : index
    %c0_5 = arith.constant 0 : index
    %6 = vector.load %arg4[%c0_4, %c0_5] : memref<768x32xbf16, #tpu.memory_space<vmem>>, vector<768x32xbf16>
    %cst = arith.constant dense<0.000000e+00> : vector<8x32xf32>
    %7 = tpu.matmul %5, %6, %cst {dimension_numbers = #tpu.dot_dimension_numbers<[1], [0], [0], [1], [0, 0, 1, 1], [], []>} : vector<8x768xbf16>, vector<768x32xbf16>, vector<8x32xf32> -> vector<8x32xf32>
    %8 = arith.addf %3, %7 : vector<8x32xf32>
    %c0_6 = arith.constant 0 : index
    %c0_7 = arith.constant 0 : index
    %9 = vector.load %arg7[%c0_6, %c0_7] : memref<8x32xf32, #tpu.memory_space<vmem>>, vector<8x32xf32>
    tpu.vector_store %arg7[%c0_6, %c0_7], %8 {strides = array<i32>} : memref<8x32xf32, #tpu.memory_space<vmem>>, vector<8x32xf32>,
    %c0_i32_8 = arith.constant 0 : i32
    %10 = arith.cmpi eq, %arg2, %c0_i32_8 : i32
    %11 = arith.extui %10 : i1 to i32
    %c0_i32_9 = arith.constant 0 : i32
    %12 = arith.cmpi ne, %11, %c0_i32_9 : i32
    scf.if %12 {
      %c0_10 = arith.constant 0 : index
      %c0_11 = arith.constant 0 : index
      %13 = vector.load %arg7[%c0_10, %c0_11] : memref<8x32xf32, #tpu.memory_space<vmem>>, vector<8x32xf32>
      %c0_12 = arith.constant 0 : index
      %c0_13 = arith.constant 0 : index
      %14 = vector.load %arg5[%c0_12, %c0_13] : memref<1x32xf32, #tpu.memory_space<vmem>>, vector<1x32xf32>
      %15 = vector.broadcast %14 : vector<1x32xf32> to vector<8x32xf32>
      %16 = arith.addf %13, %15 : vector<8x32xf32>
      %c0_14 = arith.constant 0 : index
      %c0_15 = arith.constant 0 : index
      %17 = vector.load %arg6[%c0_14, %c0_15] : memref<8x32xf32, #tpu.memory_space<vmem>>, vector<8x32xf32>
      tpu.vector_store %arg6[%c0_14, %c0_15], %16 {strides = array<i32>} : memref<8x32xf32, #tpu.memory_space<vmem>>, vector<8x32xf32>,
    } else {
    }
    return
  }
  func.func @transform_0(%arg0: i32, %arg1: i32, %arg2: i32) -> (i32, i32) {
    %c0_i32 = arith.constant 0 : i32
    return %arg0, %arg2 : i32, i32
  }
  func.func @transform_1(%arg0: i32, %arg1: i32, %arg2: i32) -> (i32, i32) {
    %c0_i32 = arith.constant 0 : i32
    return %arg2, %arg1 : i32, i32
  }
  func.func @transform_2(%arg0: i32, %arg1: i32, %arg2: i32) -> (i32, i32) {
    %c0_i32 = arith.constant 0 : i32
    %c0_i32_0 = arith.constant 0 : i32
    return %c0_i32, %arg1 : i32, i32
  }
  func.func @transform_3(%arg0: i32, %arg1: i32, %arg2: i32) -> (i32, i32) {
    %c0_i32 = arith.constant 0 : i32
    return %arg0, %arg1 : i32, i32
  }
}

module attributes {stable_mosaic.version = 11 : i64} {
  func.func @_embed_ln_kernel(%arg0: i32, %arg1: i32, %arg2: memref<1x8x32xf32, #tpu.memory_space<vmem>>, %arg3: memref<8x32xf32, #tpu.memory_space<vmem>>, %arg4: memref<1x32xf32, #tpu.memory_space<vmem>>, %arg5: memref<1x32xf32, #tpu.memory_space<vmem>>, %arg6: memref<1x32xf32, #tpu.memory_space<vmem>>, %arg7: memref<1x8x32xf32, #tpu.memory_space<vmem>>) attributes {dimension_semantics = [#tpu.dimension_semantics<parallel>, #tpu.dimension_semantics<parallel>], iteration_bounds = array<i64: 2, 1>, scalar_prefetch = 0 : i64, scratch_operands = 0 : i64, tpu.core_type = #tpu.core_type<tc>, window_params = [{transform_indices = @transform_0, window_bounds = array<i64: 1, 8, 32>}, {transform_indices = @transform_1, window_bounds = array<i64: 8, 32>}, {pipeline_mode = #tpu.pipeline_mode<synchronous>, transform_indices = @transform_2, window_bounds = array<i64: 1, 32>}, {pipeline_mode = #tpu.pipeline_mode<synchronous>, transform_indices = @transform_3, window_bounds = array<i64: 1, 32>}, {pipeline_mode = #tpu.pipeline_mode<synchronous>, transform_indices = @transform_4, window_bounds = array<i64: 1, 32>}, {transform_indices = @transform_5, window_bounds = array<i64: 1, 8, 32>}]} {
    %c0 = arith.constant 0 : index
    %c0_0 = arith.constant 0 : index
    %c0_1 = arith.constant 0 : index
    %0 = vector.load %arg2[%c0, %c0_0, %c0_1] : memref<1x8x32xf32, #tpu.memory_space<vmem>>, vector<1x8x32xf32>
    %1 = vector.shape_cast %0 : vector<1x8x32xf32> to vector<8x32xf32>
    %c0_2 = arith.constant 0 : index
    %c0_3 = arith.constant 0 : index
    %2 = vector.load %arg3[%c0_2, %c0_3] : memref<8x32xf32, #tpu.memory_space<vmem>>, vector<8x32xf32>
    %3 = arith.addf %1, %2 : vector<8x32xf32>
    %c0_4 = arith.constant 0 : index
    %c0_5 = arith.constant 0 : index
    %4 = vector.load %arg4[%c0_4, %c0_5] : memref<1x32xf32, #tpu.memory_space<vmem>>, vector<1x32xf32>
    %5 = vector.broadcast %4 : vector<1x32xf32> to vector<8x32xf32>
    %6 = arith.addf %3, %5 : vector<8x32xf32>
    %cst = arith.constant dense<0.000000e+00> : vector<8xf32>
    %7 = vector.multi_reduction <add>, %6, %cst [1] : vector<8x32xf32> to vector<8xf32>
    %8 = vector.shape_cast %7 : vector<8xf32> to vector<8x1xf32>
    %cst_6 = arith.constant 3.200000e+01 : f32
    %9 = vector.broadcast %cst_6 : f32 to vector<8x1xf32>
    %10 = arith.divf %8, %9 : vector<8x1xf32>
    %11 = vector.broadcast %10 : vector<8x1xf32> to vector<8x32xf32>
    %12 = arith.subf %6, %11 : vector<8x32xf32>
    %13 = arith.mulf %12, %12 : vector<8x32xf32>
    %cst_7 = arith.constant dense<0.000000e+00> : vector<8xf32>
    %14 = vector.multi_reduction <add>, %13, %cst_7 [1] : vector<8x32xf32> to vector<8xf32>
    %15 = vector.shape_cast %14 : vector<8xf32> to vector<8x1xf32>
    %cst_8 = arith.constant 3.200000e+01 : f32
    %16 = vector.broadcast %cst_8 : f32 to vector<8x1xf32>
    %17 = arith.divf %15, %16 : vector<8x1xf32>
    %18 = vector.broadcast %10 : vector<8x1xf32> to vector<8x32xf32>
    %19 = arith.subf %6, %18 : vector<8x32xf32>
    %cst_9 = arith.constant 9.99999996E-13 : f32
    %20 = vector.broadcast %cst_9 : f32 to vector<8x1xf32>
    %21 = arith.addf %17, %20 : vector<8x1xf32>
    %22 = math.rsqrt %21 : vector<8x1xf32>
    %23 = vector.broadcast %22 : vector<8x1xf32> to vector<8x32xf32>
    %24 = arith.mulf %19, %23 : vector<8x32xf32>
    %c0_10 = arith.constant 0 : index
    %c0_11 = arith.constant 0 : index
    %25 = vector.load %arg5[%c0_10, %c0_11] : memref<1x32xf32, #tpu.memory_space<vmem>>, vector<1x32xf32>
    %26 = vector.broadcast %25 : vector<1x32xf32> to vector<8x32xf32>
    %27 = arith.mulf %24, %26 : vector<8x32xf32>
    %c0_12 = arith.constant 0 : index
    %c0_13 = arith.constant 0 : index
    %28 = vector.load %arg6[%c0_12, %c0_13] : memref<1x32xf32, #tpu.memory_space<vmem>>, vector<1x32xf32>
    %29 = vector.broadcast %28 : vector<1x32xf32> to vector<8x32xf32>
    %30 = arith.addf %27, %29 : vector<8x32xf32>
    %c0_14 = arith.constant 0 : index
    %c0_15 = arith.constant 0 : index
    %c0_16 = arith.constant 0 : index
    %31 = vector.load %arg7[%c0_14, %c0_15, %c0_16] : memref<1x8x32xf32, #tpu.memory_space<vmem>>, vector<1x8x32xf32>
    %32 = vector.shape_cast %31 : vector<1x8x32xf32> to vector<8x32xf32>
    %33 = vector.shape_cast %30 : vector<8x32xf32> to vector<1x8x32xf32>
    tpu.vector_store %arg7[%c0_14, %c0_15, %c0_16], %33 {strides = array<i32>} : memref<1x8x32xf32, #tpu.memory_space<vmem>>, vector<1x8x32xf32>,
    return
  }
  func.func @transform_0(%arg0: i32, %arg1: i32) -> (i32, i32, i32) {
    %c0_i32 = arith.constant 0 : i32
    %c0_i32_0 = arith.constant 0 : i32
    return %arg0, %arg1, %c0_i32 : i32, i32, i32
  }
  func.func @transform_1(%arg0: i32, %arg1: i32) -> (i32, i32) {
    %c0_i32 = arith.constant 0 : i32
    %c0_i32_0 = arith.constant 0 : i32
    return %arg1, %c0_i32 : i32, i32
  }
  func.func @transform_2(%arg0: i32, %arg1: i32) -> (i32, i32) {
    %c0_i32 = arith.constant 0 : i32
    %c0_i32_0 = arith.constant 0 : i32
    %c0_i32_1 = arith.constant 0 : i32
    return %c0_i32, %c0_i32_0 : i32, i32
  }
  func.func @transform_3(%arg0: i32, %arg1: i32) -> (i32, i32) {
    %c0_i32 = arith.constant 0 : i32
    %c0_i32_0 = arith.constant 0 : i32
    %c0_i32_1 = arith.constant 0 : i32
    return %c0_i32, %c0_i32_0 : i32, i32
  }
  func.func @transform_4(%arg0: i32, %arg1: i32) -> (i32, i32) {
    %c0_i32 = arith.constant 0 : i32
    %c0_i32_0 = arith.constant 0 : i32
    %c0_i32_1 = arith.constant 0 : i32
    return %c0_i32, %c0_i32_0 : i32, i32
  }
  func.func @transform_5(%arg0: i32, %arg1: i32) -> (i32, i32, i32) {
    %c0_i32 = arith.constant 0 : i32
    %c0_i32_0 = arith.constant 0 : i32
    return %arg0, %arg1, %c0_i32 : i32, i32, i32
  }
}

module attributes {stable_mosaic.version = 11 : i64} {
  func.func @_matmul_kernel(%arg0: i32, %arg1: i32, %arg2: i32, %arg3: memref<24x32xf32, #tpu.memory_space<vmem>>, %arg4: memref<32x96xbf16, #tpu.memory_space<vmem>>, %arg5: memref<1x96xf32, #tpu.memory_space<vmem>>, %arg6: memref<24x96xbf16, #tpu.memory_space<vmem>>, %arg7: memref<24x96xf32, #tpu.memory_space<vmem>>) attributes {dimension_semantics = [#tpu.dimension_semantics<parallel>, #tpu.dimension_semantics<parallel>, #tpu.dimension_semantics<arbitrary>], iteration_bounds = array<i64: 1, 1, 1>, scalar_prefetch = 0 : i64, scratch_operands = 1 : i64, tpu.core_type = #tpu.core_type<tc>, window_params = [{transform_indices = @transform_0, window_bounds = array<i64: 24, 32>}, {transform_indices = @transform_1, window_bounds = array<i64: 32, 96>}, {transform_indices = @transform_2, window_bounds = array<i64: 1, 96>}, {transform_indices = @transform_3, window_bounds = array<i64: 24, 96>}]} {
    %c0_i32 = arith.constant 0 : i32
    %0 = arith.cmpi eq, %arg2, %c0_i32 : i32
    %1 = arith.extui %0 : i1 to i32
    %c0_i32_0 = arith.constant 0 : i32
    %2 = arith.cmpi ne, %1, %c0_i32_0 : i32
    scf.if %2 {
      %cst_10 = arith.constant 0.000000e+00 : f32
      %13 = vector.broadcast %cst_10 : f32 to vector<24x96xf32>
      %c0_11 = arith.constant 0 : index
      %c0_12 = arith.constant 0 : index
      %14 = vector.load %arg7[%c0_11, %c0_12] : memref<24x96xf32, #tpu.memory_space<vmem>>, vector<24x96xf32>
      tpu.vector_store %arg7[%c0_11, %c0_12], %13 {strides = array<i32>} : memref<24x96xf32, #tpu.memory_space<vmem>>, vector<24x96xf32>,
    } else {
    }
    %c0 = arith.constant 0 : index
    %c0_1 = arith.constant 0 : index
    %3 = vector.load %arg7[%c0, %c0_1] : memref<24x96xf32, #tpu.memory_space<vmem>>, vector<24x96xf32>
    %c0_2 = arith.constant 0 : index
    %c0_3 = arith.constant 0 : index
    %4 = vector.load %arg3[%c0_2, %c0_3] : memref<24x32xf32, #tpu.memory_space<vmem>>, vector<24x32xf32>
    %5 = arith.truncf %4 : vector<24x32xf32> to vector<24x32xbf16>
    %c0_4 = arith.constant 0 : index
    %c0_5 = arith.constant 0 : index
    %6 = vector.load %arg4[%c0_4, %c0_5] : memref<32x96xbf16, #tpu.memory_space<vmem>>, vector<32x96xbf16>
    %cst = arith.constant dense<0.000000e+00> : vector<24x96xf32>
    %7 = tpu.matmul %5, %6, %cst {dimension_numbers = #tpu.dot_dimension_numbers<[1], [0], [0], [1], [0, 0, 1, 1], [], []>} : vector<24x32xbf16>, vector<32x96xbf16>, vector<24x96xf32> -> vector<24x96xf32>
    %8 = arith.addf %3, %7 : vector<24x96xf32>
    %c0_6 = arith.constant 0 : index
    %c0_7 = arith.constant 0 : index
    %9 = vector.load %arg7[%c0_6, %c0_7] : memref<24x96xf32, #tpu.memory_space<vmem>>, vector<24x96xf32>
    tpu.vector_store %arg7[%c0_6, %c0_7], %8 {strides = array<i32>} : memref<24x96xf32, #tpu.memory_space<vmem>>, vector<24x96xf32>,
    %c0_i32_8 = arith.constant 0 : i32
    %10 = arith.cmpi eq, %arg2, %c0_i32_8 : i32
    %11 = arith.extui %10 : i1 to i32
    %c0_i32_9 = arith.constant 0 : i32
    %12 = arith.cmpi ne, %11, %c0_i32_9 : i32
    scf.if %12 {
      %c0_10 = arith.constant 0 : index
      %c0_11 = arith.constant 0 : index
      %13 = vector.load %arg7[%c0_10, %c0_11] : memref<24x96xf32, #tpu.memory_space<vmem>>, vector<24x96xf32>
      %c0_12 = arith.constant 0 : index
      %c0_13 = arith.constant 0 : index
      %14 = vector.load %arg5[%c0_12, %c0_13] : memref<1x96xf32, #tpu.memory_space<vmem>>, vector<1x96xf32>
      %15 = vector.broadcast %14 : vector<1x96xf32> to vector<24x96xf32>
      %16 = arith.addf %13, %15 : vector<24x96xf32>
      %17 = arith.truncf %16 : vector<24x96xf32> to vector<24x96xbf16>
      %c0_14 = arith.constant 0 : index
      %c0_15 = arith.constant 0 : index
      %18 = vector.load %arg6[%c0_14, %c0_15] : memref<24x96xbf16, #tpu.memory_space<vmem>>, vector<24x96xbf16>
      tpu.vector_store %arg6[%c0_14, %c0_15], %17 {strides = array<i32>} : memref<24x96xbf16, #tpu.memory_space<vmem>>, vector<24x96xbf16>,
    } else {
    }
    return
  }
  func.func @transform_0(%arg0: i32, %arg1: i32, %arg2: i32) -> (i32, i32) {
    %c0_i32 = arith.constant 0 : i32
    return %arg0, %arg2 : i32, i32
  }
  func.func @transform_1(%arg0: i32, %arg1: i32, %arg2: i32) -> (i32, i32) {
    %c0_i32 = arith.constant 0 : i32
    return %arg2, %arg1 : i32, i32
  }
  func.func @transform_2(%arg0: i32, %arg1: i32, %arg2: i32) -> (i32, i32) {
    %c0_i32 = arith.constant 0 : i32
    %c0_i32_0 = arith.constant 0 : i32
    return %c0_i32, %arg1 : i32, i32
  }
  func.func @transform_3(%arg0: i32, %arg1: i32, %arg2: i32) -> (i32, i32) {
    %c0_i32 = arith.constant 0 : i32
    return %arg0, %arg1 : i32, i32
  }
}

module attributes {stable_mosaic.version = 11 : i64} {
  func.func @_attn_kernel(%arg0: i32, %arg1: i32, %arg2: memref<1x1x1x12x8xbf16, #tpu.memory_space<vmem>>, %arg3: memref<1x1x1x12x8xbf16, #tpu.memory_space<vmem>>, %arg4: memref<1x1x1x12x8xbf16, #tpu.memory_space<vmem>>, %arg5: memref<1x1x12xf32, #tpu.memory_space<vmem>>, %arg6: memref<1x1x12x8xbf16, #tpu.memory_space<vmem>>) attributes {dimension_semantics = [#tpu.dimension_semantics<parallel>, #tpu.dimension_semantics<parallel>], iteration_bounds = array<i64: 2, 4>, scalar_prefetch = 0 : i64, scratch_operands = 0 : i64, tpu.core_type = #tpu.core_type<tc>, window_params = [{transform_indices = @transform_0, window_bounds = array<i64: 1, 1, 1, 12, 8>}, {transform_indices = @transform_1, window_bounds = array<i64: 1, 1, 1, 12, 8>}, {transform_indices = @transform_2, window_bounds = array<i64: 1, 1, 1, 12, 8>}, {transform_indices = @transform_3, window_bounds = array<i64: 1, 1, 12>}, {transform_indices = @transform_4, window_bounds = array<i64: 1, 1, 12, 8>}]} {
    %c0 = arith.constant 0 : index
    %c0_0 = arith.constant 0 : index
    %c0_1 = arith.constant 0 : index
    %c0_2 = arith.constant 0 : index
    %c0_3 = arith.constant 0 : index
    %0 = vector.load %arg2[%c0, %c0_0, %c0_1, %c0_2, %c0_3] : memref<1x1x1x12x8xbf16, #tpu.memory_space<vmem>>, vector<1x1x1x12x8xbf16>
    %1 = vector.shape_cast %0 : vector<1x1x1x12x8xbf16> to vector<12x8xbf16>
    %cst = arith.constant 3.535160e-01 : bf16
    %2 = vector.broadcast %cst : bf16 to vector<12x8xbf16>
    %3 = arith.mulf %1, %2 : vector<12x8xbf16>
    %c0_4 = arith.constant 0 : index
    %c0_5 = arith.constant 0 : index
    %c0_6 = arith.constant 0 : index
    %c0_7 = arith.constant 0 : index
    %c0_8 = arith.constant 0 : index
    %4 = vector.load %arg3[%c0_4, %c0_5, %c0_6, %c0_7, %c0_8] : memref<1x1x1x12x8xbf16, #tpu.memory_space<vmem>>, vector<1x1x1x12x8xbf16>
    %5 = vector.shape_cast %4 : vector<1x1x1x12x8xbf16> to vector<12x8xbf16>
    %cst_9 = arith.constant dense<0.000000e+00> : vector<12x12xf32>
    %6 = tpu.matmul %3, %5, %cst_9 {dimension_numbers = #tpu.dot_dimension_numbers<[1], [1], [0], [0], [0, 0, 1, 0], [], []>} : vector<12x8xbf16>, vector<12x8xbf16>, vector<12x12xf32> -> vector<12x12xf32>
    %c0_10 = arith.constant 0 : index
    %c0_11 = arith.constant 0 : index
    %c0_12 = arith.constant 0 : index
    %7 = vector.load %arg5[%c0_10, %c0_11, %c0_12] : memref<1x1x12xf32, #tpu.memory_space<vmem>>, vector<1x1x12xf32>
    %8 = vector.shape_cast %7 : vector<1x1x12xf32> to vector<1x12xf32>
    %9 = vector.broadcast %8 : vector<1x12xf32> to vector<12x12xf32>
    %10 = arith.addf %6, %9 : vector<12x12xf32>
    %cst_13 = arith.constant dense<0xFF800000> : vector<12xf32>
    %11 = vector.multi_reduction <maximumf>, %10, %cst_13 [1] : vector<12x12xf32> to vector<12xf32>
    %12 = vector.shape_cast %11 : vector<12xf32> to vector<12x1xf32>
    %13 = vector.broadcast %12 : vector<12x1xf32> to vector<12x12xf32>
    %14 = arith.subf %10, %13 : vector<12x12xf32>
    %15 = math.exp %14 : vector<12x12xf32>
    %cst_14 = arith.constant dense<0.000000e+00> : vector<12xf32>
    %16 = vector.multi_reduction <add>, %15, %cst_14 [1] : vector<12x12xf32> to vector<12xf32>
    %17 = vector.shape_cast %16 : vector<12xf32> to vector<12x1xf32>
    %18 = tpu.reciprocal %17 {approx = true} : vector<12x1xf32> -> vector<12x1xf32>
    %19 = vector.broadcast %18 : vector<12x1xf32> to vector<12x12xf32>
    %20 = arith.mulf %15, %19 : vector<12x12xf32>
    %21 = arith.truncf %20 : vector<12x12xf32> to vector<12x12xbf16>
    %c0_15 = arith.constant 0 : index
    %c0_16 = arith.constant 0 : index
    %c0_17 = arith.constant 0 : index
    %c0_18 = arith.constant 0 : index
    %c0_19 = arith.constant 0 : index
    %22 = vector.load %arg4[%c0_15, %c0_16, %c0_17, %c0_18, %c0_19] : memref<1x1x1x12x8xbf16, #tpu.memory_space<vmem>>, vector<1x1x1x12x8xbf16>
    %23 = vector.shape_cast %22 : vector<1x1x1x12x8xbf16> to vector<12x8xbf16>
    %cst_20 = arith.constant dense<0.000000e+00> : vector<12x8xf32>
    %24 = tpu.matmul %21, %23, %cst_20 {dimension_numbers = #tpu.dot_dimension_numbers<[1], [0], [0], [1], [0, 0, 1, 1], [], []>} : vector<12x12xbf16>, vector<12x8xbf16>, vector<12x8xf32> -> vector<12x8xf32>
    %25 = arith.truncf %24 : vector<12x8xf32> to vector<12x8xbf16>
    %c0_21 = arith.constant 0 : index
    %c0_22 = arith.constant 0 : index
    %c0_23 = arith.constant 0 : index
    %c0_24 = arith.constant 0 : index
    %26 = vector.load %arg6[%c0_21, %c0_22, %c0_23, %c0_24] : memref<1x1x12x8xbf16, #tpu.memory_space<vmem>>, vector<1x1x12x8xbf16>
    %27 = vector.shape_cast %26 : vector<1x1x12x8xbf16> to vector<12x8xbf16>
    %28 = vector.shape_cast %25 : vector<12x8xbf16> to vector<1x1x12x8xbf16>
    tpu.vector_store %arg6[%c0_21, %c0_22, %c0_23, %c0_24], %28 {strides = array<i32>} : memref<1x1x12x8xbf16, #tpu.memory_space<vmem>>, vector<1x1x12x8xbf16>,
    return
  }
  func.func @transform_0(%arg0: i32, %arg1: i32) -> (i32, i32, i32, i32, i32) {
    %c0_i32 = arith.constant 0 : i32
    %c0_i32_0 = arith.constant 0 : i32
    %c0_i32_1 = arith.constant 0 : i32
    %c0_i32_2 = arith.constant 0 : i32
    return %c0_i32, %arg0, %arg1, %c0_i32_0, %c0_i32_1 : i32, i32, i32, i32, i32
  }
  func.func @transform_1(%arg0: i32, %arg1: i32) -> (i32, i32, i32, i32, i32) {
    %c1_i32 = arith.constant 1 : i32
    %c0_i32 = arith.constant 0 : i32
    %c0_i32_0 = arith.constant 0 : i32
    %c0_i32_1 = arith.constant 0 : i32
    return %c1_i32, %arg0, %arg1, %c0_i32, %c0_i32_0 : i32, i32, i32, i32, i32
  }
  func.func @transform_2(%arg0: i32, %arg1: i32) -> (i32, i32, i32, i32, i32) {
    %c2_i32 = arith.constant 2 : i32
    %c0_i32 = arith.constant 0 : i32
    %c0_i32_0 = arith.constant 0 : i32
    %c0_i32_1 = arith.constant 0 : i32
    return %c2_i32, %arg0, %arg1, %c0_i32, %c0_i32_0 : i32, i32, i32, i32, i32
  }
  func.func @transform_3(%arg0: i32, %arg1: i32) -> (i32, i32, i32) {
    %c0_i32 = arith.constant 0 : i32
    %c0_i32_0 = arith.constant 0 : i32
    %c0_i32_1 = arith.constant 0 : i32
    return %arg0, %c0_i32, %c0_i32_0 : i32, i32, i32
  }
  func.func @transform_4(%arg0: i32, %arg1: i32) -> (i32, i32, i32, i32) {
    %c0_i32 = arith.constant 0 : i32
    %c0_i32_0 = arith.constant 0 : i32
    %c0_i32_1 = arith.constant 0 : i32
    return %arg0, %arg1, %c0_i32, %c0_i32_0 : i32, i32, i32, i32
  }
}

module attributes {stable_mosaic.version = 11 : i64} {
  func.func @_matmul_res_ln_kernel(%arg0: i32, %arg1: i32, %arg2: memref<24x32xbf16, #tpu.memory_space<vmem>>, %arg3: memref<32x32xbf16, #tpu.memory_space<vmem>>, %arg4: memref<1x32xf32, #tpu.memory_space<vmem>>, %arg5: memref<24x32xf32, #tpu.memory_space<vmem>>, %arg6: memref<1x32xf32, #tpu.memory_space<vmem>>, %arg7: memref<1x32xf32, #tpu.memory_space<vmem>>, %arg8: memref<24x32xf32, #tpu.memory_space<vmem>>, %arg9: memref<24x32xf32, #tpu.memory_space<vmem>>) attributes {dimension_semantics = [#tpu.dimension_semantics<parallel>, #tpu.dimension_semantics<arbitrary>], iteration_bounds = array<i64: 1, 1>, scalar_prefetch = 0 : i64, scratch_operands = 1 : i64, tpu.core_type = #tpu.core_type<tc>, window_params = [{transform_indices = @transform_0, window_bounds = array<i64: 24, 32>}, {transform_indices = @transform_1, window_bounds = array<i64: 32, 32>}, {pipeline_mode = #tpu.pipeline_mode<synchronous>, transform_indices = @transform_2, window_bounds = array<i64: 1, 32>}, {transform_indices = @transform_3, window_bounds = array<i64: 24, 32>}, {pipeline_mode = #tpu.pipeline_mode<synchronous>, transform_indices = @transform_4, window_bounds = array<i64: 1, 32>}, {pipeline_mode = #tpu.pipeline_mode<synchronous>, transform_indices = @transform_5, window_bounds = array<i64: 1, 32>}, {transform_indices = @transform_6, window_bounds = array<i64: 24, 32>}]} {
    %c0_i32 = arith.constant 0 : i32
    %0 = arith.cmpi eq, %arg1, %c0_i32 : i32
    %1 = arith.extui %0 : i1 to i32
    %c0_i32_0 = arith.constant 0 : i32
    %2 = arith.cmpi ne, %1, %c0_i32_0 : i32
    scf.if %2 {
      %cst_10 = arith.constant 0.000000e+00 : f32
      %12 = vector.broadcast %cst_10 : f32 to vector<24x32xf32>
      %c0_11 = arith.constant 0 : index
      %c0_12 = arith.constant 0 : index
      %13 = vector.load %arg9[%c0_11, %c0_12] : memref<24x32xf32, #tpu.memory_space<vmem>>, vector<24x32xf32>
      tpu.vector_store %arg9[%c0_11, %c0_12], %12 {strides = array<i32>} : memref<24x32xf32, #tpu.memory_space<vmem>>, vector<24x32xf32>,
    } else {
    }
    %c0 = arith.constant 0 : index
    %c0_1 = arith.constant 0 : index
    %3 = vector.load %arg9[%c0, %c0_1] : memref<24x32xf32, #tpu.memory_space<vmem>>, vector<24x32xf32>
    %c0_2 = arith.constant 0 : index
    %c0_3 = arith.constant 0 : index
    %4 = vector.load %arg2[%c0_2, %c0_3] : memref<24x32xbf16, #tpu.memory_space<vmem>>, vector<24x32xbf16>
    %c0_4 = arith.constant 0 : index
    %c0_5 = arith.constant 0 : index
    %5 = vector.load %arg3[%c0_4, %c0_5] : memref<32x32xbf16, #tpu.memory_space<vmem>>, vector<32x32xbf16>
    %cst = arith.constant dense<0.000000e+00> : vector<24x32xf32>
    %6 = tpu.matmul %4, %5, %cst {dimension_numbers = #tpu.dot_dimension_numbers<[1], [0], [0], [1], [0, 0, 1, 1], [], []>} : vector<24x32xbf16>, vector<32x32xbf16>, vector<24x32xf32> -> vector<24x32xf32>
    %7 = arith.addf %3, %6 : vector<24x32xf32>
    %c0_6 = arith.constant 0 : index
    %c0_7 = arith.constant 0 : index
    %8 = vector.load %arg9[%c0_6, %c0_7] : memref<24x32xf32, #tpu.memory_space<vmem>>, vector<24x32xf32>
    tpu.vector_store %arg9[%c0_6, %c0_7], %7 {strides = array<i32>} : memref<24x32xf32, #tpu.memory_space<vmem>>, vector<24x32xf32>,
    %c0_i32_8 = arith.constant 0 : i32
    %9 = arith.cmpi eq, %arg1, %c0_i32_8 : i32
    %10 = arith.extui %9 : i1 to i32
    %c0_i32_9 = arith.constant 0 : i32
    %11 = arith.cmpi ne, %10, %c0_i32_9 : i32
    scf.if %11 {
      %c0_10 = arith.constant 0 : index
      %c0_11 = arith.constant 0 : index
      %12 = vector.load %arg9[%c0_10, %c0_11] : memref<24x32xf32, #tpu.memory_space<vmem>>, vector<24x32xf32>
      %c0_12 = arith.constant 0 : index
      %c0_13 = arith.constant 0 : index
      %13 = vector.load %arg4[%c0_12, %c0_13] : memref<1x32xf32, #tpu.memory_space<vmem>>, vector<1x32xf32>
      %14 = vector.broadcast %13 : vector<1x32xf32> to vector<24x32xf32>
      %15 = arith.addf %12, %14 : vector<24x32xf32>
      %c0_14 = arith.constant 0 : index
      %c0_15 = arith.constant 0 : index
      %16 = vector.load %arg5[%c0_14, %c0_15] : memref<24x32xf32, #tpu.memory_space<vmem>>, vector<24x32xf32>
      %17 = arith.addf %15, %16 : vector<24x32xf32>
      %cst_16 = arith.constant dense<0.000000e+00> : vector<24xf32>
      %18 = vector.multi_reduction <add>, %17, %cst_16 [1] : vector<24x32xf32> to vector<24xf32>
      %19 = vector.shape_cast %18 : vector<24xf32> to vector<24x1xf32>
      %cst_17 = arith.constant 3.200000e+01 : f32
      %20 = vector.broadcast %cst_17 : f32 to vector<24x1xf32>
      %21 = arith.divf %19, %20 : vector<24x1xf32>
      %22 = vector.broadcast %21 : vector<24x1xf32> to vector<24x32xf32>
      %23 = arith.subf %17, %22 : vector<24x32xf32>
      %24 = arith.mulf %23, %23 : vector<24x32xf32>
      %cst_18 = arith.constant dense<0.000000e+00> : vector<24xf32>
      %25 = vector.multi_reduction <add>, %24, %cst_18 [1] : vector<24x32xf32> to vector<24xf32>
      %26 = vector.shape_cast %25 : vector<24xf32> to vector<24x1xf32>
      %cst_19 = arith.constant 3.200000e+01 : f32
      %27 = vector.broadcast %cst_19 : f32 to vector<24x1xf32>
      %28 = arith.divf %26, %27 : vector<24x1xf32>
      %29 = vector.broadcast %21 : vector<24x1xf32> to vector<24x32xf32>
      %30 = arith.subf %17, %29 : vector<24x32xf32>
      %cst_20 = arith.constant 9.99999996E-13 : f32
      %31 = vector.broadcast %cst_20 : f32 to vector<24x1xf32>
      %32 = arith.addf %28, %31 : vector<24x1xf32>
      %33 = math.rsqrt %32 : vector<24x1xf32>
      %34 = vector.broadcast %33 : vector<24x1xf32> to vector<24x32xf32>
      %35 = arith.mulf %30, %34 : vector<24x32xf32>
      %c0_21 = arith.constant 0 : index
      %c0_22 = arith.constant 0 : index
      %36 = vector.load %arg6[%c0_21, %c0_22] : memref<1x32xf32, #tpu.memory_space<vmem>>, vector<1x32xf32>
      %37 = vector.broadcast %36 : vector<1x32xf32> to vector<24x32xf32>
      %38 = arith.mulf %35, %37 : vector<24x32xf32>
      %c0_23 = arith.constant 0 : index
      %c0_24 = arith.constant 0 : index
      %39 = vector.load %arg7[%c0_23, %c0_24] : memref<1x32xf32, #tpu.memory_space<vmem>>, vector<1x32xf32>
      %40 = vector.broadcast %39 : vector<1x32xf32> to vector<24x32xf32>
      %41 = arith.addf %38, %40 : vector<24x32xf32>
      %c0_25 = arith.constant 0 : index
      %c0_26 = arith.constant 0 : index
      %42 = vector.load %arg8[%c0_25, %c0_26] : memref<24x32xf32, #tpu.memory_space<vmem>>, vector<24x32xf32>
      tpu.vector_store %arg8[%c0_25, %c0_26], %41 {strides = array<i32>} : memref<24x32xf32, #tpu.memory_space<vmem>>, vector<24x32xf32>,
    } else {
    }
    return
  }
  func.func @transform_0(%arg0: i32, %arg1: i32) -> (i32, i32) {
    %c0_i32 = arith.constant 0 : i32
    return %arg0, %arg1 : i32, i32
  }
  func.func @transform_1(%arg0: i32, %arg1: i32) -> (i32, i32) {
    %c0_i32 = arith.constant 0 : i32
    %c0_i32_0 = arith.constant 0 : i32
    return %arg1, %c0_i32 : i32, i32
  }
  func.func @transform_2(%arg0: i32, %arg1: i32) -> (i32, i32) {
    %c0_i32 = arith.constant 0 : i32
    %c0_i32_0 = arith.constant 0 : i32
    %c0_i32_1 = arith.constant 0 : i32
    return %c0_i32, %c0_i32_0 : i32, i32
  }
  func.func @transform_3(%arg0: i32, %arg1: i32) -> (i32, i32) {
    %c0_i32 = arith.constant 0 : i32
    %c0_i32_0 = arith.constant 0 : i32
    return %arg0, %c0_i32 : i32, i32
  }
  func.func @transform_4(%arg0: i32, %arg1: i32) -> (i32, i32) {
    %c0_i32 = arith.constant 0 : i32
    %c0_i32_0 = arith.constant 0 : i32
    %c0_i32_1 = arith.constant 0 : i32
    return %c0_i32, %c0_i32_0 : i32, i32
  }
  func.func @transform_5(%arg0: i32, %arg1: i32) -> (i32, i32) {
    %c0_i32 = arith.constant 0 : i32
    %c0_i32_0 = arith.constant 0 : i32
    %c0_i32_1 = arith.constant 0 : i32
    return %c0_i32, %c0_i32_0 : i32, i32
  }
  func.func @transform_6(%arg0: i32, %arg1: i32) -> (i32, i32) {
    %c0_i32 = arith.constant 0 : i32
    %c0_i32_0 = arith.constant 0 : i32
    return %arg0, %c0_i32 : i32, i32
  }
}

module attributes {stable_mosaic.version = 11 : i64} {
  func.func @_matmul_kernel(%arg0: i32, %arg1: i32, %arg2: i32, %arg3: memref<24x32xf32, #tpu.memory_space<vmem>>, %arg4: memref<32x64xbf16, #tpu.memory_space<vmem>>, %arg5: memref<1x64xf32, #tpu.memory_space<vmem>>, %arg6: memref<24x64xbf16, #tpu.memory_space<vmem>>, %arg7: memref<24x64xf32, #tpu.memory_space<vmem>>) attributes {dimension_semantics = [#tpu.dimension_semantics<parallel>, #tpu.dimension_semantics<parallel>, #tpu.dimension_semantics<arbitrary>], iteration_bounds = array<i64: 1, 1, 1>, scalar_prefetch = 0 : i64, scratch_operands = 1 : i64, tpu.core_type = #tpu.core_type<tc>, window_params = [{transform_indices = @transform_0, window_bounds = array<i64: 24, 32>}, {transform_indices = @transform_1, window_bounds = array<i64: 32, 64>}, {transform_indices = @transform_2, window_bounds = array<i64: 1, 64>}, {transform_indices = @transform_3, window_bounds = array<i64: 24, 64>}]} {
    %c0_i32 = arith.constant 0 : i32
    %0 = arith.cmpi eq, %arg2, %c0_i32 : i32
    %1 = arith.extui %0 : i1 to i32
    %c0_i32_0 = arith.constant 0 : i32
    %2 = arith.cmpi ne, %1, %c0_i32_0 : i32
    scf.if %2 {
      %cst_10 = arith.constant 0.000000e+00 : f32
      %13 = vector.broadcast %cst_10 : f32 to vector<24x64xf32>
      %c0_11 = arith.constant 0 : index
      %c0_12 = arith.constant 0 : index
      %14 = vector.load %arg7[%c0_11, %c0_12] : memref<24x64xf32, #tpu.memory_space<vmem>>, vector<24x64xf32>
      tpu.vector_store %arg7[%c0_11, %c0_12], %13 {strides = array<i32>} : memref<24x64xf32, #tpu.memory_space<vmem>>, vector<24x64xf32>,
    } else {
    }
    %c0 = arith.constant 0 : index
    %c0_1 = arith.constant 0 : index
    %3 = vector.load %arg7[%c0, %c0_1] : memref<24x64xf32, #tpu.memory_space<vmem>>, vector<24x64xf32>
    %c0_2 = arith.constant 0 : index
    %c0_3 = arith.constant 0 : index
    %4 = vector.load %arg3[%c0_2, %c0_3] : memref<24x32xf32, #tpu.memory_space<vmem>>, vector<24x32xf32>
    %5 = arith.truncf %4 : vector<24x32xf32> to vector<24x32xbf16>
    %c0_4 = arith.constant 0 : index
    %c0_5 = arith.constant 0 : index
    %6 = vector.load %arg4[%c0_4, %c0_5] : memref<32x64xbf16, #tpu.memory_space<vmem>>, vector<32x64xbf16>
    %cst = arith.constant dense<0.000000e+00> : vector<24x64xf32>
    %7 = tpu.matmul %5, %6, %cst {dimension_numbers = #tpu.dot_dimension_numbers<[1], [0], [0], [1], [0, 0, 1, 1], [], []>} : vector<24x32xbf16>, vector<32x64xbf16>, vector<24x64xf32> -> vector<24x64xf32>
    %8 = arith.addf %3, %7 : vector<24x64xf32>
    %c0_6 = arith.constant 0 : index
    %c0_7 = arith.constant 0 : index
    %9 = vector.load %arg7[%c0_6, %c0_7] : memref<24x64xf32, #tpu.memory_space<vmem>>, vector<24x64xf32>
    tpu.vector_store %arg7[%c0_6, %c0_7], %8 {strides = array<i32>} : memref<24x64xf32, #tpu.memory_space<vmem>>, vector<24x64xf32>,
    %c0_i32_8 = arith.constant 0 : i32
    %10 = arith.cmpi eq, %arg2, %c0_i32_8 : i32
    %11 = arith.extui %10 : i1 to i32
    %c0_i32_9 = arith.constant 0 : i32
    %12 = arith.cmpi ne, %11, %c0_i32_9 : i32
    scf.if %12 {
      %c0_10 = arith.constant 0 : index
      %c0_11 = arith.constant 0 : index
      %13 = vector.load %arg7[%c0_10, %c0_11] : memref<24x64xf32, #tpu.memory_space<vmem>>, vector<24x64xf32>
      %c0_12 = arith.constant 0 : index
      %c0_13 = arith.constant 0 : index
      %14 = vector.load %arg5[%c0_12, %c0_13] : memref<1x64xf32, #tpu.memory_space<vmem>>, vector<1x64xf32>
      %15 = vector.broadcast %14 : vector<1x64xf32> to vector<24x64xf32>
      %16 = arith.addf %13, %15 : vector<24x64xf32>
      %cst_14 = arith.constant 5.000000e-01 : f32
      %17 = vector.broadcast %cst_14 : f32 to vector<24x64xf32>
      %18 = arith.mulf %17, %16 : vector<24x64xf32>
      %cst_15 = arith.constant 4.471500e-02 : f32
      %19 = vector.broadcast %cst_15 : f32 to vector<24x64xf32>
      %20 = arith.mulf %19, %16 : vector<24x64xf32>
      %21 = arith.mulf %20, %16 : vector<24x64xf32>
      %22 = arith.mulf %21, %16 : vector<24x64xf32>
      %23 = arith.addf %16, %22 : vector<24x64xf32>
      %cst_16 = arith.constant 0.797884583 : f32
      %24 = vector.broadcast %cst_16 : f32 to vector<24x64xf32>
      %25 = arith.mulf %24, %23 : vector<24x64xf32>
      %26 = math.tanh %25 : vector<24x64xf32>
      %cst_17 = arith.constant 1.000000e+00 : f32
      %27 = vector.broadcast %cst_17 : f32 to vector<24x64xf32>
      %28 = arith.addf %27, %26 : vector<24x64xf32>
      %29 = arith.mulf %18, %28 : vector<24x64xf32>
      %30 = arith.truncf %29 : vector<24x64xf32> to vector<24x64xbf16>
      %c0_18 = arith.constant 0 : index
      %c0_19 = arith.constant 0 : index
      %31 = vector.load %arg6[%c0_18, %c0_19] : memref<24x64xbf16, #tpu.memory_space<vmem>>, vector<24x64xbf16>
      tpu.vector_store %arg6[%c0_18, %c0_19], %30 {strides = array<i32>} : memref<24x64xbf16, #tpu.memory_space<vmem>>, vector<24x64xbf16>,
    } else {
    }
    return
  }
  func.func @transform_0(%arg0: i32, %arg1: i32, %arg2: i32) -> (i32, i32) {
    %c0_i32 = arith.constant 0 : i32
    return %arg0, %arg2 : i32, i32
  }
  func.func @transform_1(%arg0: i32, %arg1: i32, %arg2: i32) -> (i32, i32) {
    %c0_i32 = arith.constant 0 : i32
    return %arg2, %arg1 : i32, i32
  }
  func.func @transform_2(%arg0: i32, %arg1: i32, %arg2: i32) -> (i32, i32) {
    %c0_i32 = arith.constant 0 : i32
    %c0_i32_0 = arith.constant 0 : i32
    return %c0_i32, %arg1 : i32, i32
  }
  func.func @transform_3(%arg0: i32, %arg1: i32, %arg2: i32) -> (i32, i32) {
    %c0_i32 = arith.constant 0 : i32
    return %arg0, %arg1 : i32, i32
  }
}

module attributes {stable_mosaic.version = 11 : i64} {
  func.func @_matmul_res_ln_kernel(%arg0: i32, %arg1: i32, %arg2: memref<24x64xbf16, #tpu.memory_space<vmem>>, %arg3: memref<64x32xbf16, #tpu.memory_space<vmem>>, %arg4: memref<1x32xf32, #tpu.memory_space<vmem>>, %arg5: memref<24x32xf32, #tpu.memory_space<vmem>>, %arg6: memref<1x32xf32, #tpu.memory_space<vmem>>, %arg7: memref<1x32xf32, #tpu.memory_space<vmem>>, %arg8: memref<24x32xf32, #tpu.memory_space<vmem>>, %arg9: memref<24x32xf32, #tpu.memory_space<vmem>>) attributes {dimension_semantics = [#tpu.dimension_semantics<parallel>, #tpu.dimension_semantics<arbitrary>], iteration_bounds = array<i64: 1, 1>, scalar_prefetch = 0 : i64, scratch_operands = 1 : i64, tpu.core_type = #tpu.core_type<tc>, window_params = [{transform_indices = @transform_0, window_bounds = array<i64: 24, 64>}, {transform_indices = @transform_1, window_bounds = array<i64: 64, 32>}, {pipeline_mode = #tpu.pipeline_mode<synchronous>, transform_indices = @transform_2, window_bounds = array<i64: 1, 32>}, {transform_indices = @transform_3, window_bounds = array<i64: 24, 32>}, {pipeline_mode = #tpu.pipeline_mode<synchronous>, transform_indices = @transform_4, window_bounds = array<i64: 1, 32>}, {pipeline_mode = #tpu.pipeline_mode<synchronous>, transform_indices = @transform_5, window_bounds = array<i64: 1, 32>}, {transform_indices = @transform_6, window_bounds = array<i64: 24, 32>}]} {
    %c0_i32 = arith.constant 0 : i32
    %0 = arith.cmpi eq, %arg1, %c0_i32 : i32
    %1 = arith.extui %0 : i1 to i32
    %c0_i32_0 = arith.constant 0 : i32
    %2 = arith.cmpi ne, %1, %c0_i32_0 : i32
    scf.if %2 {
      %cst_10 = arith.constant 0.000000e+00 : f32
      %12 = vector.broadcast %cst_10 : f32 to vector<24x32xf32>
      %c0_11 = arith.constant 0 : index
      %c0_12 = arith.constant 0 : index
      %13 = vector.load %arg9[%c0_11, %c0_12] : memref<24x32xf32, #tpu.memory_space<vmem>>, vector<24x32xf32>
      tpu.vector_store %arg9[%c0_11, %c0_12], %12 {strides = array<i32>} : memref<24x32xf32, #tpu.memory_space<vmem>>, vector<24x32xf32>,
    } else {
    }
    %c0 = arith.constant 0 : index
    %c0_1 = arith.constant 0 : index
    %3 = vector.load %arg9[%c0, %c0_1] : memref<24x32xf32, #tpu.memory_space<vmem>>, vector<24x32xf32>
    %c0_2 = arith.constant 0 : index
    %c0_3 = arith.constant 0 : index
    %4 = vector.load %arg2[%c0_2, %c0_3] : memref<24x64xbf16, #tpu.memory_space<vmem>>, vector<24x64xbf16>
    %c0_4 = arith.constant 0 : index
    %c0_5 = arith.constant 0 : index
    %5 = vector.load %arg3[%c0_4, %c0_5] : memref<64x32xbf16, #tpu.memory_space<vmem>>, vector<64x32xbf16>
    %cst = arith.constant dense<0.000000e+00> : vector<24x32xf32>
    %6 = tpu.matmul %4, %5, %cst {dimension_numbers = #tpu.dot_dimension_numbers<[1], [0], [0], [1], [0, 0, 1, 1], [], []>} : vector<24x64xbf16>, vector<64x32xbf16>, vector<24x32xf32> -> vector<24x32xf32>
    %7 = arith.addf %3, %6 : vector<24x32xf32>
    %c0_6 = arith.constant 0 : index
    %c0_7 = arith.constant 0 : index
    %8 = vector.load %arg9[%c0_6, %c0_7] : memref<24x32xf32, #tpu.memory_space<vmem>>, vector<24x32xf32>
    tpu.vector_store %arg9[%c0_6, %c0_7], %7 {strides = array<i32>} : memref<24x32xf32, #tpu.memory_space<vmem>>, vector<24x32xf32>,
    %c0_i32_8 = arith.constant 0 : i32
    %9 = arith.cmpi eq, %arg1, %c0_i32_8 : i32
    %10 = arith.extui %9 : i1 to i32
    %c0_i32_9 = arith.constant 0 : i32
    %11 = arith.cmpi ne, %10, %c0_i32_9 : i32
    scf.if %11 {
      %c0_10 = arith.constant 0 : index
      %c0_11 = arith.constant 0 : index
      %12 = vector.load %arg9[%c0_10, %c0_11] : memref<24x32xf32, #tpu.memory_space<vmem>>, vector<24x32xf32>
      %c0_12 = arith.constant 0 : index
      %c0_13 = arith.constant 0 : index
      %13 = vector.load %arg4[%c0_12, %c0_13] : memref<1x32xf32, #tpu.memory_space<vmem>>, vector<1x32xf32>
      %14 = vector.broadcast %13 : vector<1x32xf32> to vector<24x32xf32>
      %15 = arith.addf %12, %14 : vector<24x32xf32>
      %c0_14 = arith.constant 0 : index
      %c0_15 = arith.constant 0 : index
      %16 = vector.load %arg5[%c0_14, %c0_15] : memref<24x32xf32, #tpu.memory_space<vmem>>, vector<24x32xf32>
      %17 = arith.addf %15, %16 : vector<24x32xf32>
      %cst_16 = arith.constant dense<0.000000e+00> : vector<24xf32>
      %18 = vector.multi_reduction <add>, %17, %cst_16 [1] : vector<24x32xf32> to vector<24xf32>
      %19 = vector.shape_cast %18 : vector<24xf32> to vector<24x1xf32>
      %cst_17 = arith.constant 3.200000e+01 : f32
      %20 = vector.broadcast %cst_17 : f32 to vector<24x1xf32>
      %21 = arith.divf %19, %20 : vector<24x1xf32>
      %22 = vector.broadcast %21 : vector<24x1xf32> to vector<24x32xf32>
      %23 = arith.subf %17, %22 : vector<24x32xf32>
      %24 = arith.mulf %23, %23 : vector<24x32xf32>
      %cst_18 = arith.constant dense<0.000000e+00> : vector<24xf32>
      %25 = vector.multi_reduction <add>, %24, %cst_18 [1] : vector<24x32xf32> to vector<24xf32>
      %26 = vector.shape_cast %25 : vector<24xf32> to vector<24x1xf32>
      %cst_19 = arith.constant 3.200000e+01 : f32
      %27 = vector.broadcast %cst_19 : f32 to vector<24x1xf32>
      %28 = arith.divf %26, %27 : vector<24x1xf32>
      %29 = vector.broadcast %21 : vector<24x1xf32> to vector<24x32xf32>
      %30 = arith.subf %17, %29 : vector<24x32xf32>
      %cst_20 = arith.constant 9.99999996E-13 : f32
      %31 = vector.broadcast %cst_20 : f32 to vector<24x1xf32>
      %32 = arith.addf %28, %31 : vector<24x1xf32>
      %33 = math.rsqrt %32 : vector<24x1xf32>
      %34 = vector.broadcast %33 : vector<24x1xf32> to vector<24x32xf32>
      %35 = arith.mulf %30, %34 : vector<24x32xf32>
      %c0_21 = arith.constant 0 : index
      %c0_22 = arith.constant 0 : index
      %36 = vector.load %arg6[%c0_21, %c0_22] : memref<1x32xf32, #tpu.memory_space<vmem>>, vector<1x32xf32>
      %37 = vector.broadcast %36 : vector<1x32xf32> to vector<24x32xf32>
      %38 = arith.mulf %35, %37 : vector<24x32xf32>
      %c0_23 = arith.constant 0 : index
      %c0_24 = arith.constant 0 : index
      %39 = vector.load %arg7[%c0_23, %c0_24] : memref<1x32xf32, #tpu.memory_space<vmem>>, vector<1x32xf32>
      %40 = vector.broadcast %39 : vector<1x32xf32> to vector<24x32xf32>
      %41 = arith.addf %38, %40 : vector<24x32xf32>
      %c0_25 = arith.constant 0 : index
      %c0_26 = arith.constant 0 : index
      %42 = vector.load %arg8[%c0_25, %c0_26] : memref<24x32xf32, #tpu.memory_space<vmem>>, vector<24x32xf32>
      tpu.vector_store %arg8[%c0_25, %c0_26], %41 {strides = array<i32>} : memref<24x32xf32, #tpu.memory_space<vmem>>, vector<24x32xf32>,
    } else {
    }
    return
  }
  func.func @transform_0(%arg0: i32, %arg1: i32) -> (i32, i32) {
    %c0_i32 = arith.constant 0 : i32
    return %arg0, %arg1 : i32, i32
  }
  func.func @transform_1(%arg0: i32, %arg1: i32) -> (i32, i32) {
    %c0_i32 = arith.constant 0 : i32
    %c0_i32_0 = arith.constant 0 : i32
    return %arg1, %c0_i32 : i32, i32
  }
  func.func @transform_2(%arg0: i32, %arg1: i32) -> (i32, i32) {
    %c0_i32 = arith.constant 0 : i32
    %c0_i32_0 = arith.constant 0 : i32
    %c0_i32_1 = arith.constant 0 : i32
    return %c0_i32, %c0_i32_0 : i32, i32
  }
  func.func @transform_3(%arg0: i32, %arg1: i32) -> (i32, i32) {
    %c0_i32 = arith.constant 0 : i32
    %c0_i32_0 = arith.constant 0 : i32
    return %arg0, %c0_i32 : i32, i32
  }
  func.func @transform_4(%arg0: i32, %arg1: i32) -> (i32, i32) {
    %c0_i32 = arith.constant 0 : i32
    %c0_i32_0 = arith.constant 0 : i32
    %c0_i32_1 = arith.constant 0 : i32
    return %c0_i32, %c0_i32_0 : i32, i32
  }
  func.func @transform_5(%arg0: i32, %arg1: i32) -> (i32, i32) {
    %c0_i32 = arith.constant 0 : i32
    %c0_i32_0 = arith.constant 0 : i32
    %c0_i32_1 = arith.constant 0 : i32
    return %c0_i32, %c0_i32_0 : i32, i32
  }
  func.func @transform_6(%arg0: i32, %arg1: i32) -> (i32, i32) {
    %c0_i32 = arith.constant 0 : i32
    %c0_i32_0 = arith.constant 0 : i32
    return %arg0, %c0_i32 : i32, i32
  }
}

module attributes {stable_mosaic.version = 11 : i64} {
  func.func @_pool_head_kernel(%arg0: i32, %arg1: memref<1x12x32xf32, #tpu.memory_space<vmem>>, %arg2: memref<1x1x12xf32, #tpu.memory_space<vmem>>, %arg3: memref<64x3xf32, #tpu.memory_space<vmem>>, %arg4: memref<1x3xf32, #tpu.memory_space<vmem>>, %arg5: memref<1x1x3xf32, #tpu.memory_space<vmem>>) attributes {dimension_semantics = [#tpu.dimension_semantics<parallel>], iteration_bounds = array<i64: 2>, scalar_prefetch = 0 : i64, scratch_operands = 0 : i64, tpu.core_type = #tpu.core_type<tc>, window_params = [{transform_indices = @transform_0, window_bounds = array<i64: 1, 12, 32>}, {transform_indices = @transform_1, window_bounds = array<i64: 1, 1, 12>}, {pipeline_mode = #tpu.pipeline_mode<synchronous>, transform_indices = @transform_2, window_bounds = array<i64: 64, 3>}, {pipeline_mode = #tpu.pipeline_mode<synchronous>, transform_indices = @transform_3, window_bounds = array<i64: 1, 3>}, {transform_indices = @transform_4, window_bounds = array<i64: 1, 1, 3>}]} {
    %c0 = arith.constant 0 : index
    %c0_0 = arith.constant 0 : index
    %c0_1 = arith.constant 0 : index
    %0 = vector.load %arg1[%c0, %c0_0, %c0_1] : memref<1x12x32xf32, #tpu.memory_space<vmem>>, vector<1x12x32xf32>
    %1 = vector.shape_cast %0 : vector<1x12x32xf32> to vector<12x32xf32>
    %c0_2 = arith.constant 0 : index
    %c0_3 = arith.constant 0 : index
    %c0_4 = arith.constant 0 : index
    %2 = vector.load %arg2[%c0_2, %c0_3, %c0_4] : memref<1x1x12xf32, #tpu.memory_space<vmem>>, vector<1x1x12xf32>
    %3 = vector.shape_cast %2 : vector<1x1x12xf32> to vector<1x12xf32>
    %cst = arith.constant dense<0.000000e+00> : vector<1x32xf32>
    %4 = tpu.matmul %3, %1, %cst {dimension_numbers = #tpu.dot_dimension_numbers<[1], [0], [0], [1], [0, 0, 1, 1], [], []>} : vector<1x12xf32>, vector<12x32xf32>, vector<1x32xf32> -> vector<1x32xf32>
    %5 = vector.shape_cast %3 : vector<1x12xf32> to vector<1x1x12xf32>
    %cst_5 = arith.constant dense<0.000000e+00> : vector<1xf32>
    %6 = vector.multi_reduction <add>, %5, %cst_5 [1, 2] : vector<1x1x12xf32> to vector<1xf32>
    %7 = vector.shape_cast %6 : vector<1xf32> to vector<1x1x1xf32>
    %8 = vector.extract %7[0, 0, 0] : f32 from vector<1x1x1xf32>
    %cst_6 = arith.constant 9.99999971E-10 : f32
    %9 = arith.maximumf %8, %cst_6 : f32
    %10 = vector.broadcast %9 : f32 to vector<1x32xf32>
    %11 = arith.divf %4, %10 : vector<1x32xf32>
    %c0_7 = arith.constant 0 : index
    %c0_8 = arith.constant 0 : index
    %c0_9 = arith.constant 0 : index
    %12 = vector.load %arg1[%c0_7, %c0_8, %c0_9] : memref<1x12x32xf32, #tpu.memory_space<vmem>>, vector<1x1x32xf32>
    %13 = vector.shape_cast %12 : vector<1x1x32xf32> to vector<1x32xf32>
    %c0_10 = arith.constant 0 : index
    %c0_11 = arith.constant 0 : index
    %14 = vector.load %arg3[%c0_10, %c0_11] : memref<64x3xf32, #tpu.memory_space<vmem>>, vector<32x3xf32>
    %cst_12 = arith.constant dense<0.000000e+00> : vector<1x3xf32>
    %15 = tpu.matmul %11, %14, %cst_12 {dimension_numbers = #tpu.dot_dimension_numbers<[1], [0], [0], [1], [0, 0, 1, 1], [], []>} : vector<1x32xf32>, vector<32x3xf32>, vector<1x3xf32> -> vector<1x3xf32>
    %c32 = arith.constant 32 : index
    %c0_13 = arith.constant 0 : index
    %16 = vector.load %arg3[%c32, %c0_13] : memref<64x3xf32, #tpu.memory_space<vmem>>, vector<32x3xf32>
    %cst_14 = arith.constant dense<0.000000e+00> : vector<1x3xf32>
    %17 = tpu.matmul %13, %16, %cst_14 {dimension_numbers = #tpu.dot_dimension_numbers<[1], [0], [0], [1], [0, 0, 1, 1], [], []>} : vector<1x32xf32>, vector<32x3xf32>, vector<1x3xf32> -> vector<1x3xf32>
    %18 = arith.addf %15, %17 : vector<1x3xf32>
    %c0_15 = arith.constant 0 : index
    %c0_16 = arith.constant 0 : index
    %19 = vector.load %arg4[%c0_15, %c0_16] : memref<1x3xf32, #tpu.memory_space<vmem>>, vector<1x3xf32>
    %20 = arith.addf %18, %19 : vector<1x3xf32>
    %cst_17 = arith.constant dense<0xFF800000> : vector<1xf32>
    %21 = vector.multi_reduction <maximumf>, %20, %cst_17 [1] : vector<1x3xf32> to vector<1xf32>
    %22 = vector.shape_cast %21 : vector<1xf32> to vector<1x1xf32>
    %23 = vector.broadcast %22 : vector<1x1xf32> to vector<1x3xf32>
    %24 = arith.subf %20, %23 : vector<1x3xf32>
    %25 = math.exp %24 : vector<1x3xf32>
    %cst_18 = arith.constant dense<0.000000e+00> : vector<1xf32>
    %26 = vector.multi_reduction <add>, %25, %cst_18 [1] : vector<1x3xf32> to vector<1xf32>
    %27 = vector.shape_cast %26 : vector<1xf32> to vector<1x1xf32>
    %28 = vector.broadcast %27 : vector<1x1xf32> to vector<1x3xf32>
    %29 = arith.divf %25, %28 : vector<1x3xf32>
    %c0_19 = arith.constant 0 : index
    %c0_20 = arith.constant 0 : index
    %c0_21 = arith.constant 0 : index
    %30 = vector.load %arg5[%c0_19, %c0_20, %c0_21] : memref<1x1x3xf32, #tpu.memory_space<vmem>>, vector<1x1x3xf32>
    %31 = vector.shape_cast %30 : vector<1x1x3xf32> to vector<1x3xf32>
    %32 = vector.shape_cast %29 : vector<1x3xf32> to vector<1x1x3xf32>
    tpu.vector_store %arg5[%c0_19, %c0_20, %c0_21], %32 {strides = array<i32>} : memref<1x1x3xf32, #tpu.memory_space<vmem>>, vector<1x1x3xf32>,
    return
  }
  func.func @transform_0(%arg0: i32) -> (i32, i32, i32) {
    %c0_i32 = arith.constant 0 : i32
    %c0_i32_0 = arith.constant 0 : i32
    %c0_i32_1 = arith.constant 0 : i32
    return %arg0, %c0_i32, %c0_i32_0 : i32, i32, i32
  }
  func.func @transform_1(%arg0: i32) -> (i32, i32, i32) {
    %c0_i32 = arith.constant 0 : i32
    %c0_i32_0 = arith.constant 0 : i32
    %c0_i32_1 = arith.constant 0 : i32
    return %arg0, %c0_i32, %c0_i32_0 : i32, i32, i32
  }
  func.func @transform_2(%arg0: i32) -> (i32, i32) {
    %c0_i32 = arith.constant 0 : i32
    %c0_i32_0 = arith.constant 0 : i32
    %c0_i32_1 = arith.constant 0 : i32
    return %c0_i32, %c0_i32_0 : i32, i32
  }
  func.func @transform_3(%arg0: i32) -> (i32, i32) {
    %c0_i32 = arith.constant 0 : i32
    %c0_i32_0 = arith.constant 0 : i32
    %c0_i32_1 = arith.constant 0 : i32
    return %c0_i32, %c0_i32_0 : i32, i32
  }
  func.func @transform_4(%arg0: i32) -> (i32, i32, i32) {
    %c0_i32 = arith.constant 0 : i32
    %c0_i32_0 = arith.constant 0 : i32
    %c0_i32_1 = arith.constant 0 : i32
    return %arg0, %c0_i32, %c0_i32_0 : i32, i32, i32
  }
}

</mosaic_0001>

<llo_original>
// kernel: wx_forward.16
$region0: #{wx_forward.16}
  #allocation0 [shape = 'u32[]', space=smem, size = 0x4, offset = 0x4, fixed_abs, tag = 'smem constant byte address 0x4 - core index']
  #allocation1 [shape = 'u32[72,128]{1,0:T(1,128)}', space=vmem, size = 0x9000, scoped, tag = 'internal scratch']
  %s0 = inlined_call_operand.vmem [shape: f32[2,4,32], index: 0, kind: input, shape index: {}]
  %s1 = inlined_call_operand.vmem [shape: f32[4,32], index: 1, kind: input, shape index: {}]
  %s2 = inlined_call_operand.vmem [shape: f32[1,32], index: 2, kind: input, shape index: {}]
  %s3 = inlined_call_operand.vmem [shape: f32[1,32], index: 3, kind: input, shape index: {}]
  %s4 = inlined_call_operand.vmem [shape: f32[1,32], index: 4, kind: input, shape index: {}]
  %s5 = inlined_call_operand.vmem [shape: f32[2,4,32], index: 5, kind: output, shape index: {}]
  %s6 = sld [smem:[#allocation0]]
  $region53: #{wx_forward.16} parent=0
    _
  %s8 = ssub.s32 1, %s6
  %s9 = scalar_select 0, %s8, %s6
  loop: start=0, step=1, limit=4
  $region2: #{wx_forward.16} parent=0 // loop_pre_header
    _
  $region3: #{wx_forward.16} parent=0 // loop_header
    %s11 = sphi 0, %s15
    %p12 = scmp.ge.s32.totalorder %s11, 4
    %s18 = sphi 0, %s30
    %s19 = sphi 0, %s26
    %s20 = sphi 0, %s18
    %s21 = sphi 0, %s19
    %s22 = sphi 0, %s20
    %s23 = sphi 0, %s21
    %s35 = sphi 0, %s37
    %s38 = sphi 0, %s35
    %s39 = sphi 0, %s38
    %s55 = sphi 0, %s39
    %s61 = sphi 0, %s63
    %s64 = sphi 0, %s61
    %s65 = sphi 0, %s64
    %s81 = sphi 0, %s65
    %s85 = sphi 0, %s85
    %s87 = sphi 0, %s85
    %s88 = sphi 0, %s87
    %s102 = sphi 0, %s88
    %s106 = sphi 0, %s106
    %s108 = sphi 0, %s106
    %s109 = sphi 0, %s108
    %s123 = sphi 0, %s109
    %s127 = sphi 0, %s127
    %s129 = sphi 0, %s127
    %s130 = sphi 0, %s129
    %s144 = sphi 0, %s130
    %s152 = sphi 0, %s154
    %s155 = sphi 0, %s152
    %s156 = sphi 0, %s155
    %s172 = sphi 0, %s156
  $region4: #{wx_forward.16} parent=0 // loop_header_branch
    %14 = sbr.rel (%p12) target = $region8
  $region5: #{wx_forward.16} parent=0 // loop_body
    %s16 = ssub.s32 %s11, 1
    %s17 = ssub.s32 %s11, 2
    %s24 = sadd.s32 1, %s19
    %p25 = scmp.ge.s32.totalorder %s24, 1
    %s26 = scalar_select %p25, 0, %s24
    %s27 = sadd.s32 1, %s18
    %s28 = scalar_select %p25, %s27, %s18
    %p29 = scmp.ge.s32.totalorder %s28, 2
    %s30 = scalar_select %p29, 0, %s28
    %s31 = ssub.s32 %s18, %s30
    %s32 = ssub.s32 %s19, %s26
    %s33 = sor.u32 %s31, %s32
    %p34 = scmp.eq.s32.totalorder %s33, 0
    %s36 = sadd.s32 %s35, 1
    %s37 = scalar_select %p34, %s35, %s36
    %p40 = pneg %p34
    %p41 = scmp.eq.s32.totalorder %s11, 1
    %p42 = por %p40, %p41
    %p43 = scmp.ne.s32.totalorder %s35, %s38
    %p44 = scmp.eq.s32.totalorder %s11, 0
    %p45 = por %p43, %p44
    %p46 = scmp.ne.s32.totalorder %s35, %s38
    %p47 = scmp.eq.s32.totalorder %s16, 1
    %p48 = por %p46, %p47
    %p49 = scmp.ne.s32.totalorder %s38, %s39
    %p50 = scmp.eq.s32.totalorder %s16, 0
    %p51 = por %p49, %p50
    %p52 = scmp.ne.s32.totalorder %s38, %s39
    %p53 = scmp.eq.s32.totalorder %s17, 1
    %p54 = por %p52, %p53
    %p56 = scmp.ne.s32.totalorder %s39, %s55
    %p57 = scmp.eq.s32.totalorder %s17, 0
    %p58 = por %p56, %p57
    %s59 = ssub.s32 %s19, %s26
    %p60 = scmp.eq.s32.totalorder %s59, 0
    %s62 = sadd.s32 %s61, 1
    %s63 = scalar_select %p60, %s61, %s62
    %p66 = pneg %p60
    %p67 = scmp.eq.s32.totalorder %s11, 1
    %p68 = por %p66, %p67
    %p69 = scmp.ne.s32.totalorder %s61, %s64
    %p70 = scmp.eq.s32.totalorder %s11, 0
    %p71 = por %p69, %p70
    %p72 = scmp.ne.s32.totalorder %s61, %s64
    %p73 = scmp.eq.s32.totalorder %s16, 1
    %p74 = por %p72, %p73
    %p75 = scmp.ne.s32.totalorder %s64, %s65
    %p76 = scmp.eq.s32.totalorder %s16, 0
    %p77 = por %p75, %p76
    %p78 = scmp.ne.s32.totalorder %s64, %s65
    %p79 = scmp.eq.s32.totalorder %s17, 1
    %p80 = por %p78, %p79
    %p82 = scmp.ne.s32.totalorder %s65, %s81
    %p83 = scmp.eq.s32.totalorder %s17, 0
    %p84 = por %p82, %p83
    %s86 = sadd.s32 %s85, 1
    %p89 = scmp.eq.s32.totalorder %s11, 1
    %p90 = scmp.ne.s32.totalorder %s85, %s87
    %p91 = scmp.eq.s32.totalorder %s11, 0
    %p92 = por %p90, %p91
    %p93 = scmp.ne.s32.totalorder %s85, %s87
    %p94 = scmp.eq.s32.totalorder %s16, 1
    %p95 = por %p93, %p94
    %p96 = scmp.ne.s32.totalorder %s87, %s88
    %p97 = scmp.eq.s32.totalorder %s16, 0
    %p98 = por %p96, %p97
    %p99 = scmp.ne.s32.totalorder %s87, %s88
    %p100 = scmp.eq.s32.totalorder %s17, 1
    %p101 = por %p99, %p100
    %p103 = scmp.ne.s32.totalorder %s88, %s102
    %p104 = scmp.eq.s32.totalorder %s17, 0
    %p105 = por %p103, %p104
    %s107 = sadd.s32 %s106, 1
    %p110 = scmp.eq.s32.totalorder %s11, 1
    %p111 = scmp.ne.s32.totalorder %s106, %s108
    %p112 = scmp.eq.s32.totalorder %s11, 0
    %p113 = por %p111, %p112
    %p114 = scmp.ne.s32.totalorder %s106, %s108
    %p115 = scmp.eq.s32.totalorder %s16, 1
    %p116 = por %p114, %p115
    %p117 = scmp.ne.s32.totalorder %s108, %s109
    %p118 = scmp.eq.s32.totalorder %s16, 0
    %p119 = por %p117, %p118
    %p120 = scmp.ne.s32.totalorder %s108, %s109
    %p121 = scmp.eq.s32.totalorder %s17, 1
    %p122 = por %p120, %p121
    %p124 = scmp.ne.s32.totalorder %s109, %s123
    %p125 = scmp.eq.s32.totalorder %s17, 0
    %p126 = por %p124, %p125
    %s128 = sadd.s32 %s127, 1
    %p131 = scmp.eq.s32.totalorder %s11, 1
    %p132 = scmp.ne.s32.totalorder %s127, %s129
    %p133 = scmp.eq.s32.totalorder %s11, 0
    %p134 = por %p132, %p133
    %p135 = scmp.ne.s32.totalorder %s127, %s129
    %p136 = scmp.eq.s32.totalorder %s16, 1
    %p137 = por %p135, %p136
    %p138 = scmp.ne.s32.totalorder %s129, %s130
    %p139 = scmp.eq.s32.totalorder %s16, 0
    %p140 = por %p138, %p139
    %p141 = scmp.ne.s32.totalorder %s129, %s130
    %p142 = scmp.eq.s32.totalorder %s17, 1
    %p143 = por %p141, %p142
    %p145 = scmp.ne.s32.totalorder %s130, %s144
    %p146 = scmp.eq.s32.totalorder %s17, 0
    %p147 = por %p145, %p146
    %s148 = ssub.s32 %s18, %s30
    %s149 = ssub.s32 %s19, %s26
    %s150 = sor.u32 %s148, %s149
    %p151 = scmp.eq.s32.totalorder %s150, 0
    %s153 = sadd.s32 %s152, 1
    %s154 = scalar_select %p151, %s152, %s153
    %p157 = pneg %p151
    %p158 = scmp.eq.s32.totalorder %s11, 1
    %p159 = por %p157, %p158
    %p160 = scmp.ne.s32.totalorder %s152, %s155
    %p161 = scmp.eq.s32.totalorder %s11, 0
    %p162 = por %p160, %p161
    %p163 = scmp.ne.s32.totalorder %s152, %s155
    %p164 = scmp.eq.s32.totalorder %s16, 1
    %p165 = por %p163, %p164
    %p166 = scmp.ne.s32.totalorder %s155, %s156
    %p167 = scmp.eq.s32.totalorder %s16, 0
    %p168 = por %p166, %p167
    %p169 = scmp.ne.s32.totalorder %s155, %s156
    %p170 = scmp.eq.s32.totalorder %s17, 1
    %p171 = por %p169, %p170
    %p173 = scmp.ne.s32.totalorder %s156, %s172
    %p174 = scmp.eq.s32.totalorder %s17, 0
    %p175 = por %p173, %p174
    %p176 = scmp.le.s32.totalorder 1, %s11
    %p177 = scmp.lt.s32.totalorder %s11, 3
    %p178 = pnand %p176, %p177
    %p179 = pneg %p178
    // Predicated region
    $region9: #{wx_forward.16} parent=5 // pred_check
      _
    $region10: #{wx_forward.16} parent=5 // pred_check_branch
      %181 = sbr.rel (%p178) target = $region12
    $region11: #{wx_forward.16} parent=5 // pred_region
      %s182 = ssub.s32 %s11, 1
      // Predicated region
      $region13: #{wx_forward.16} parent=11 // pred_check
        %p183 = pneg %p77
      $region14: #{wx_forward.16} parent=11 // pred_check_branch
        %185 = sbr.rel (%p183) target = $region16
      $region15: #{wx_forward.16} parent=11 // pred_region
        %p186 = scmp.lt.s32.totalorder %s21, 0
        %s187 = scalar_select %p186, %s21, 0
        %s188 = smul.addr %s187, 4
        %s189 = scalar_lea.vmem %s1, %s188
      $region16: #{wx_forward.16} parent=11 // pred_fallthru
        _
      // Predicated region
      $region17: #{wx_forward.16} parent=11 // pred_check
        %p190 = pneg %p98
      $region18: #{wx_forward.16} parent=11 // pred_check_branch
        %192 = sbr.rel (%p190) target = $region20
      $region19: #{wx_forward.16} parent=11 // pred_region
        _
      $region20: #{wx_forward.16} parent=11 // pred_fallthru
        _
      // Predicated region
      $region21: #{wx_forward.16} parent=11 // pred_check
        %p193 = pneg %p119
      $region22: #{wx_forward.16} parent=11 // pred_check_branch
        %195 = sbr.rel (%p193) target = $region24
      $region23: #{wx_forward.16} parent=11 // pred_region
        _
      $region24: #{wx_forward.16} parent=11 // pred_fallthru
        _
      // Predicated region
      $region25: #{wx_forward.16} parent=11 // pred_check
        %p196 = pneg %p140
      $region26: #{wx_forward.16} parent=11 // pred_check_branch
        %198 = sbr.rel (%p196) target = $region28
      $region27: #{wx_forward.16} parent=11 // pred_region
        _
      $region28: #{wx_forward.16} parent=11 // pred_fallthru
        _
    $region12: #{wx_forward.16} parent=5 // pred_fallthru
      _
    %p199 = scmp.lt.s32.totalorder %s11, 2
    // Predicated region
    $region29: #{wx_forward.16} parent=5 // pred_check
      %p200 = pneg %p199
    $region30: #{wx_forward.16} parent=5 // pred_check_branch
      %202 = sbr.rel (%p200) target = $region32
    $region31: #{wx_forward.16} parent=5 // pred_region
      // Predicated region
      $region33: #{wx_forward.16} parent=31 // pred_check
        %p203 = pneg %p45
      $region34: #{wx_forward.16} parent=31 // pred_check_branch
        %205 = sbr.rel (%p203) target = $region36
      $region35: #{wx_forward.16} parent=31 // pred_region
        %p206 = scmp.lt.s32.totalorder %s18, 1
        %s207 = scalar_select %p206, %s18, 1
        %p208 = scmp.lt.s32.totalorder %s19, 0
        %s209 = scalar_select %p208, %s19, 0
        %s210 = sadd.s32 %s209, %s207
        %s211 = smul.addr %s210, 4
        %s212 = scalar_lea.vmem %s0, %s211
      $region36: #{wx_forward.16} parent=31 // pred_fallthru
        _
    $region32: #{wx_forward.16} parent=5 // pred_fallthru
      _
    %p213 = scmp.le.s32.totalorder 1, %s11
    %p214 = scmp.lt.s32.totalorder %s11, 3
    %p215 = pnand %p213, %p214
    %p216 = pneg %p215
    // Predicated region
    $region37: #{wx_forward.16} parent=5 // pred_check
      _
    $region38: #{wx_forward.16} parent=5 // pred_check_branch
      %218 = sbr.rel (%p215) target = $region40
    $region39: #{wx_forward.16} parent=5 // pred_region
      %s219 = ssub.s32 %s11, 1
      %p220 = scmp.lt.s32.totalorder %s20, 1
      %s221 = scalar_select %p220, %s20, 1
      %p222 = scmp.lt.s32.totalorder %s21, 0
      %s223 = scalar_select %p222, %s21, 0
      %s224 = sadd.s32 %s223, %s221
      %s225 = smul.addr %s224, 4
      %s226 = scalar_lea.vmem %s0, %s225
      %p227 = pneg %p51
      %p228 = pneg %p48
      %p229 = scmp.lt.s32.totalorder %s21, 0
      %s230 = scalar_select %p229, %s21, 0
      %s231 = smul.addr %s230, 4
      %s232 = scalar_lea.vmem %s1, %s231
      %p233 = pneg %p77
      %p234 = pneg %p74
      %p235 = pneg %p98
      %p236 = pneg %p95
      %p237 = pneg %p119
      %p238 = pneg %p116
      %p239 = pneg %p140
      %p240 = pneg %p137
      %p241 = pneg %p168
      %p242 = pneg %p165
      %p243 = scmp.lt.s32.totalorder %s20, 1
      %s244 = scalar_select %p243, %s20, 1
      %p245 = scmp.lt.s32.totalorder %s21, 0
      %s246 = scalar_select %p245, %s21, 0
      %s247 = sadd.s32 %s246, %s244
      %s248 = smul.addr %s247, 4
      %s249 = scalar_lea.vmem %s5, %s248
      %p250 = scmp.lt.s32.totalorder %s20, 1
      %s251 = scalar_select %p250, %s20, 1
      %p252 = scmp.lt.s32.totalorder %s21, 0
      %s253 = scalar_select %p252, %s21, 0
      %s254 = sadd.s32 %s253, %s251
      %s255 = smul.addr %s254, 4
      %s256 = scalar_lea.vmem %s0, %s255
      %p257 = scmp.lt.s32.totalorder %s21, 0
      %s258 = scalar_select %p257, %s21, 0
      %s259 = smul.addr %s258, 4
      %s260 = scalar_lea.vmem %s1, %s259
      %p261 = scmp.lt.s32.totalorder %s20, 1
      %s262 = scalar_select %p261, %s20, 1
      %p263 = scmp.lt.s32.totalorder %s21, 0
      %s264 = scalar_select %p263, %s21, 0
      %s265 = sadd.s32 %s264, %s262
      %s266 = smul.addr %s265, 4
      %s267 = scalar_lea.vmem %s5, %s266
      %v268 = vld [vmem:[%s256] sm:$0xf]
      %v269 = vld [vmem:[%s260] sm:$0xf]
      %v270 = vadd.f32 %v268, %v269
      %v271 = vld [vmem:[%s2] sm:$0x1]
      %v273 = vperm.slane %v271, 0
      %v275 = vadd.f32 %v270, %v273
      %vm276 = vcmask 257024
      %v277 = vsel %vm276, %v275, 0.0
      %278 = vadd.xlane.f32.xlu0 %v277
      %v279 = vpop.xlane.xlu0 %278
      %v280 = vrcp.pop 32.0
      %v281 = vmul.f32 32.0, %v280
      %v282 = vsub.f32 1.0, %v281
      %v283 = vmul.f32 %v280, %v282
      %v284 = vadd.f32 %v280, %v283
      %vm285 = vweird.f32 %v280
      %v286 = vsel %vm285, %v280, %v284
      %v287 = vmul.f32 %v279, %v286
      %v288 = vsub.f32 %v275, %v287
      %v289 = vmul.f32 %v288, %v288
      %v290 = vsel %vm276, %v289, 0.0
      %291 = vadd.xlane.f32.xlu0 %v290
      %v292 = vpop.xlane.xlu0 %291
      %v293 = vmul.f32 %v292, %v286
      %v294 = vadd.f32 %v293, 1e-12
      %v295 = vrsqrt.pop %v294
      %v296 = vmul.f32 %v295, %v294
      %v297 = vmul.f32 %v296, %v295
      %v298 = vmul.f32 0.5, %v297
      %v299 = vsub.f32 1.5, %v298
      %v300 = vmul.f32 %v295, %v299
      %vm301 = vweird.f32 %v294
      %vm302 = vweird.f32 %v295
      %vm303 = vmor %vm301, %vm302
      %v304 = vsel %vm303, %v295, %v300
      %v305 = vmul.f32 %v288, %v304
      %v306 = vld [vmem:[%s3] sm:$0x1]
      %v308 = vperm.slane %v306, 0
      %v310 = vmul.f32 %v305, %v308
      %v311 = vld [vmem:[%s4] sm:$0x1]
      %v313 = vperm.slane %v311, 0
      %v315 = vadd.f32 %v310, %v313
      %316 = vst.msk [vmem:[%s267] sm:$0xf] %vm276, %v315
      %p317 = scmp.lt.s32.totalorder %s20, 1
      %s318 = scalar_select %p317, %s20, 1
      %p319 = scmp.lt.s32.totalorder %s21, 0
      %s320 = scalar_select %p319, %s21, 0
      %s321 = sadd.s32 %s320, %s318
      %s322 = smul.addr %s321, 4
      %s323 = scalar_lea.vmem %s5, %s322
      // Predicated region
      $region41: #{wx_forward.16} parent=39 // pred_check
        %p324 = pneg %p165
      $region42: #{wx_forward.16} parent=39 // pred_check_branch
        %326 = sbr.rel (%p324) target = $region44
      $region43: #{wx_forward.16} parent=39 // pred_region
        _
      $region44: #{wx_forward.16} parent=39 // pred_fallthru
        _
    $region40: #{wx_forward.16} parent=5 // pred_fallthru
      _
    %p327 = scmp.le.s32.totalorder 2, %s11
    // Predicated region
    $region45: #{wx_forward.16} parent=5 // pred_check
      %p328 = pneg %p327
    $region46: #{wx_forward.16} parent=5 // pred_check_branch
      %330 = sbr.rel (%p328) target = $region48
    $region47: #{wx_forward.16} parent=5 // pred_region
      %s331 = ssub.s32 %s11, 2
      // Predicated region
      $region49: #{wx_forward.16} parent=47 // pred_check
        %p332 = pneg %p171
      $region50: #{wx_forward.16} parent=47 // pred_check_branch
        %334 = sbr.rel (%p332) target = $region52
      $region51: #{wx_forward.16} parent=47 // pred_region
        %p335 = scmp.lt.s32.totalorder %s22, 1
        %s336 = scalar_select %p335, %s22, 1
        %p337 = scmp.lt.s32.totalorder %s23, 0
        %s338 = scalar_select %p337, %s23, 0
        %s339 = sadd.s32 %s338, %s336
        %s340 = smul.addr %s339, 4
        %s341 = scalar_lea.vmem %s5, %s340
      $region52: #{wx_forward.16} parent=47 // pred_fallthru
        _
    $region48: #{wx_forward.16} parent=5 // pred_fallthru
      _
  $region6: #{wx_forward.16} parent=0 // loop_footer
    %s15 = sadd.s32 1, %s11
  $region7: #{wx_forward.16} parent=0 // loop_footer_branch
    %10 = sbr.rel target = $region3
  $region8: #{wx_forward.16} parent=0 // loop_exit
    _

// kernel: wx_forward.15
$region0: #{wx_forward.15}
  #allocation0 [shape = 'u32[]', space=smem, size = 0x4, offset = 0x4, fixed_abs, tag = 'smem constant byte address 0x4 - core index']
  #allocation1 [shape = 'u32[72,128]{1,0:T(1,128)}', space=vmem, size = 0x9000, scoped, tag = 'internal scratch']
  #allocation2 [shape = 'f32[8,32]{1,0:T(8,128)}', space=vmem, size = 0x1000, scoped, tag = 'scratch operand']
  %s0 = inlined_call_operand.vmem [shape: f32[8,768], index: 0, kind: input, shape index: {}]
  %s1 = inlined_call_operand.hbm [shape: bf16[768,32], index: 1, kind: input, shape index: {}]
  %s2 = inlined_call_operand.vmem [shape: f32[1,32], index: 2, kind: input, shape index: {}]
  %s3 = inlined_call_operand.vmem [shape: f32[8,32], index: 3, kind: output, shape index: {}]
  %s4 = sld [smem:[#allocation0]]
  $region34: #{wx_forward.15} parent=0
    _
  %s6 = ssub.s32 1, %s4
  %s7 = scalar_select 0, %s6, %s4
  $region1: #{wx_forward.15} parent=0
    #allocation3 [shape = 'u8[196608]{0}', space=vmem, size = 0x30000, scoped, tag = 'input window, operand 1, single buffered']
    #allocation4 [shape = 's32[1]{0}', space=sflag, size = 0x4, scoped, tag = 'scoped memory for wx_forward.15']
    %8 = vsyncpa [#allocation4], 0
    // Predicated region
    $region2: #{wx_forward.15} parent=1 // pred_check
      _
    $region3: #{wx_forward.15} parent=1 // pred_check_branch
      %10 = sbr.rel (0) target = $region5
    $region4: #{wx_forward.15} parent=1 // pred_region
      _
    $region5: #{wx_forward.15} parent=1 // pred_fallthru
      _
    // Predicated region
    $region6: #{wx_forward.15} parent=1 // pred_check
      _
    $region7: #{wx_forward.15} parent=1 // pred_check_branch
      %12 = sbr.rel (0) target = $region9
    $region8: #{wx_forward.15} parent=1 // pred_region
      %14 = vsyncadd [#allocation4], 0
      %s15 = sshll.u32 %s1, 4
      %s16 = int_to_ptr.hbm [resolvable:$true] %s15
      %s17 = sshll.u32 [#allocation3], 4
      %s18 = int_to_ptr.vmem [resolvable:$true] %s17
      %23 = dma.hbm_to_vmem [thread:$0]  %s16, 6144, %s18, [#allocation4], 64, 64, 4
    $region9: #{wx_forward.15} parent=1 // pred_fallthru
      _
    // Predicated region
    $region10: #{wx_forward.15} parent=1 // pred_check
      _
    $region11: #{wx_forward.15} parent=1 // pred_check_branch
      %25 = sbr.rel (0) target = $region13
    $region12: #{wx_forward.15} parent=1 // pred_region
      _
    $region13: #{wx_forward.15} parent=1 // pred_fallthru
      _
    // Predicated region
    $region14: #{wx_forward.15} parent=1 // pred_check
      _
    $region15: #{wx_forward.15} parent=1 // pred_check_branch
      %27 = sbr.rel (0) target = $region17
    $region16: #{wx_forward.15} parent=1 // pred_region
      %29 = dma.done [#allocation4], 6144
    $region17: #{wx_forward.15} parent=1 // pred_fallthru
      _
    %p30 = scmp.eq.s32.totalorder 0, 0
    // Predicated region
    $region18: #{wx_forward.15} parent=1 // pred_check
      %p31 = pneg %p30
    $region19: #{wx_forward.15} parent=1 // pred_check_branch
      %33 = sbr.rel (%p31) target = $region21
    $region20: #{wx_forward.15} parent=1 // pred_region
      %vm34 = vcmask 261120
      %35 = vst.msk [vmem:[#allocation2] sm:$0xff] %vm34, 0.0
    $region21: #{wx_forward.15} parent=1 // pred_fallthru
      _
    %v36 = vld [vmem:[#allocation2] sm:$0xff]
    %v37 = vld [vmem:[%s0] sm:$0xff]
    %v38 = vld [vmem:[%s0 + $0x8] sm:$0xff]
    %v39 = vld [vmem:[%s0 + $0x10] sm:$0xff]
    %v40 = vld [vmem:[%s0 + $0x18] sm:$0xff]
    %v41 = vld [vmem:[%s0 + $0x20] sm:$0xff]
    %v42 = vld [vmem:[%s0 + $0x28] sm:$0xff]
    %v43 = vpack.c.bf16 %v37, %v37
    %v44 = vpack.c.bf16 %v38, %v38
    %v45 = vpack.c.bf16 %v39, %v39
    %v46 = vpack.c.bf16 %v40, %v40
    %v47 = vpack.c.bf16 %v41, %v41
    %v48 = vpack.c.bf16 %v42, %v42
    %v49 = vld [vmem:[#allocation3] sm:$0xf]
    %v50 = vld [vmem:[#allocation3 + $0x4] sm:$0xf]
    %v51 = vld [vmem:[#allocation3 + $0x8] sm:$0xf]
    %v52 = vld [vmem:[#allocation3 + $0xc] sm:$0xf]
    %v53 = vld [vmem:[#allocation3 + $0x10] sm:$0xf]
    %v54 = vld [vmem:[#allocation3 + $0x14] sm:$0xf]
    %v55 = vld [vmem:[#allocation3 + $0x18] sm:$0xf]
    %v56 = vld [vmem:[#allocation3 + $0x1c] sm:$0xf]
    %v57 = vld [vmem:[#allocation3 + $0x20] sm:$0xf]
    %v58 = vld [vmem:[#allocation3 + $0x24] sm:$0xf]
    %v59 = vld [vmem:[#allocation3 + $0x28] sm:$0xf]
    %v60 = vld [vmem:[#allocation3 + $0x2c] sm:$0xf]
    %v61 = vld [vmem:[#allocation3 + $0x30] sm:$0xf]
    %v62 = vld [vmem:[#allocation3 + $0x34] sm:$0xf]
    %v63 = vld [vmem:[#allocation3 + $0x38] sm:$0xf]
    %v64 = vld [vmem:[#allocation3 + $0x3c] sm:$0xf]
    %v65 = vld [vmem:[#allocation3 + $0x40] sm:$0xf]
    %v66 = vld [vmem:[#allocation3 + $0x44] sm:$0xf]
    %v67 = vld [vmem:[#allocation3 + $0x48] sm:$0xf]
    %v68 = vld [vmem:[#allocation3 + $0x4c] sm:$0xf]
    %v69 = vld [vmem:[#allocation3 + $0x50] sm:$0xf]
    %v70 = vld [vmem:[#allocation3 + $0x54] sm:$0xf]
    %v71 = vld [vmem:[#allocation3 + $0x58] sm:$0xf]
    %v72 = vld [vmem:[#allocation3 + $0x5c] sm:$0xf]
    %v73 = vld [vmem:[#allocation3 + $0x60] sm:$0xf]
    %v74 = vld [vmem:[#allocation3 + $0x64] sm:$0xf]
    %v75 = vld [vmem:[#allocation3 + $0x68] sm:$0xf]
    %v76 = vld [vmem:[#allocation3 + $0x6c] sm:$0xf]
    %v77 = vld [vmem:[#allocation3 + $0x70] sm:$0xf]
    %v78 = vld [vmem:[#allocation3 + $0x74] sm:$0xf]
    %v79 = vld [vmem:[#allocation3 + $0x78] sm:$0xf]
    %v80 = vld [vmem:[#allocation3 + $0x7c] sm:$0xf]
    %v81 = vld [vmem:[#allocation3 + $0x80] sm:$0xf]
    %v82 = vld [vmem:[#allocation3 + $0x84] sm:$0xf]
    %v83 = vld [vmem:[#allocation3 + $0x88] sm:$0xf]
    %v84 = vld [vmem:[#allocation3 + $0x8c] sm:$0xf]
    %v85 = vld [vmem:[#allocation3 + $0x90] sm:$0xf]
    %v86 = vld [vmem:[#allocation3 + $0x94] sm:$0xf]
    %v87 = vld [vmem:[#allocation3 + $0x98] sm:$0xf]
    %v88 = vld [vmem:[#allocation3 + $0x9c] sm:$0xf]
    %v89 = vld [vmem:[#allocation3 + $0xa0] sm:$0xf]
    %v90 = vld [vmem:[#allocation3 + $0xa4] sm:$0xf]
    %v91 = vld [vmem:[#allocation3 + $0xa8] sm:$0xf]
    %v92 = vld [vmem:[#allocation3 + $0xac] sm:$0xf]
    %v93 = vld [vmem:[#allocation3 + $0xb0] sm:$0xf]
    %v94 = vld [vmem:[#allocation3 + $0xb4] sm:$0xf]
    %v95 = vld [vmem:[#allocation3 + $0xb8] sm:$0xf]
    %v96 = vld [vmem:[#allocation3 + $0xbc] sm:$0xf]
    %v97 = vld [vmem:[#allocation3 + $0xc0] sm:$0xf]
    %v98 = vld [vmem:[#allocation3 + $0xc4] sm:$0xf]
    %v99 = vld [vmem:[#allocation3 + $0xc8] sm:$0xf]
    %v100 = vld [vmem:[#allocation3 + $0xcc] sm:$0xf]
    %v101 = vld [vmem:[#allocation3 + $0xd0] sm:$0xf]
    %v102 = vld [vmem:[#allocation3 + $0xd4] sm:$0xf]
    %v103 = vld [vmem:[#allocation3 + $0xd8] sm:$0xf]
    %v104 = vld [vmem:[#allocation3 + $0xdc] sm:$0xf]
    %v105 = vld [vmem:[#allocation3 + $0xe0] sm:$0xf]
    %v106 = vld [vmem:[#allocation3 + $0xe4] sm:$0xf]
    %v107 = vld [vmem:[#allocation3 + $0xe8] sm:$0xf]
    %v108 = vld [vmem:[#allocation3 + $0xec] sm:$0xf]
    %v109 = vld [vmem:[#allocation3 + $0xf0] sm:$0xf]
    %v110 = vld [vmem:[#allocation3 + $0xf4] sm:$0xf]
    %v111 = vld [vmem:[#allocation3 + $0xf8] sm:$0xf]
    %v112 = vld [vmem:[#allocation3 + $0xfc] sm:$0xf]
    %v113 = vld [vmem:[#allocation3 + $0x100] sm:$0xf]
    %v114 = vld [vmem:[#allocation3 + $0x104] sm:$0xf]
    %v115 = vld [vmem:[#allocation3 + $0x108] sm:$0xf]
    %v116 = vld [vmem:[#allocation3 + $0x10c] sm:$0xf]
    %v117 = vld [vmem:[#allocation3 + $0x110] sm:$0xf]
    %v118 = vld [vmem:[#allocation3 + $0x114] sm:$0xf]
    %v119 = vld [vmem:[#allocation3 + $0x118] sm:$0xf]
    %v120 = vld [vmem:[#allocation3 + $0x11c] sm:$0xf]
    %v121 = vld [vmem:[#allocation3 + $0x120] sm:$0xf]
    %v122 = vld [vmem:[#allocation3 + $0x124] sm:$0xf]
    %v123 = vld [vmem:[#allocation3 + $0x128] sm:$0xf]
    %v124 = vld [vmem:[#allocation3 + $0x12c] sm:$0xf]
    %v125 = vld [vmem:[#allocation3 + $0x130] sm:$0xf]
    %v126 = vld [vmem:[#allocation3 + $0x134] sm:$0xf]
    %v127 = vld [vmem:[#allocation3 + $0x138] sm:$0xf]
    %v128 = vld [vmem:[#allocation3 + $0x13c] sm:$0xf]
    %v129 = vld [vmem:[#allocation3 + $0x140] sm:$0xf]
    %v130 = vld [vmem:[#allocation3 + $0x144] sm:$0xf]
    %v131 = vld [vmem:[#allocation3 + $0x148] sm:$0xf]
    %v132 = vld [vmem:[#allocation3 + $0x14c] sm:$0xf]
    %v133 = vld [vmem:[#allocation3 + $0x150] sm:$0xf]
    %v134 = vld [vmem:[#allocation3 + $0x154] sm:$0xf]
    %v135 = vld [vmem:[#allocation3 + $0x158] sm:$0xf]
    %v136 = vld [vmem:[#allocation3 + $0x15c] sm:$0xf]
    %v137 = vld [vmem:[#allocation3 + $0x160] sm:$0xf]
    %v138 = vld [vmem:[#allocation3 + $0x164] sm:$0xf]
    %v139 = vld [vmem:[#allocation3 + $0x168] sm:$0xf]
    %v140 = vld [vmem:[#allocation3 + $0x16c] sm:$0xf]
    %v141 = vld [vmem:[#allocation3 + $0x170] sm:$0xf]
    %v142 = vld [vmem:[#allocation3 + $0x174] sm:$0xf]
    %v143 = vld [vmem:[#allocation3 + $0x178] sm:$0xf]
    %v144 = vld [vmem:[#allocation3 + $0x17c] sm:$0xf]
    %v241 = vunpack.c.l.b16 %v49
    %v242 = vunpack.c.l.b16 %v50
    %v243 = vunpack.c.l.b16 %v51
    %v244 = vunpack.c.l.b16 %v52
    %v245 = vunpack.c.l.b16 %v53
    %v246 = vunpack.c.l.b16 %v54
    %v247 = vunpack.c.l.b16 %v55
    %v248 = vunpack.c.l.b16 %v56
    %v249 = vunpack.c.l.b16 %v57
    %v250 = vunpack.c.l.b16 %v58
    %v251 = vunpack.c.l.b16 %v59
    %v252 = vunpack.c.l.b16 %v60
    %v253 = vunpack.c.l.b16 %v61
    %v254 = vunpack.c.l.b16 %v62
    %v255 = vunpack.c.l.b16 %v63
    %v256 = vunpack.c.l.b16 %v64
    %v257 = vunpack.c.l.b16 %v65
    %v258 = vunpack.c.l.b16 %v66
    %v259 = vunpack.c.l.b16 %v67
    %v260 = vunpack.c.l.b16 %v68
    %v261 = vunpack.c.l.b16 %v69
    %v262 = vunpack.c.l.b16 %v70
    %v263 = vunpack.c.l.b16 %v71
    %v264 = vunpack.c.l.b16 %v72
    %v265 = vunpack.c.l.b16 %v73
    %v266 = vunpack.c.l.b16 %v74
    %v267 = vunpack.c.l.b16 %v75
    %v268 = vunpack.c.l.b16 %v76
    %v269 = vunpack.c.l.b16 %v77
    %v270 = vunpack.c.l.b16 %v78
    %v271 = vunpack.c.l.b16 %v79
    %v272 = vunpack.c.l.b16 %v80
    %v273 = vunpack.c.l.b16 %v81
    %v274 = vunpack.c.l.b16 %v82
    %v275 = vunpack.c.l.b16 %v83
    %v276 = vunpack.c.l.b16 %v84
    %v277 = vunpack.c.l.b16 %v85
    %v278 = vunpack.c.l.b16 %v86
    %v279 = vunpack.c.l.b16 %v87
    %v280 = vunpack.c.l.b16 %v88
    %v281 = vunpack.c.l.b16 %v89
    %v282 = vunpack.c.l.b16 %v90
    %v283 = vunpack.c.l.b16 %v91
    %v284 = vunpack.c.l.b16 %v92
    %v285 = vunpack.c.l.b16 %v93
    %v286 = vunpack.c.l.b16 %v94
    %v287 = vunpack.c.l.b16 %v95
    %v288 = vunpack.c.l.b16 %v96
    %v289 = vunpack.c.l.b16 %v97
    %v290 = vunpack.c.l.b16 %v98
    %v291 = vunpack.c.l.b16 %v99
    %v292 = vunpack.c.l.b16 %v100
    %v293 = vunpack.c.l.b16 %v101
    %v294 = vunpack.c.l.b16 %v102
    %v295 = vunpack.c.l.b16 %v103
    %v296 = vunpack.c.l.b16 %v104
    %v297 = vunpack.c.l.b16 %v105
    %v298 = vunpack.c.l.b16 %v106
    %v299 = vunpack.c.l.b16 %v107
    %v300 = vunpack.c.l.b16 %v108
    %v301 = vunpack.c.l.b16 %v109
    %v302 = vunpack.c.l.b16 %v110
    %v303 = vunpack.c.l.b16 %v111
    %v304 = vunpack.c.l.b16 %v112
    %v305 = vunpack.c.l.b16 %v113
    %v306 = vunpack.c.l.b16 %v114
    %v307 = vunpack.c.l.b16 %v115
    %v308 = vunpack.c.l.b16 %v116
    %v309 = vunpack.c.l.b16 %v117
    %v310 = vunpack.c.l.b16 %v118
    %v311 = vunpack.c.l.b16 %v119
    %v312 = vunpack.c.l.b16 %v120
    %v313 = vunpack.c.l.b16 %v121
    %v314 = vunpack.c.l.b16 %v122
    %v315 = vunpack.c.l.b16 %v123
    %v316 = vunpack.c.l.b16 %v124
    %v317 = vunpack.c.l.b16 %v125
    %v318 = vunpack.c.l.b16 %v126
    %v319 = vunpack.c.l.b16 %v127
    %v320 = vunpack.c.l.b16 %v128
    %v321 = vunpack.c.l.b16 %v129
    %v322 = vunpack.c.l.b16 %v130
    %v323 = vunpack.c.l.b16 %v131
    %v324 = vunpack.c.l.b16 %v132
    %v325 = vunpack.c.l.b16 %v133
    %v326 = vunpack.c.l.b16 %v134
    %v327 = vunpack.c.l.b16 %v135
    %v328 = vunpack.c.l.b16 %v136
    %v329 = vunpack.c.l.b16 %v137
    %v330 = vunpack.c.l.b16 %v138
    %v331 = vunpack.c.l.b16 %v139
    %v332 = vunpack.c.l.b16 %v140
    %v333 = vunpack.c.l.b16 %v141
    %v334 = vunpack.c.l.b16 %v142
    %v335 = vunpack.c.l.b16 %v143
    %v336 = vunpack.c.l.b16 %v144
    %v337 = vpack.c.b16 %v242, %v241
    %v338 = vpack.c.b16 %v244, %v243
    %v339 = vpack.c.b16 %v246, %v245
    %v340 = vpack.c.b16 %v248, %v247
    %v341 = vpack.c.b16 %v250, %v249
    %v342 = vpack.c.b16 %v252, %v251
    %v343 = vpack.c.b16 %v254, %v253
    %v344 = vpack.c.b16 %v256, %v255
    %v345 = vpack.c.b16 %v258, %v257
    %v346 = vpack.c.b16 %v260, %v259
    %v347 = vpack.c.b16 %v262, %v261
    %v348 = vpack.c.b16 %v264, %v263
    %v349 = vpack.c.b16 %v266, %v265
    %v350 = vpack.c.b16 %v268, %v267
    %v351 = vpack.c.b16 %v270, %v269
    %v352 = vpack.c.b16 %v272, %v271
    %v353 = vpack.c.b16 %v274, %v273
    %v354 = vpack.c.b16 %v276, %v275
    %v355 = vpack.c.b16 %v278, %v277
    %v356 = vpack.c.b16 %v280, %v279
    %v357 = vpack.c.b16 %v282, %v281
    %v358 = vpack.c.b16 %v284, %v283
    %v359 = vpack.c.b16 %v286, %v285
    %v360 = vpack.c.b16 %v288, %v287
    %v361 = vpack.c.b16 %v290, %v289
    %v362 = vpack.c.b16 %v292, %v291
    %v363 = vpack.c.b16 %v294, %v293
    %v364 = vpack.c.b16 %v296, %v295
    %v365 = vpack.c.b16 %v298, %v297
    %v366 = vpack.c.b16 %v300, %v299
    %v367 = vpack.c.b16 %v302, %v301
    %v368 = vpack.c.b16 %v304, %v303
    %v369 = vpack.c.b16 %v306, %v305
    %v370 = vpack.c.b16 %v308, %v307
    %v371 = vpack.c.b16 %v310, %v309
    %v372 = vpack.c.b16 %v312, %v311
    %v373 = vpack.c.b16 %v314, %v313
    %v374 = vpack.c.b16 %v316, %v315
    %v375 = vpack.c.b16 %v318, %v317
    %v376 = vpack.c.b16 %v320, %v319
    %v377 = vpack.c.b16 %v322, %v321
    %v378 = vpack.c.b16 %v324, %v323
    %v379 = vpack.c.b16 %v326, %v325
    %v380 = vpack.c.b16 %v328, %v327
    %v381 = vpack.c.b16 %v330, %v329
    %v382 = vpack.c.b16 %v332, %v331
    %v383 = vpack.c.b16 %v334, %v333
    %v384 = vpack.c.b16 %v336, %v335
    %433 = vmatpush.bf16.msra.mxu0 %v344
    %434 = vmatpush.bf16.msra.mxu0 %v343
    %435 = vmatpush.bf16.msra.mxu0 %v342
    %436 = vmatpush.bf16.msra.mxu0 %v341
    %437 = vmatpush.bf16.msra.mxu0 %v340
    %438 = vmatpush.bf16.msra.mxu0 %v339
    %439 = vmatpush.bf16.msra.mxu0 %v338
    %440 = vmatpush.bf16.msra.mxu0 %v337
    %441 = vmatmul.bf16.gmra.mxu0 %v43
    %v442 = vpop.f32.mrf.mxu0
    %v443 = vadd.f32 0.0, %v442
    %v444 = vpop.f32.mrf.mxu0
    %445 = vdwg.mxu0
    %446 = vmatpush.bf16.msra.mxu0 %v352
    %447 = vmatpush.bf16.msra.mxu0 %v351
    %448 = vmatpush.bf16.msra.mxu0 %v350
    %449 = vmatpush.bf16.msra.mxu0 %v349
    %450 = vmatpush.bf16.msra.mxu0 %v348
    %451 = vmatpush.bf16.msra.mxu0 %v347
    %452 = vmatpush.bf16.msra.mxu0 %v346
    %453 = vmatpush.bf16.msra.mxu0 %v345
    %454 = vmatmul.bf16.gmra.mxu0 %v44
    %v455 = vpop.f32.mrf.mxu0
    %v456 = vadd.f32 %v443, %v455
    %v457 = vpop.f32.mrf.mxu0
    %458 = vdwg.mxu0
    %459 = vmatpush.bf16.msra.mxu0 %v360
    %460 = vmatpush.bf16.msra.mxu0 %v359
    %461 = vmatpush.bf16.msra.mxu0 %v358
    %462 = vmatpush.bf16.msra.mxu0 %v357
    %463 = vmatpush.bf16.msra.mxu0 %v356
    %464 = vmatpush.bf16.msra.mxu0 %v355
    %465 = vmatpush.bf16.msra.mxu0 %v354
    %466 = vmatpush.bf16.msra.mxu0 %v353
    %467 = vmatmul.bf16.gmra.mxu0 %v45
    %v468 = vpop.f32.mrf.mxu0
    %v469 = vadd.f32 %v456, %v468
    %v470 = vpop.f32.mrf.mxu0
    %471 = vdwg.mxu0
    %472 = vmatpush.bf16.msra.mxu0 %v368
    %473 = vmatpush.bf16.msra.mxu0 %v367
    %474 = vmatpush.bf16.msra.mxu0 %v366
    %475 = vmatpush.bf16.msra.mxu0 %v365
    %476 = vmatpush.bf16.msra.mxu0 %v364
    %477 = vmatpush.bf16.msra.mxu0 %v363
    %478 = vmatpush.bf16.msra.mxu0 %v362
    %479 = vmatpush.bf16.msra.mxu0 %v361
    %480 = vmatmul.bf16.gmra.mxu0 %v46
    %v481 = vpop.f32.mrf.mxu0
    %v482 = vadd.f32 %v469, %v481
    %v483 = vpop.f32.mrf.mxu0
    %484 = vdwg.mxu0
    %485 = vmatpush.bf16.msra.mxu0 %v376
    %486 = vmatpush.bf16.msra.mxu0 %v375
    %487 = vmatpush.bf16.msra.mxu0 %v374
    %488 = vmatpush.bf16.msra.mxu0 %v373
    %489 = vmatpush.bf16.msra.mxu0 %v372
    %490 = vmatpush.bf16.msra.mxu0 %v371
    %491 = vmatpush.bf16.msra.mxu0 %v370
    %492 = vmatpush.bf16.msra.mxu0 %v369
    %493 = vmatmul.bf16.gmra.mxu0 %v47
    %v494 = vpop.f32.mrf.mxu0
    %v495 = vadd.f32 %v482, %v494
    %v496 = vpop.f32.mrf.mxu0
    %497 = vdwg.mxu0
    %498 = vmatpush.bf16.msra.mxu0 %v384
    %499 = vmatpush.bf16.msra.mxu0 %v383
    %500 = vmatpush.bf16.msra.mxu0 %v382
    %501 = vmatpush.bf16.msra.mxu0 %v381
    %502 = vmatpush.bf16.msra.mxu0 %v380
    %503 = vmatpush.bf16.msra.mxu0 %v379
    %504 = vmatpush.bf16.msra.mxu0 %v378
    %505 = vmatpush.bf16.msra.mxu0 %v377
    %506 = vmatmul.bf16.gmra.mxu0 %v48
    %v507 = vpop.f32.mrf.mxu0
    %v508 = vadd.f32 %v495, %v507
    %v509 = vpop.f32.mrf.mxu0
    %510 = vdwg.mxu0
    %v511 = vadd.f32 %v36, %v508
    %vm512 = vcmask 261120
    %513 = vst.msk [vmem:[#allocation2] sm:$0xff] %vm512, %v511
    // Predicated region
    $region22: #{wx_forward.15} parent=1 // pred_check
      %p514 = pneg %p30
    $region23: #{wx_forward.15} parent=1 // pred_check_branch
      %516 = sbr.rel (%p514) target = $region25
    $region24: #{wx_forward.15} parent=1 // pred_region
      %v517 = vld [vmem:[#allocation2] sm:$0xff]
      %v518 = vld [vmem:[%s2] sm:$0x1]
      %v520 = vperm.slane %v518, 0
      %v522 = vadd.f32 %v517, %v520
      %523 = vst.msk [vmem:[%s3] sm:$0xff] %vm512, %v522
    $region25: #{wx_forward.15} parent=1 // pred_fallthru
      _
    // Predicated region
    $region26: #{wx_forward.15} parent=1 // pred_check
      _
    $region27: #{wx_forward.15} parent=1 // pred_check_branch
      %525 = sbr.rel (0) target = $region29
    $region28: #{wx_forward.15} parent=1 // pred_region
      _
    $region29: #{wx_forward.15} parent=1 // pred_fallthru
      _
    // Predicated region
    $region30: #{wx_forward.15} parent=1 // pred_check
      _
    $region31: #{wx_forward.15} parent=1 // pred_check_branch
      %527 = sbr.rel (0) target = $region33
    $region32: #{wx_forward.15} parent=1 // pred_region
      _
    $region33: #{wx_forward.15} parent=1 // pred_fallthru
      _
    %528 = vsyncpa [#allocation4], 1

// kernel: wx_forward.14
$region0: #{wx_forward.14}
  #allocation0 [shape = 'u32[]', space=smem, size = 0x4, offset = 0x4, fixed_abs, tag = 'smem constant byte address 0x4 - core index']
  #allocation1 [shape = 'u32[72,128]{1,0:T(1,128)}', space=vmem, size = 0x9000, scoped, tag = 'internal scratch']
  %s0 = inlined_call_operand.vmem [shape: f32[2,8,32], index: 0, kind: input, shape index: {}]
  %s1 = inlined_call_operand.vmem [shape: f32[8,32], index: 1, kind: input, shape index: {}]
  %s2 = inlined_call_operand.vmem [shape: f32[1,32], index: 2, kind: input, shape index: {}]
  %s3 = inlined_call_operand.vmem [shape: f32[1,32], index: 3, kind: input, shape index: {}]
  %s4 = inlined_call_operand.vmem [shape: f32[1,32], index: 4, kind: input, shape index: {}]
  %s5 = inlined_call_operand.vmem [shape: f32[2,8,32], index: 5, kind: output, shape index: {}]
  %s6 = sld [smem:[#allocation0]]
  $region53: #{wx_forward.14} parent=0
    _
  %s8 = ssub.s32 1, %s6
  %s9 = scalar_select 0, %s8, %s6
  loop: start=0, step=1, limit=4
  $region2: #{wx_forward.14} parent=0 // loop_pre_header
    _
  $region3: #{wx_forward.14} parent=0 // loop_header
    %s11 = sphi 0, %s15
    %p12 = scmp.ge.s32.totalorder %s11, 4
    %s18 = sphi 0, %s30
    %s19 = sphi 0, %s26
    %s20 = sphi 0, %s18
    %s21 = sphi 0, %s19
    %s22 = sphi 0, %s20
    %s23 = sphi 0, %s21
    %s35 = sphi 0, %s37
    %s38 = sphi 0, %s35
    %s39 = sphi 0, %s38
    %s55 = sphi 0, %s39
    %s61 = sphi 0, %s63
    %s64 = sphi 0, %s61
    %s65 = sphi 0, %s64
    %s81 = sphi 0, %s65
    %s85 = sphi 0, %s85
    %s87 = sphi 0, %s85
    %s88 = sphi 0, %s87
    %s102 = sphi 0, %s88
    %s106 = sphi 0, %s106
    %s108 = sphi 0, %s106
    %s109 = sphi 0, %s108
    %s123 = sphi 0, %s109
    %s127 = sphi 0, %s127
    %s129 = sphi 0, %s127
    %s130 = sphi 0, %s129
    %s144 = sphi 0, %s130
    %s152 = sphi 0, %s154
    %s155 = sphi 0, %s152
    %s156 = sphi 0, %s155
    %s172 = sphi 0, %s156
  $region4: #{wx_forward.14} parent=0 // loop_header_branch
    %14 = sbr.rel (%p12) target = $region8
  $region5: #{wx_forward.14} parent=0 // loop_body
    %s16 = ssub.s32 %s11, 1
    %s17 = ssub.s32 %s11, 2
    %s24 = sadd.s32 1, %s19
    %p25 = scmp.ge.s32.totalorder %s24, 1
    %s26 = scalar_select %p25, 0, %s24
    %s27 = sadd.s32 1, %s18
    %s28 = scalar_select %p25, %s27, %s18
    %p29 = scmp.ge.s32.totalorder %s28, 2
    %s30 = scalar_select %p29, 0, %s28
    %s31 = ssub.s32 %s18, %s30
    %s32 = ssub.s32 %s19, %s26
    %s33 = sor.u32 %s31, %s32
    %p34 = scmp.eq.s32.totalorder %s33, 0
    %s36 = sadd.s32 %s35, 1
    %s37 = scalar_select %p34, %s35, %s36
    %p40 = pneg %p34
    %p41 = scmp.eq.s32.totalorder %s11, 1
    %p42 = por %p40, %p41
    %p43 = scmp.ne.s32.totalorder %s35, %s38
    %p44 = scmp.eq.s32.totalorder %s11, 0
    %p45 = por %p43, %p44
    %p46 = scmp.ne.s32.totalorder %s35, %s38
    %p47 = scmp.eq.s32.totalorder %s16, 1
    %p48 = por %p46, %p47
    %p49 = scmp.ne.s32.totalorder %s38, %s39
    %p50 = scmp.eq.s32.totalorder %s16, 0
    %p51 = por %p49, %p50
    %p52 = scmp.ne.s32.totalorder %s38, %s39
    %p53 = scmp.eq.s32.totalorder %s17, 1
    %p54 = por %p52, %p53
    %p56 = scmp.ne.s32.totalorder %s39, %s55
    %p57 = scmp.eq.s32.totalorder %s17, 0
    %p58 = por %p56, %p57
    %s59 = ssub.s32 %s19, %s26
    %p60 = scmp.eq.s32.totalorder %s59, 0
    %s62 = sadd.s32 %s61, 1
    %s63 = scalar_select %p60, %s61, %s62
    %p66 = pneg %p60
    %p67 = scmp.eq.s32.totalorder %s11, 1
    %p68 = por %p66, %p67
    %p69 = scmp.ne.s32.totalorder %s61, %s64
    %p70 = scmp.eq.s32.totalorder %s11, 0
    %p71 = por %p69, %p70
    %p72 = scmp.ne.s32.totalorder %s61, %s64
    %p73 = scmp.eq.s32.totalorder %s16, 1
    %p74 = por %p72, %p73
    %p75 = scmp.ne.s32.totalorder %s64, %s65
    %p76 = scmp.eq.s32.totalorder %s16, 0
    %p77 = por %p75, %p76
    %p78 = scmp.ne.s32.totalorder %s64, %s65
    %p79 = scmp.eq.s32.totalorder %s17, 1
    %p80 = por %p78, %p79
    %p82 = scmp.ne.s32.totalorder %s65, %s81
    %p83 = scmp.eq.s32.totalorder %s17, 0
    %p84 = por %p82, %p83
    %s86 = sadd.s32 %s85, 1
    %p89 = scmp.eq.s32.totalorder %s11, 1
    %p90 = scmp.ne.s32.totalorder %s85, %s87
    %p91 = scmp.eq.s32.totalorder %s11, 0
    %p92 = por %p90, %p91
    %p93 = scmp.ne.s32.totalorder %s85, %s87
    %p94 = scmp.eq.s32.totalorder %s16, 1
    %p95 = por %p93, %p94
    %p96 = scmp.ne.s32.totalorder %s87, %s88
    %p97 = scmp.eq.s32.totalorder %s16, 0
    %p98 = por %p96, %p97
    %p99 = scmp.ne.s32.totalorder %s87, %s88
    %p100 = scmp.eq.s32.totalorder %s17, 1
    %p101 = por %p99, %p100
    %p103 = scmp.ne.s32.totalorder %s88, %s102
    %p104 = scmp.eq.s32.totalorder %s17, 0
    %p105 = por %p103, %p104
    %s107 = sadd.s32 %s106, 1
    %p110 = scmp.eq.s32.totalorder %s11, 1
    %p111 = scmp.ne.s32.totalorder %s106, %s108
    %p112 = scmp.eq.s32.totalorder %s11, 0
    %p113 = por %p111, %p112
    %p114 = scmp.ne.s32.totalorder %s106, %s108
    %p115 = scmp.eq.s32.totalorder %s16, 1
    %p116 = por %p114, %p115
    %p117 = scmp.ne.s32.totalorder %s108, %s109
    %p118 = scmp.eq.s32.totalorder %s16, 0
    %p119 = por %p117, %p118
    %p120 = scmp.ne.s32.totalorder %s108, %s109
    %p121 = scmp.eq.s32.totalorder %s17, 1
    %p122 = por %p120, %p121
    %p124 = scmp.ne.s32.totalorder %s109, %s123
    %p125 = scmp.eq.s32.totalorder %s17, 0
    %p126 = por %p124, %p125
    %s128 = sadd.s32 %s127, 1
    %p131 = scmp.eq.s32.totalorder %s11, 1
    %p132 = scmp.ne.s32.totalorder %s127, %s129
    %p133 = scmp.eq.s32.totalorder %s11, 0
    %p134 = por %p132, %p133
    %p135 = scmp.ne.s32.totalorder %s127, %s129
    %p136 = scmp.eq.s32.totalorder %s16, 1
    %p137 = por %p135, %p136
    %p138 = scmp.ne.s32.totalorder %s129, %s130
    %p139 = scmp.eq.s32.totalorder %s16, 0
    %p140 = por %p138, %p139
    %p141 = scmp.ne.s32.totalorder %s129, %s130
    %p142 = scmp.eq.s32.totalorder %s17, 1
    %p143 = por %p141, %p142
    %p145 = scmp.ne.s32.totalorder %s130, %s144
    %p146 = scmp.eq.s32.totalorder %s17, 0
    %p147 = por %p145, %p146
    %s148 = ssub.s32 %s18, %s30
    %s149 = ssub.s32 %s19, %s26
    %s150 = sor.u32 %s148, %s149
    %p151 = scmp.eq.s32.totalorder %s150, 0
    %s153 = sadd.s32 %s152, 1
    %s154 = scalar_select %p151, %s152, %s153
    %p157 = pneg %p151
    %p158 = scmp.eq.s32.totalorder %s11, 1
    %p159 = por %p157, %p158
    %p160 = scmp.ne.s32.totalorder %s152, %s155
    %p161 = scmp.eq.s32.totalorder %s11, 0
    %p162 = por %p160, %p161
    %p163 = scmp.ne.s32.totalorder %s152, %s155
    %p164 = scmp.eq.s32.totalorder %s16, 1
    %p165 = por %p163, %p164
    %p166 = scmp.ne.s32.totalorder %s155, %s156
    %p167 = scmp.eq.s32.totalorder %s16, 0
    %p168 = por %p166, %p167
    %p169 = scmp.ne.s32.totalorder %s155, %s156
    %p170 = scmp.eq.s32.totalorder %s17, 1
    %p171 = por %p169, %p170
    %p173 = scmp.ne.s32.totalorder %s156, %s172
    %p174 = scmp.eq.s32.totalorder %s17, 0
    %p175 = por %p173, %p174
    %p176 = scmp.le.s32.totalorder 1, %s11
    %p177 = scmp.lt.s32.totalorder %s11, 3
    %p178 = pnand %p176, %p177
    %p179 = pneg %p178
    // Predicated region
    $region9: #{wx_forward.14} parent=5 // pred_check
      _
    $region10: #{wx_forward.14} parent=5 // pred_check_branch
      %181 = sbr.rel (%p178) target = $region12
    $region11: #{wx_forward.14} parent=5 // pred_region
      %s182 = ssub.s32 %s11, 1
      // Predicated region
      $region13: #{wx_forward.14} parent=11 // pred_check
        %p183 = pneg %p77
      $region14: #{wx_forward.14} parent=11 // pred_check_branch
        %185 = sbr.rel (%p183) target = $region16
      $region15: #{wx_forward.14} parent=11 // pred_region
        %p186 = scmp.lt.s32.totalorder %s21, 0
        %s187 = scalar_select %p186, %s21, 0
        %s188 = smul.addr %s187, 8
        %s189 = scalar_lea.vmem %s1, %s188
      $region16: #{wx_forward.14} parent=11 // pred_fallthru
        _
      // Predicated region
      $region17: #{wx_forward.14} parent=11 // pred_check
        %p190 = pneg %p98
      $region18: #{wx_forward.14} parent=11 // pred_check_branch
        %192 = sbr.rel (%p190) target = $region20
      $region19: #{wx_forward.14} parent=11 // pred_region
        _
      $region20: #{wx_forward.14} parent=11 // pred_fallthru
        _
      // Predicated region
      $region21: #{wx_forward.14} parent=11 // pred_check
        %p193 = pneg %p119
      $region22: #{wx_forward.14} parent=11 // pred_check_branch
        %195 = sbr.rel (%p193) target = $region24
      $region23: #{wx_forward.14} parent=11 // pred_region
        _
      $region24: #{wx_forward.14} parent=11 // pred_fallthru
        _
      // Predicated region
      $region25: #{wx_forward.14} parent=11 // pred_check
        %p196 = pneg %p140
      $region26: #{wx_forward.14} parent=11 // pred_check_branch
        %198 = sbr.rel (%p196) target = $region28
      $region27: #{wx_forward.14} parent=11 // pred_region
        _
      $region28: #{wx_forward.14} parent=11 // pred_fallthru
        _
    $region12: #{wx_forward.14} parent=5 // pred_fallthru
      _
    %p199 = scmp.lt.s32.totalorder %s11, 2
    // Predicated region
    $region29: #{wx_forward.14} parent=5 // pred_check
      %p200 = pneg %p199
    $region30: #{wx_forward.14} parent=5 // pred_check_branch
      %202 = sbr.rel (%p200) target = $region32
    $region31: #{wx_forward.14} parent=5 // pred_region
      // Predicated region
      $region33: #{wx_forward.14} parent=31 // pred_check
        %p203 = pneg %p45
      $region34: #{wx_forward.14} parent=31 // pred_check_branch
        %205 = sbr.rel (%p203) target = $region36
      $region35: #{wx_forward.14} parent=31 // pred_region
        %p206 = scmp.lt.s32.totalorder %s18, 1
        %s207 = scalar_select %p206, %s18, 1
        %p208 = scmp.lt.s32.totalorder %s19, 0
        %s209 = scalar_select %p208, %s19, 0
        %s210 = sadd.s32 %s209, %s207
        %s211 = smul.addr %s210, 8
        %s212 = scalar_lea.vmem %s0, %s211
      $region36: #{wx_forward.14} parent=31 // pred_fallthru
        _
    $region32: #{wx_forward.14} parent=5 // pred_fallthru
      _
    %p213 = scmp.le.s32.totalorder 1, %s11
    %p214 = scmp.lt.s32.totalorder %s11, 3
    %p215 = pnand %p213, %p214
    %p216 = pneg %p215
    // Predicated region
    $region37: #{wx_forward.14} parent=5 // pred_check
      _
    $region38: #{wx_forward.14} parent=5 // pred_check_branch
      %218 = sbr.rel (%p215) target = $region40
    $region39: #{wx_forward.14} parent=5 // pred_region
      %s219 = ssub.s32 %s11, 1
      %p220 = scmp.lt.s32.totalorder %s20, 1
      %s221 = scalar_select %p220, %s20, 1
      %p222 = scmp.lt.s32.totalorder %s21, 0
      %s223 = scalar_select %p222, %s21, 0
      %s224 = sadd.s32 %s223, %s221
      %s225 = smul.addr %s224, 8
      %s226 = scalar_lea.vmem %s0, %s225
      %p227 = pneg %p51
      %p228 = pneg %p48
      %p229 = scmp.lt.s32.totalorder %s21, 0
      %s230 = scalar_select %p229, %s21, 0
      %s231 = smul.addr %s230, 8
      %s232 = scalar_lea.vmem %s1, %s231
      %p233 = pneg %p77
      %p234 = pneg %p74
      %p235 = pneg %p98
      %p236 = pneg %p95
      %p237 = pneg %p119
      %p238 = pneg %p116
      %p239 = pneg %p140
      %p240 = pneg %p137
      %p241 = pneg %p168
      %p242 = pneg %p165
      %p243 = scmp.lt.s32.totalorder %s20, 1
      %s244 = scalar_select %p243, %s20, 1
      %p245 = scmp.lt.s32.totalorder %s21, 0
      %s246 = scalar_select %p245, %s21, 0
      %s247 = sadd.s32 %s246, %s244
      %s248 = smul.addr %s247, 8
      %s249 = scalar_lea.vmem %s5, %s248
      %p250 = scmp.lt.s32.totalorder %s20, 1
      %s251 = scalar_select %p250, %s20, 1
      %p252 = scmp.lt.s32.totalorder %s21, 0
      %s253 = scalar_select %p252, %s21, 0
      %s254 = sadd.s32 %s253, %s251
      %s255 = smul.addr %s254, 8
      %s256 = scalar_lea.vmem %s0, %s255
      %p257 = scmp.lt.s32.totalorder %s21, 0
      %s258 = scalar_select %p257, %s21, 0
      %s259 = smul.addr %s258, 8
      %s260 = scalar_lea.vmem %s1, %s259
      %p261 = scmp.lt.s32.totalorder %s20, 1
      %s262 = scalar_select %p261, %s20, 1
      %p263 = scmp.lt.s32.totalorder %s21, 0
      %s264 = scalar_select %p263, %s21, 0
      %s265 = sadd.s32 %s264, %s262
      %s266 = smul.addr %s265, 8
      %s267 = scalar_lea.vmem %s5, %s266
      %v268 = vld [vmem:[%s256] sm:$0xff]
      %v269 = vld [vmem:[%s260] sm:$0xff]
      %v270 = vadd.f32 %v268, %v269
      %v271 = vld [vmem:[%s2] sm:$0x1]
      %v273 = vperm.slane %v271, 0
      %v275 = vadd.f32 %v270, %v273
      %vm276 = vcmask 261120
      %v277 = vsel %vm276, %v275, 0.0
      %278 = vadd.xlane.f32.xlu0 %v277
      %v279 = vpop.xlane.xlu0 %278
      %v280 = vrcp.pop 32.0
      %v281 = vmul.f32 32.0, %v280
      %v282 = vsub.f32 1.0, %v281
      %v283 = vmul.f32 %v280, %v282
      %v284 = vadd.f32 %v280, %v283
      %vm285 = vweird.f32 %v280
      %v286 = vsel %vm285, %v280, %v284
      %v287 = vmul.f32 %v279, %v286
      %v288 = vsub.f32 %v275, %v287
      %v289 = vmul.f32 %v288, %v288
      %v290 = vsel %vm276, %v289, 0.0
      %291 = vadd.xlane.f32.xlu0 %v290
      %v292 = vpop.xlane.xlu0 %291
      %v293 = vmul.f32 %v292, %v286
      %v294 = vadd.f32 %v293, 1e-12
      %v295 = vrsqrt.pop %v294
      %v296 = vmul.f32 %v295, %v294
      %v297 = vmul.f32 %v296, %v295
      %v298 = vmul.f32 0.5, %v297
      %v299 = vsub.f32 1.5, %v298
      %v300 = vmul.f32 %v295, %v299
      %vm301 = vweird.f32 %v294
      %vm302 = vweird.f32 %v295
      %vm303 = vmor %vm301, %vm302
      %v304 = vsel %vm303, %v295, %v300
      %v305 = vmul.f32 %v288, %v304
      %v306 = vld [vmem:[%s3] sm:$0x1]
      %v308 = vperm.slane %v306, 0
      %v310 = vmul.f32 %v305, %v308
      %v311 = vld [vmem:[%s4] sm:$0x1]
      %v313 = vperm.slane %v311, 0
      %v315 = vadd.f32 %v310, %v313
      %316 = vst.msk [vmem:[%s267] sm:$0xff] %vm276, %v315
      %p317 = scmp.lt.s32.totalorder %s20, 1
      %s318 = scalar_select %p317, %s20, 1
      %p319 = scmp.lt.s32.totalorder %s21, 0
      %s320 = scalar_select %p319, %s21, 0
      %s321 = sadd.s32 %s320, %s318
      %s322 = smul.addr %s321, 8
      %s323 = scalar_lea.vmem %s5, %s322
      // Predicated region
      $region41: #{wx_forward.14} parent=39 // pred_check
        %p324 = pneg %p165
      $region42: #{wx_forward.14} parent=39 // pred_check_branch
        %326 = sbr.rel (%p324) target = $region44
      $region43: #{wx_forward.14} parent=39 // pred_region
        _
      $region44: #{wx_forward.14} parent=39 // pred_fallthru
        _
    $region40: #{wx_forward.14} parent=5 // pred_fallthru
      _
    %p327 = scmp.le.s32.totalorder 2, %s11
    // Predicated region
    $region45: #{wx_forward.14} parent=5 // pred_check
      %p328 = pneg %p327
    $region46: #{wx_forward.14} parent=5 // pred_check_branch
      %330 = sbr.rel (%p328) target = $region48
    $region47: #{wx_forward.14} parent=5 // pred_region
      %s331 = ssub.s32 %s11, 2
      // Predicated region
      $region49: #{wx_forward.14} parent=47 // pred_check
        %p332 = pneg %p171
      $region50: #{wx_forward.14} parent=47 // pred_check_branch
        %334 = sbr.rel (%p332) target = $region52
      $region51: #{wx_forward.14} parent=47 // pred_region
        %p335 = scmp.lt.s32.totalorder %s22, 1
        %s336 = scalar_select %p335, %s22, 1
        %p337 = scmp.lt.s32.totalorder %s23, 0
        %s338 = scalar_select %p337, %s23, 0
        %s339 = sadd.s32 %s338, %s336
        %s340 = smul.addr %s339, 8
        %s341 = scalar_lea.vmem %s5, %s340
      $region52: #{wx_forward.14} parent=47 // pred_fallthru
        _
    $region48: #{wx_forward.14} parent=5 // pred_fallthru
      _
  $region6: #{wx_forward.14} parent=0 // loop_footer
    %s15 = sadd.s32 1, %s11
  $region7: #{wx_forward.14} parent=0 // loop_footer_branch
    %10 = sbr.rel target = $region3
  $region8: #{wx_forward.14} parent=0 // loop_exit
    _

// kernel: wx_forward.17
$region0: #{wx_forward.17}
  #allocation0 [shape = 'u32[]', space=smem, size = 0x4, offset = 0x4, fixed_abs, tag = 'smem constant byte address 0x4 - core index']
  #allocation1 [shape = 'u32[72,128]{1,0:T(1,128)}', space=vmem, size = 0x9000, scoped, tag = 'internal scratch']
  #allocation2 [shape = 'f32[24,96]{1,0:T(8,128)}', space=vmem, size = 0x3000, scoped, tag = 'scratch operand']
  %s0 = inlined_call_operand.vmem [shape: f32[24,32], index: 0, kind: input, shape index: {}]
  %s1 = inlined_call_operand.vmem [shape: bf16[32,96], index: 1, kind: input, shape index: {}]
  %s2 = inlined_call_operand.vmem [shape: f32[1,96], index: 2, kind: input, shape index: {}]
  %s3 = inlined_call_operand.vmem [shape: bf16[24,96], index: 3, kind: output, shape index: {}]
  %s4 = sld [smem:[#allocation0]]
  $region30: #{wx_forward.17} parent=0
    _
  %s6 = ssub.s32 1, %s4
  %s7 = scalar_select 0, %s6, %s4
  // Predicated region
  $region2: #{wx_forward.17} parent=0 // pred_check
    _
  $region3: #{wx_forward.17} parent=0 // pred_check_branch
    %9 = sbr.rel (0) target = $region5
  $region4: #{wx_forward.17} parent=0 // pred_region
    _
  $region5: #{wx_forward.17} parent=0 // pred_fallthru
    _
  // Predicated region
  $region6: #{wx_forward.17} parent=0 // pred_check
    _
  $region7: #{wx_forward.17} parent=0 // pred_check_branch
    %11 = sbr.rel (0) target = $region9
  $region8: #{wx_forward.17} parent=0 // pred_region
    _
  $region9: #{wx_forward.17} parent=0 // pred_fallthru
    _
  // Predicated region
  $region10: #{wx_forward.17} parent=0 // pred_check
    _
  $region11: #{wx_forward.17} parent=0 // pred_check_branch
    %13 = sbr.rel (0) target = $region13
  $region12: #{wx_forward.17} parent=0 // pred_region
    _
  $region13: #{wx_forward.17} parent=0 // pred_fallthru
    _
  %p15 = scmp.eq.s32.totalorder 0, 0
  // Predicated region
  $region14: #{wx_forward.17} parent=0 // pred_check
    %p16 = pneg %p15
  $region15: #{wx_forward.17} parent=0 // pred_check_branch
    %18 = sbr.rel (%p16) target = $region17
  $region16: #{wx_forward.17} parent=0 // pred_region
    %vm19 = vcmask 785408
    %20 = vst.msk [vmem:[#allocation2] sm:$0xff] %vm19, 0.0
    %21 = vst.msk [vmem:[#allocation2 + $0x8] sm:$0xff] %vm19, 0.0
    %22 = vst.msk [vmem:[#allocation2 + $0x10] sm:$0xff] %vm19, 0.0
  $region17: #{wx_forward.17} parent=0 // pred_fallthru
    _
  %v23 = vld [vmem:[#allocation2] sm:$0xff]
  %v24 = vld [vmem:[#allocation2 + $0x8] sm:$0xff]
  %v25 = vld [vmem:[#allocation2 + $0x10] sm:$0xff]
  %v26 = vld [vmem:[%s0] sm:$0xff]
  %v27 = vld [vmem:[%s0 + $0x8] sm:$0xff]
  %v28 = vld [vmem:[%s0 + $0x10] sm:$0xff]
  %v29 = vpack.c.bf16 %v27, %v26
  %v30 = vpack.c.bf16 %v28, %v28
  %v31 = vld [vmem:[%s1] sm:$0xf]
  %v32 = vld [vmem:[%s1 + $0x4] sm:$0xf]
  %v33 = vld [vmem:[%s1 + $0x8] sm:$0xf]
  %v34 = vld [vmem:[%s1 + $0xc] sm:$0xf]
  %v39 = vunpack.c.l.b16 %v31
  %v40 = vunpack.c.l.b16 %v32
  %v41 = vunpack.c.l.b16 %v33
  %v42 = vunpack.c.l.b16 %v34
  %v43 = vpack.c.b16 %v40, %v39
  %v44 = vpack.c.b16 %v42, %v41
  %vm47 = vcmask 261120
  %v49 = vsel %vm47, %v29, 0
  %v52 = vsel %vm47, %v30, 0
  %54 = vmatpush.bf16.msra.mxu0 0
  %55 = vmatpush.bf16.msra.mxu0 0
  %56 = vmatpush.bf16.msra.mxu0 0
  %57 = vmatpush.bf16.msra.mxu0 0
  %58 = vmatpush.bf16.msra.mxu0 0
  %59 = vmatpush.bf16.msra.mxu0 0
  %60 = vmatpush.bf16.msra.mxu0 %v44
  %61 = vmatpush.bf16.msra.mxu0 %v43
  %62 = vmatmul.bf16.gmra.mxu0 %v49
  %v63 = vpop.f32.mrf.mxu0
  %v64 = vadd.f32 0.0, %v63
  %v65 = vpop.f32.mrf.mxu0
  %v66 = vadd.f32 0.0, %v65
  %67 = vmatmul.bf16.gmra.mxu0 %v52
  %v68 = vpop.f32.mrf.mxu0
  %v69 = vadd.f32 0.0, %v68
  %v70 = vpop.f32.mrf.mxu0
  %71 = vdwg.mxu0
  %v72 = vadd.f32 %v23, %v64
  %v73 = vadd.f32 %v24, %v66
  %v74 = vadd.f32 %v25, %v69
  %vm75 = vcmask 785408
  %76 = vst.msk [vmem:[#allocation2] sm:$0xff] %vm75, %v72
  %77 = vst.msk [vmem:[#allocation2 + $0x8] sm:$0xff] %vm75, %v73
  %78 = vst.msk [vmem:[#allocation2 + $0x10] sm:$0xff] %vm75, %v74
  // Predicated region
  $region18: #{wx_forward.17} parent=0 // pred_check
    %p79 = pneg %p15
  $region19: #{wx_forward.17} parent=0 // pred_check_branch
    %81 = sbr.rel (%p79) target = $region21
  $region20: #{wx_forward.17} parent=0 // pred_region
    %v82 = vld [vmem:[#allocation2] sm:$0xff]
    %v83 = vld [vmem:[#allocation2 + $0x8] sm:$0xff]
    %v84 = vld [vmem:[#allocation2 + $0x10] sm:$0xff]
    %v85 = vld [vmem:[%s2] sm:$0x1]
    %v87 = vperm.slane %v85, 0
    %v89 = vadd.f32 %v82, %v87
    %v90 = vadd.f32 %v83, %v87
    %v91 = vadd.f32 %v84, %v87
    %v92 = vpack.c.bf16 %v89, %v89
    %v93 = vpack.c.bf16 %v90, %v90
    %v94 = vpack.c.bf16 %v91, %v91
    %vm95 = vcmask 781312
    %96 = vst.msk [vmem:[%s3] sm:$0xf] %vm95, %v92
    %97 = vst.msk [vmem:[%s3 + $0x4] sm:$0xf] %vm95, %v93
    %98 = vst.msk [vmem:[%s3 + $0x8] sm:$0xf] %vm95, %v94
  $region21: #{wx_forward.17} parent=0 // pred_fallthru
    _
  // Predicated region
  $region22: #{wx_forward.17} parent=0 // pred_check
    _
  $region23: #{wx_forward.17} parent=0 // pred_check_branch
    %100 = sbr.rel (0) target = $region25
  $region24: #{wx_forward.17} parent=0 // pred_region
    _
  $region25: #{wx_forward.17} parent=0 // pred_fallthru
    _
  // Predicated region
  $region26: #{wx_forward.17} parent=0 // pred_check
    _
  $region27: #{wx_forward.17} parent=0 // pred_check_branch
    %102 = sbr.rel (0) target = $region29
  $region28: #{wx_forward.17} parent=0 // pred_region
    _
  $region29: #{wx_forward.17} parent=0 // pred_fallthru
    _

// kernel: wx_forward.19
$region0: #{wx_forward.19}
  #allocation0 [shape = 'u32[]', space=smem, size = 0x4, offset = 0x4, fixed_abs, tag = 'smem constant byte address 0x4 - core index']
  #allocation1 [shape = 'u32[72,128]{1,0:T(1,128)}', space=vmem, size = 0x9000, scoped, tag = 'internal scratch']
  #allocation2 [shape = 'f32[24,32]{1,0:T(8,128)}', space=vmem, size = 0x3000, scoped, tag = 'scratch operand']
  %s0 = inlined_call_operand.vmem [shape: bf16[24,32], index: 0, kind: input, shape index: {}]
  %s1 = inlined_call_operand.vmem [shape: bf16[32,32], index: 1, kind: input, shape index: {}]
  %s2 = inlined_call_operand.vmem [shape: f32[1,32], index: 2, kind: input, shape index: {}, may-alias: {2,5}]
  %s3 = inlined_call_operand.vmem [shape: f32[24,32], index: 3, kind: input, shape index: {}]
  %s4 = inlined_call_operand.vmem [shape: f32[1,32], index: 4, kind: input, shape index: {}]
  %s5 = inlined_call_operand.vmem [shape: f32[1,32], index: 5, kind: input, shape index: {}, may-alias: {2,5}]
  %s6 = inlined_call_operand.vmem [shape: f32[24,32], index: 6, kind: output, shape index: {}]
  %s7 = sld [smem:[#allocation0]]
  $region42: #{wx_forward.19} parent=0
    _
  %s9 = ssub.s32 1, %s7
  %s10 = scalar_select 0, %s9, %s7
  // Predicated region
  $region2: #{wx_forward.19} parent=0 // pred_check
    _
  $region3: #{wx_forward.19} parent=0 // pred_check_branch
    %12 = sbr.rel (0) target = $region5
  $region4: #{wx_forward.19} parent=0 // pred_region
    _
  $region5: #{wx_forward.19} parent=0 // pred_fallthru
    _
  // Predicated region
  $region6: #{wx_forward.19} parent=0 // pred_check
    _
  $region7: #{wx_forward.19} parent=0 // pred_check_branch
    %14 = sbr.rel (0) target = $region9
  $region8: #{wx_forward.19} parent=0 // pred_region
    _
  $region9: #{wx_forward.19} parent=0 // pred_fallthru
    _
  // Predicated region
  $region10: #{wx_forward.19} parent=0 // pred_check
    _
  $region11: #{wx_forward.19} parent=0 // pred_check_branch
    %16 = sbr.rel (0) target = $region13
  $region12: #{wx_forward.19} parent=0 // pred_region
    _
  $region13: #{wx_forward.19} parent=0 // pred_fallthru
    _
  // Predicated region
  $region14: #{wx_forward.19} parent=0 // pred_check
    _
  $region15: #{wx_forward.19} parent=0 // pred_check_branch
    %18 = sbr.rel (0) target = $region17
  $region16: #{wx_forward.19} parent=0 // pred_region
    _
  $region17: #{wx_forward.19} parent=0 // pred_fallthru
    _
  // Predicated region
  $region18: #{wx_forward.19} parent=0 // pred_check
    _
  $region19: #{wx_forward.19} parent=0 // pred_check_branch
    %20 = sbr.rel (0) target = $region21
  $region20: #{wx_forward.19} parent=0 // pred_region
    _
  $region21: #{wx_forward.19} parent=0 // pred_fallthru
    _
  // Predicated region
  $region22: #{wx_forward.19} parent=0 // pred_check
    _
  $region23: #{wx_forward.19} parent=0 // pred_check_branch
    %22 = sbr.rel (0) target = $region25
  $region24: #{wx_forward.19} parent=0 // pred_region
    _
  $region25: #{wx_forward.19} parent=0 // pred_fallthru
    _
  %p24 = scmp.eq.s32.totalorder 0, 0
  // Predicated region
  $region26: #{wx_forward.19} parent=0 // pred_check
    %p25 = pneg %p24
  $region27: #{wx_forward.19} parent=0 // pred_check_branch
    %27 = sbr.rel (%p25) target = $region29
  $region28: #{wx_forward.19} parent=0 // pred_region
    %vm28 = vcmask 261120
    %29 = vst.msk [vmem:[#allocation2] sm:$0xff] %vm28, 0.0
    %30 = vst.msk [vmem:[#allocation2 + $0x8] sm:$0xff] %vm28, 0.0
    %31 = vst.msk [vmem:[#allocation2 + $0x10] sm:$0xff] %vm28, 0.0
  $region29: #{wx_forward.19} parent=0 // pred_fallthru
    _
  %v32 = vld [vmem:[#allocation2] sm:$0xff]
  %v33 = vld [vmem:[#allocation2 + $0x8] sm:$0xff]
  %v34 = vld [vmem:[#allocation2 + $0x10] sm:$0xff]
  %v35 = vld [vmem:[%s0] sm:$0xf]
  %v36 = vld [vmem:[%s0 + $0x4] sm:$0xf]
  %v37 = vld [vmem:[%s0 + $0x8] sm:$0xf]
  %v38 = vld [vmem:[%s1] sm:$0xf]
  %v39 = vld [vmem:[%s1 + $0x4] sm:$0xf]
  %v40 = vld [vmem:[%s1 + $0x8] sm:$0xf]
  %v41 = vld [vmem:[%s1 + $0xc] sm:$0xf]
  %v45 = vunpack.c.l.b16 %v35
  %v46 = vunpack.c.l.b16 %v36
  %v47 = vunpack.c.l.b16 %v37
  %v48 = vpack.c.b16 %v46, %v45
  %v49 = vpack.c.b16 %v47, %v47
  %v54 = vunpack.c.l.b16 %v38
  %v55 = vunpack.c.l.b16 %v39
  %v56 = vunpack.c.l.b16 %v40
  %v57 = vunpack.c.l.b16 %v41
  %v58 = vpack.c.b16 %v55, %v54
  %v59 = vpack.c.b16 %v57, %v56
  %vm62 = vcmask 261120
  %v64 = vsel %vm62, %v48, 0
  %v67 = vsel %vm62, %v49, 0
  %69 = vmatpush.bf16.msra.mxu0 0
  %70 = vmatpush.bf16.msra.mxu0 0
  %71 = vmatpush.bf16.msra.mxu0 0
  %72 = vmatpush.bf16.msra.mxu0 0
  %73 = vmatpush.bf16.msra.mxu0 0
  %74 = vmatpush.bf16.msra.mxu0 0
  %75 = vmatpush.bf16.msra.mxu0 %v59
  %76 = vmatpush.bf16.msra.mxu0 %v58
  %77 = vmatmul.bf16.gmra.mxu0 %v64
  %v78 = vpop.f32.mrf.mxu0
  %v79 = vadd.f32 0.0, %v78
  %v80 = vpop.f32.mrf.mxu0
  %v81 = vadd.f32 0.0, %v80
  %82 = vmatmul.bf16.gmra.mxu0 %v67
  %v83 = vpop.f32.mrf.mxu0
  %v84 = vadd.f32 0.0, %v83
  %v85 = vpop.f32.mrf.mxu0
  %86 = vdwg.mxu0
  %v87 = vadd.f32 %v32, %v79
  %v88 = vadd.f32 %v33, %v81
  %v89 = vadd.f32 %v34, %v84
  %90 = vst.msk [vmem:[#allocation2] sm:$0xff] %vm62, %v87
  %91 = vst.msk [vmem:[#allocation2 + $0x8] sm:$0xff] %vm62, %v88
  %92 = vst.msk [vmem:[#allocation2 + $0x10] sm:$0xff] %vm62, %v89
  // Predicated region
  $region30: #{wx_forward.19} parent=0 // pred_check
    %p93 = pneg %p24
  $region31: #{wx_forward.19} parent=0 // pred_check_branch
    %95 = sbr.rel (%p93) target = $region33
  $region32: #{wx_forward.19} parent=0 // pred_region
    %v96 = vld [vmem:[#allocation2] sm:$0xff]
    %v97 = vld [vmem:[#allocation2 + $0x8] sm:$0xff]
    %v98 = vld [vmem:[#allocation2 + $0x10] sm:$0xff]
    %v99 = vld [vmem:[%s2] sm:$0x1]
    %v101 = vperm.slane %v99, 0
    %v103 = vadd.f32 %v96, %v101
    %v104 = vadd.f32 %v97, %v101
    %v105 = vadd.f32 %v98, %v101
    %v106 = vld [vmem:[%s3] sm:$0xff]
    %v107 = vld [vmem:[%s3 + $0x8] sm:$0xff]
    %v108 = vld [vmem:[%s3 + $0x10] sm:$0xff]
    %v109 = vadd.f32 %v103, %v106
    %v110 = vadd.f32 %v104, %v107
    %v111 = vadd.f32 %v105, %v108
    %v112 = vsel %vm62, %v109, 0.0
    %113 = vadd.xlane.f32.xlu0 %v112
    %v114 = vpop.xlane.xlu0 %113
    %v115 = vsel %vm62, %v110, 0.0
    %116 = vadd.xlane.f32.xlu0 %v115
    %v117 = vpop.xlane.xlu0 %116
    %v118 = vsel %vm62, %v111, 0.0
    %119 = vadd.xlane.f32.xlu0 %v118
    %v120 = vpop.xlane.xlu0 %119
    %v121 = vrcp.pop 32.0
    %v122 = vmul.f32 32.0, %v121
    %v123 = vsub.f32 1.0, %v122
    %v124 = vmul.f32 %v121, %v123
    %v125 = vadd.f32 %v121, %v124
    %vm126 = vweird.f32 %v121
    %v127 = vsel %vm126, %v121, %v125
    %v128 = vmul.f32 %v114, %v127
    %v129 = vmul.f32 %v117, %v127
    %v130 = vmul.f32 %v120, %v127
    %v131 = vsub.f32 %v109, %v128
    %v132 = vsub.f32 %v110, %v129
    %v133 = vsub.f32 %v111, %v130
    %v134 = vmul.f32 %v131, %v131
    %v135 = vmul.f32 %v132, %v132
    %v136 = vmul.f32 %v133, %v133
    %v137 = vsel %vm62, %v134, 0.0
    %138 = vadd.xlane.f32.xlu0 %v137
    %v139 = vpop.xlane.xlu0 %138
    %v140 = vsel %vm62, %v135, 0.0
    %141 = vadd.xlane.f32.xlu0 %v140
    %v142 = vpop.xlane.xlu0 %141
    %v143 = vsel %vm62, %v136, 0.0
    %144 = vadd.xlane.f32.xlu0 %v143
    %v145 = vpop.xlane.xlu0 %144
    %v146 = vmul.f32 %v139, %v127
    %v147 = vmul.f32 %v142, %v127
    %v148 = vmul.f32 %v145, %v127
    %v149 = vadd.f32 %v146, 1e-12
    %v150 = vadd.f32 %v147, 1e-12
    %v151 = vadd.f32 %v148, 1e-12
    %v152 = vrsqrt.pop %v149
    %v153 = vmul.f32 %v152, %v149
    %v154 = vmul.f32 %v153, %v152
    %v155 = vmul.f32 0.5, %v154
    %v156 = vsub.f32 1.5, %v155
    %v157 = vmul.f32 %v152, %v156
    %vm158 = vweird.f32 %v149
    %vm159 = vweird.f32 %v152
    %vm160 = vmor %vm158, %vm159
    %v161 = vsel %vm160, %v152, %v157
    %v162 = vrsqrt.pop %v150
    %v163 = vmul.f32 %v162, %v150
    %v164 = vmul.f32 %v163, %v162
    %v165 = vmul.f32 0.5, %v164
    %v166 = vsub.f32 1.5, %v165
    %v167 = vmul.f32 %v162, %v166
    %vm168 = vweird.f32 %v150
    %vm169 = vweird.f32 %v162
    %vm170 = vmor %vm168, %vm169
    %v171 = vsel %vm170, %v162, %v167
    %v172 = vrsqrt.pop %v151
    %v173 = vmul.f32 %v172, %v151
    %v174 = vmul.f32 %v173, %v172
    %v175 = vmul.f32 0.5, %v174
    %v176 = vsub.f32 1.5, %v175
    %v177 = vmul.f32 %v172, %v176
    %vm178 = vweird.f32 %v151
    %vm179 = vweird.f32 %v172
    %vm180 = vmor %vm178, %vm179
    %v181 = vsel %vm180, %v172, %v177
    %v182 = vmul.f32 %v131, %v161
    %v183 = vmul.f32 %v132, %v171
    %v184 = vmul.f32 %v133, %v181
    %v185 = vld [vmem:[%s4] sm:$0x1]
    %v187 = vperm.slane %v185, 0
    %v189 = vmul.f32 %v182, %v187
    %v190 = vmul.f32 %v183, %v187
    %v191 = vmul.f32 %v184, %v187
    %v192 = vld [vmem:[%s5] sm:$0x1]
    %v194 = vperm.slane %v192, 0
    %v196 = vadd.f32 %v189, %v194
    %v197 = vadd.f32 %v190, %v194
    %v198 = vadd.f32 %v191, %v194
    %199 = vst.msk [vmem:[%s6] sm:$0xff] %vm62, %v196
    %200 = vst.msk [vmem:[%s6 + $0x8] sm:$0xff] %vm62, %v197
    %201 = vst.msk [vmem:[%s6 + $0x10] sm:$0xff] %vm62, %v198
  $region33: #{wx_forward.19} parent=0 // pred_fallthru
    _
  // Predicated region
  $region34: #{wx_forward.19} parent=0 // pred_check
    _
  $region35: #{wx_forward.19} parent=0 // pred_check_branch
    %203 = sbr.rel (0) target = $region37
  $region36: #{wx_forward.19} parent=0 // pred_region
    _
  $region37: #{wx_forward.19} parent=0 // pred_fallthru
    _
  // Predicated region
  $region38: #{wx_forward.19} parent=0 // pred_check
    _
  $region39: #{wx_forward.19} parent=0 // pred_check_branch
    %205 = sbr.rel (0) target = $region41
  $region40: #{wx_forward.19} parent=0 // pred_region
    _
  $region41: #{wx_forward.19} parent=0 // pred_fallthru
    _

// kernel: wx_forward.18
$region0: #{wx_forward.18}
  #allocation0 [shape = 'u32[]', space=smem, size = 0x4, offset = 0x4, fixed_abs, tag = 'smem constant byte address 0x4 - core index']
  #allocation1 [shape = 'u32[72,128]{1,0:T(1,128)}', space=vmem, size = 0x9000, scoped, tag = 'internal scratch']
  %s0 = inlined_call_operand.vmem [shape: bf16[3,2,4,12,8], index: 0, kind: input, shape index: {}, may-alias: {0,1,2}]
  %s1 = inlined_call_operand.vmem [shape: bf16[3,2,4,12,8], index: 1, kind: input, shape index: {}, may-alias: {0,1,2}]
  %s2 = inlined_call_operand.vmem [shape: bf16[3,2,4,12,8], index: 2, kind: input, shape index: {}, may-alias: {0,1,2}]
  %s3 = inlined_call_operand.vmem [shape: f32[2,1,12], index: 3, kind: input, shape index: {}]
  %s4 = inlined_call_operand.vmem [shape: bf16[2,4,12,8], index: 4, kind: output, shape index: {}]
  %s5 = sld [smem:[#allocation0]]
  $region49: #{wx_forward.18} parent=0
    _
  %s7 = ssub.s32 1, %s5
  %s8 = scalar_select 0, %s7, %s5
  loop: start=0, step=1, limit=10
  $region2: #{wx_forward.18} parent=0 // loop_pre_header
    _
  $region3: #{wx_forward.18} parent=0 // loop_header
    %s10 = sphi 0, %s14
    %p11 = scmp.ge.s32.totalorder %s10, 10
    %s17 = sphi 0, %s29
    %s18 = sphi 0, %s25
    %s19 = sphi 0, %s17
    %s20 = sphi 0, %s18
    %s21 = sphi 0, %s19
    %s22 = sphi 0, %s20
    %s34 = sphi 0, %s36
    %s37 = sphi 0, %s34
    %s38 = sphi 0, %s37
    %s54 = sphi 0, %s38
    %s62 = sphi 0, %s64
    %s65 = sphi 0, %s62
    %s66 = sphi 0, %s65
    %s82 = sphi 0, %s66
    %s90 = sphi 0, %s92
    %s93 = sphi 0, %s90
    %s94 = sphi 0, %s93
    %s110 = sphi 0, %s94
    %s116 = sphi 0, %s118
    %s119 = sphi 0, %s116
    %s120 = sphi 0, %s119
    %s136 = sphi 0, %s120
    %s144 = sphi 0, %s146
    %s147 = sphi 0, %s144
    %s148 = sphi 0, %s147
    %s164 = sphi 0, %s148
  $region4: #{wx_forward.18} parent=0 // loop_header_branch
    %13 = sbr.rel (%p11) target = $region8
  $region5: #{wx_forward.18} parent=0 // loop_body
    %s15 = ssub.s32 %s10, 1
    %s16 = ssub.s32 %s10, 2
    %s23 = sadd.s32 1, %s18
    %p24 = scmp.ge.s32.totalorder %s23, 4
    %s25 = scalar_select %p24, 0, %s23
    %s26 = sadd.s32 1, %s17
    %s27 = scalar_select %p24, %s26, %s17
    %p28 = scmp.ge.s32.totalorder %s27, 2
    %s29 = scalar_select %p28, 0, %s27
    %s30 = ssub.s32 %s17, %s29
    %s31 = ssub.s32 %s18, %s25
    %s32 = sor.u32 %s30, %s31
    %p33 = scmp.eq.s32.totalorder %s32, 0
    %s35 = sadd.s32 %s34, 1
    %s36 = scalar_select %p33, %s34, %s35
    %p39 = pneg %p33
    %p40 = scmp.eq.s32.totalorder %s10, 7
    %p41 = por %p39, %p40
    %p42 = scmp.ne.s32.totalorder %s34, %s37
    %p43 = scmp.eq.s32.totalorder %s10, 0
    %p44 = por %p42, %p43
    %p45 = scmp.ne.s32.totalorder %s34, %s37
    %p46 = scmp.eq.s32.totalorder %s15, 7
    %p47 = por %p45, %p46
    %p48 = scmp.ne.s32.totalorder %s37, %s38
    %p49 = scmp.eq.s32.totalorder %s15, 0
    %p50 = por %p48, %p49
    %p51 = scmp.ne.s32.totalorder %s37, %s38
    %p52 = scmp.eq.s32.totalorder %s16, 7
    %p53 = por %p51, %p52
    %p55 = scmp.ne.s32.totalorder %s38, %s54
    %p56 = scmp.eq.s32.totalorder %s16, 0
    %p57 = por %p55, %p56
    %s58 = ssub.s32 %s17, %s29
    %s59 = ssub.s32 %s18, %s25
    %s60 = sor.u32 %s58, %s59
    %p61 = scmp.eq.s32.totalorder %s60, 0
    %s63 = sadd.s32 %s62, 1
    %s64 = scalar_select %p61, %s62, %s63
    %p67 = pneg %p61
    %p68 = scmp.eq.s32.totalorder %s10, 7
    %p69 = por %p67, %p68
    %p70 = scmp.ne.s32.totalorder %s62, %s65
    %p71 = scmp.eq.s32.totalorder %s10, 0
    %p72 = por %p70, %p71
    %p73 = scmp.ne.s32.totalorder %s62, %s65
    %p74 = scmp.eq.s32.totalorder %s15, 7
    %p75 = por %p73, %p74
    %p76 = scmp.ne.s32.totalorder %s65, %s66
    %p77 = scmp.eq.s32.totalorder %s15, 0
    %p78 = por %p76, %p77
    %p79 = scmp.ne.s32.totalorder %s65, %s66
    %p80 = scmp.eq.s32.totalorder %s16, 7
    %p81 = por %p79, %p80
    %p83 = scmp.ne.s32.totalorder %s66, %s82
    %p84 = scmp.eq.s32.totalorder %s16, 0
    %p85 = por %p83, %p84
    %s86 = ssub.s32 %s17, %s29
    %s87 = ssub.s32 %s18, %s25
    %s88 = sor.u32 %s86, %s87
    %p89 = scmp.eq.s32.totalorder %s88, 0
    %s91 = sadd.s32 %s90, 1
    %s92 = scalar_select %p89, %s90, %s91
    %p95 = pneg %p89
    %p96 = scmp.eq.s32.totalorder %s10, 7
    %p97 = por %p95, %p96
    %p98 = scmp.ne.s32.totalorder %s90, %s93
    %p99 = scmp.eq.s32.totalorder %s10, 0
    %p100 = por %p98, %p99
    %p101 = scmp.ne.s32.totalorder %s90, %s93
    %p102 = scmp.eq.s32.totalorder %s15, 7
    %p103 = por %p101, %p102
    %p104 = scmp.ne.s32.totalorder %s93, %s94
    %p105 = scmp.eq.s32.totalorder %s15, 0
    %p106 = por %p104, %p105
    %p107 = scmp.ne.s32.totalorder %s93, %s94
    %p108 = scmp.eq.s32.totalorder %s16, 7
    %p109 = por %p107, %p108
    %p111 = scmp.ne.s32.totalorder %s94, %s110
    %p112 = scmp.eq.s32.totalorder %s16, 0
    %p113 = por %p111, %p112
    %s114 = ssub.s32 %s17, %s29
    %p115 = scmp.eq.s32.totalorder %s114, 0
    %s117 = sadd.s32 %s116, 1
    %s118 = scalar_select %p115, %s116, %s117
    %p121 = pneg %p115
    %p122 = scmp.eq.s32.totalorder %s10, 7
    %p123 = por %p121, %p122
    %p124 = scmp.ne.s32.totalorder %s116, %s119
    %p125 = scmp.eq.s32.totalorder %s10, 0
    %p126 = por %p124, %p125
    %p127 = scmp.ne.s32.totalorder %s116, %s119
    %p128 = scmp.eq.s32.totalorder %s15, 7
    %p129 = por %p127, %p128
    %p130 = scmp.ne.s32.totalorder %s119, %s120
    %p131 = scmp.eq.s32.totalorder %s15, 0
    %p132 = por %p130, %p131
    %p133 = scmp.ne.s32.totalorder %s119, %s120
    %p134 = scmp.eq.s32.totalorder %s16, 7
    %p135 = por %p133, %p134
    %p137 = scmp.ne.s32.totalorder %s120, %s136
    %p138 = scmp.eq.s32.totalorder %s16, 0
    %p139 = por %p137, %p138
    %s140 = ssub.s32 %s17, %s29
    %s141 = ssub.s32 %s18, %s25
    %s142 = sor.u32 %s140, %s141
    %p143 = scmp.eq.s32.totalorder %s142, 0
    %s145 = sadd.s32 %s144, 1
    %s146 = scalar_select %p143, %s144, %s145
    %p149 = pneg %p143
    %p150 = scmp.eq.s32.totalorder %s10, 7
    %p151 = por %p149, %p150
    %p152 = scmp.ne.s32.totalorder %s144, %s147
    %p153 = scmp.eq.s32.totalorder %s10, 0
    %p154 = por %p152, %p153
    %p155 = scmp.ne.s32.totalorder %s144, %s147
    %p156 = scmp.eq.s32.totalorder %s15, 7
    %p157 = por %p155, %p156
    %p158 = scmp.ne.s32.totalorder %s147, %s148
    %p159 = scmp.eq.s32.totalorder %s15, 0
    %p160 = por %p158, %p159
    %p161 = scmp.ne.s32.totalorder %s147, %s148
    %p162 = scmp.eq.s32.totalorder %s16, 7
    %p163 = por %p161, %p162
    %p165 = scmp.ne.s32.totalorder %s148, %s164
    %p166 = scmp.eq.s32.totalorder %s16, 0
    %p167 = por %p165, %p166
    %p168 = scmp.le.s32.totalorder 1, %s10
    %p169 = scmp.lt.s32.totalorder %s10, 9
    %p170 = pnand %p168, %p169
    %p171 = pneg %p170
    // Predicated region
    $region9: #{wx_forward.18} parent=5 // pred_check
      _
    $region10: #{wx_forward.18} parent=5 // pred_check_branch
      %173 = sbr.rel (%p170) target = $region12
    $region11: #{wx_forward.18} parent=5 // pred_region
      %s174 = ssub.s32 %s10, 1
    $region12: #{wx_forward.18} parent=5 // pred_fallthru
      _
    %p175 = scmp.lt.s32.totalorder %s10, 8
    // Predicated region
    $region13: #{wx_forward.18} parent=5 // pred_check
      %p176 = pneg %p175
    $region14: #{wx_forward.18} parent=5 // pred_check_branch
      %178 = sbr.rel (%p176) target = $region16
    $region15: #{wx_forward.18} parent=5 // pred_region
      // Predicated region
      $region17: #{wx_forward.18} parent=15 // pred_check
        %p179 = pneg %p44
      $region18: #{wx_forward.18} parent=15 // pred_check_branch
        %181 = sbr.rel (%p179) target = $region20
      $region19: #{wx_forward.18} parent=15 // pred_region
        %p182 = scmp.lt.s32.totalorder %s17, 1
        %s183 = scalar_select %p182, %s17, 1
        %p184 = scmp.lt.s32.totalorder %s18, 3
        %s185 = scalar_select %p184, %s18, 3
        %s186 = smul.addr %s185, 2
        %s187 = smul.addr %s183, 8
        %s188 = sadd.s32 %s186, %s187
        %s189 = smul.addr %s188, 4
        %s190 = scalar_lea.vmem %s0, %s189
      $region20: #{wx_forward.18} parent=15 // pred_fallthru
        _
      // Predicated region
      $region21: #{wx_forward.18} parent=15 // pred_check
        %p191 = pneg %p72
      $region22: #{wx_forward.18} parent=15 // pred_check_branch
        %193 = sbr.rel (%p191) target = $region24
      $region23: #{wx_forward.18} parent=15 // pred_region
        %p194 = scmp.lt.s32.totalorder %s17, 1
        %s195 = scalar_select %p194, %s17, 1
        %p196 = scmp.lt.s32.totalorder %s18, 3
        %s197 = scalar_select %p196, %s18, 3
        %s198 = smul.addr %s197, 2
        %s199 = smul.addr %s195, 8
        %s200 = sadd.s32 %s198, %s199
        %s201 = sadd.s32 %s200, 16
        %s202 = smul.addr %s201, 4
        %s203 = scalar_lea.vmem %s1, %s202
      $region24: #{wx_forward.18} parent=15 // pred_fallthru
        _
      // Predicated region
      $region25: #{wx_forward.18} parent=15 // pred_check
        %p204 = pneg %p100
      $region26: #{wx_forward.18} parent=15 // pred_check_branch
        %206 = sbr.rel (%p204) target = $region28
      $region27: #{wx_forward.18} parent=15 // pred_region
        %p207 = scmp.lt.s32.totalorder %s17, 1
        %s208 = scalar_select %p207, %s17, 1
        %p209 = scmp.lt.s32.totalorder %s18, 3
        %s210 = scalar_select %p209, %s18, 3
        %s211 = smul.addr %s210, 2
        %s212 = smul.addr %s208, 8
        %s213 = sadd.s32 %s211, %s212
        %s214 = sadd.s32 %s213, 32
        %s215 = smul.addr %s214, 4
        %s216 = scalar_lea.vmem %s2, %s215
      $region28: #{wx_forward.18} parent=15 // pred_fallthru
        _
      // Predicated region
      $region29: #{wx_forward.18} parent=15 // pred_check
        %p217 = pneg %p126
      $region30: #{wx_forward.18} parent=15 // pred_check_branch
        %219 = sbr.rel (%p217) target = $region32
      $region31: #{wx_forward.18} parent=15 // pred_region
        %p220 = scmp.lt.s32.totalorder %s17, 1
        %s221 = scalar_select %p220, %s17, 1
        %s222 = scalar_lea.vmem %s3, %s221
      $region32: #{wx_forward.18} parent=15 // pred_fallthru
        _
    $region16: #{wx_forward.18} parent=5 // pred_fallthru
      _
    %p223 = scmp.le.s32.totalorder 1, %s10
    %p224 = scmp.lt.s32.totalorder %s10, 9
    %p225 = pnand %p223, %p224
    %p226 = pneg %p225
    // Predicated region
    $region33: #{wx_forward.18} parent=5 // pred_check
      _
    $region34: #{wx_forward.18} parent=5 // pred_check_branch
      %228 = sbr.rel (%p225) target = $region36
    $region35: #{wx_forward.18} parent=5 // pred_region
      %s229 = ssub.s32 %s10, 1
      %p230 = scmp.lt.s32.totalorder %s19, 1
      %s231 = scalar_select %p230, %s19, 1
      %p232 = scmp.lt.s32.totalorder %s20, 3
      %s233 = scalar_select %p232, %s20, 3
      %s234 = smul.addr %s233, 2
      %s235 = smul.addr %s231, 8
      %s236 = sadd.s32 %s234, %s235
      %s237 = smul.addr %s236, 4
      %s238 = scalar_lea.vmem %s0, %s237
      %p239 = pneg %p50
      %p240 = pneg %p47
      %p241 = scmp.lt.s32.totalorder %s19, 1
      %s242 = scalar_select %p241, %s19, 1
      %p243 = scmp.lt.s32.totalorder %s20, 3
      %s244 = scalar_select %p243, %s20, 3
      %s245 = smul.addr %s244, 2
      %s246 = smul.addr %s242, 8
      %s247 = sadd.s32 %s245, %s246
      %s248 = sadd.s32 %s247, 16
      %s249 = smul.addr %s248, 4
      %s250 = scalar_lea.vmem %s1, %s249
      %p251 = pneg %p78
      %p252 = pneg %p75
      %p253 = scmp.lt.s32.totalorder %s19, 1
      %s254 = scalar_select %p253, %s19, 1
      %p255 = scmp.lt.s32.totalorder %s20, 3
      %s256 = scalar_select %p255, %s20, 3
      %s257 = smul.addr %s256, 2
      %s258 = smul.addr %s254, 8
      %s259 = sadd.s32 %s257, %s258
      %s260 = sadd.s32 %s259, 32
      %s261 = smul.addr %s260, 4
      %s262 = scalar_lea.vmem %s2, %s261
      %p263 = pneg %p106
      %p264 = pneg %p103
      %p265 = scmp.lt.s32.totalorder %s19, 1
      %s266 = scalar_select %p265, %s19, 1
      %s267 = scalar_lea.vmem %s3, %s266
      %p268 = pneg %p132
      %p269 = pneg %p129
      %p270 = pneg %p160
      %p271 = pneg %p157
      %p272 = scmp.lt.s32.totalorder %s19, 1
      %s273 = scalar_select %p272, %s19, 1
      %p274 = scmp.lt.s32.totalorder %s20, 3
      %s275 = scalar_select %p274, %s20, 3
      %s276 = smul.addr %s275, 2
      %s277 = smul.addr %s273, 8
      %s278 = sadd.s32 %s276, %s277
      %s279 = smul.addr %s278, 4
      %s280 = scalar_lea.vmem %s4, %s279
      %p281 = scmp.lt.s32.totalorder %s19, 1
      %s282 = scalar_select %p281, %s19, 1
      %p283 = scmp.lt.s32.totalorder %s20, 3
      %s284 = scalar_select %p283, %s20, 3
      %s285 = smul.addr %s284, 2
      %s286 = smul.addr %s282, 8
      %s287 = sadd.s32 %s285, %s286
      %s288 = smul.addr %s287, 4
      %s289 = scalar_lea.vmem %s0, %s288
      %p290 = scmp.lt.s32.totalorder %s19, 1
      %s291 = scalar_select %p290, %s19, 1
      %p292 = scmp.lt.s32.totalorder %s20, 3
      %s293 = scalar_select %p292, %s20, 3
      %s294 = smul.addr %s293, 2
      %s295 = smul.addr %s291, 8
      %s296 = sadd.s32 %s294, %s295
      %s297 = sadd.s32 %s296, 16
      %s298 = smul.addr %s297, 4
      %s299 = scalar_lea.vmem %s1, %s298
      %p300 = scmp.lt.s32.totalorder %s19, 1
      %s301 = scalar_select %p300, %s19, 1
      %p302 = scmp.lt.s32.totalorder %s20, 3
      %s303 = scalar_select %p302, %s20, 3
      %s304 = smul.addr %s303, 2
      %s305 = smul.addr %s301, 8
      %s306 = sadd.s32 %s304, %s305
      %s307 = sadd.s32 %s306, 32
      %s308 = smul.addr %s307, 4
      %s309 = scalar_lea.vmem %s2, %s308
      %p310 = scmp.lt.s32.totalorder %s19, 1
      %s311 = scalar_select %p310, %s19, 1
      %s312 = scalar_lea.vmem %s3, %s311
      %p313 = scmp.lt.s32.totalorder %s19, 1
      %s314 = scalar_select %p313, %s19, 1
      %p315 = scmp.lt.s32.totalorder %s20, 3
      %s316 = scalar_select %p315, %s20, 3
      %s317 = smul.addr %s316, 2
      %s318 = smul.addr %s314, 8
      %s319 = sadd.s32 %s317, %s318
      %s320 = smul.addr %s319, 4
      %s321 = scalar_lea.vmem %s4, %s320
      %v323 = vld [vmem:[%s289] sm:$0xf]
      %v324 = vld [vmem:[%s289 + $0x4] sm:$0x3]
      %v325 = vunpack.c.l.bf16 %v323
      %v326 = vunpack.c.l.bf16 %v324
      %v327 = vmul.f32 %v325, 0.35351563
      %v328 = vmul.f32 %v326, 0.35351563
      %v329 = vpack.c.bf16 %v328, %v327
      %v330 = vld [vmem:[%s299] sm:$0xf]
      %v331 = vld [vmem:[%s299 + $0x4] sm:$0x3]
      %v332 = vld [vmem:[%s312] sm:$0x1]
      %v334 = vperm.slane %v332, 0
      %v338 = vunpack.c.l.b16 %v330
      %v339 = vunpack.c.l.b16 %v331
      %v340 = vpack.c.b16 %v339, %v338
      %vm341 = vcmask 64512
      %v343 = vsel %vm341, %v329, 0
      %v346 = vsel %vm341, %v340, 0
      %348 = vmatpush.bf16.xpose.msra.mxu0 0
      %349 = vmatpush.bf16.xpose.msra.mxu0 0
      %350 = vmatpush.bf16.xpose.msra.mxu0 0
      %351 = vmatpush.bf16.xpose.msra.mxu0 0
      %352 = vmatpush.bf16.xpose.msra.mxu0 0
      %353 = vmatpush.bf16.xpose.msra.mxu0 0
      %354 = vmatpush.bf16.xpose.msra.mxu0 0
      %355 = vmatpush.bf16.xpose.msra.mxu0 %v346
      %356 = vmatmul.bf16.gmra.mxu0 %v343
      %v357 = vpop.f32.mrf.mxu0
      %v358 = vadd.f32 %v334, %v357
      %v359 = vpop.f32.mrf.mxu0
      %v360 = vadd.f32 %v334, %v359
      %361 = vdwg.mxu0
      %vm362 = vcmask 97280
      %v363 = vsel %vm362, %v358, -inf
      %364 = vmax.xlane.f32.xlu0 %v363
      %v365 = vpop.xlane.xlu0 %364
      %vm366 = vcmask 93184
      %v367 = vsel %vm366, %v360, -inf
      %368 = vmax.xlane.f32.xlu0 %v367
      %v369 = vpop.xlane.xlu0 %368
      %v370 = vsub.f32 %v358, %v365
      %v371 = vsub.f32 %v360, %v369
      %v372 = vmul.f32 %v370, 1.442695
      %v373 = vpow.pop %v372
      %v374 = vmul.f32 %v371, 1.442695
      %v375 = vpow.pop %v374
      %v376 = vsel %vm362, %v373, 0.0
      %377 = vadd.xlane.f32.xlu0 %v376
      %v378 = vpop.xlane.xlu0 %377
      %v379 = vsel %vm366, %v375, 0.0
      %380 = vadd.xlane.f32.xlu0 %v379
      %v381 = vpop.xlane.xlu0 %380
      %v382 = vrcp.pop %v378
      %v383 = vrcp.pop %v381
      %v384 = vmul.f32 %v373, %v382
      %v385 = vmul.f32 %v375, %v383
      %v386 = vpack.c.bf16 %v385, %v384
      %v387 = vld [vmem:[%s309] sm:$0xf]
      %v388 = vld [vmem:[%s309 + $0x4] sm:$0x3]
      %v391 = vunpack.c.l.b16 %v387
      %v392 = vunpack.c.l.b16 %v388
      %v393 = vpack.c.b16 %v392, %v391
      %v395 = vsel %vm362, %v386, 0
      %vm397 = vcmask 1045504
      %v399 = vsel %vm397, %v393, 0
      %401 = vmatpush.bf16.msra.mxu0 0
      %402 = vmatpush.bf16.msra.mxu0 0
      %403 = vmatpush.bf16.msra.mxu0 0
      %404 = vmatpush.bf16.msra.mxu0 0
      %405 = vmatpush.bf16.msra.mxu0 0
      %406 = vmatpush.bf16.msra.mxu0 0
      %407 = vmatpush.bf16.msra.mxu0 0
      %408 = vmatpush.bf16.msra.mxu0 %v399
      %409 = vmatmul.bf16.gmra.mxu0 %v395
      %v410 = vpop.f32.mrf.mxu0
      %v411 = vadd.f32 0.0, %v410
      %v412 = vpop.f32.mrf.mxu0
      %v413 = vadd.f32 0.0, %v412
      %414 = vdwg.mxu0
      %v415 = vpack.c.bf16 %v411, %v411
      %v416 = vpack.c.bf16 %v413, %v413
      %vm417 = vcmask 60416
      %418 = vst.msk [vmem:[%s321] sm:$0xf] %vm417, %v415
      %vm419 = vcmask 58368
      %420 = vst.msk [vmem:[%s321 + $0x4] sm:$0x3] %vm419, %v416
      %p421 = scmp.lt.s32.totalorder %s19, 1
      %s422 = scalar_select %p421, %s19, 1
      %p423 = scmp.lt.s32.totalorder %s20, 3
      %s424 = scalar_select %p423, %s20, 3
      %s425 = smul.addr %s424, 2
      %s426 = smul.addr %s422, 8
      %s427 = sadd.s32 %s425, %s426
      %s428 = smul.addr %s427, 4
      %s429 = scalar_lea.vmem %s4, %s428
      // Predicated region
      $region37: #{wx_forward.18} parent=35 // pred_check
        %p430 = pneg %p157
      $region38: #{wx_forward.18} parent=35 // pred_check_branch
        %432 = sbr.rel (%p430) target = $region40
      $region39: #{wx_forward.18} parent=35 // pred_region
        _
      $region40: #{wx_forward.18} parent=35 // pred_fallthru
        _
    $region36: #{wx_forward.18} parent=5 // pred_fallthru
      _
    %p433 = scmp.le.s32.totalorder 2, %s10
    // Predicated region
    $region41: #{wx_forward.18} parent=5 // pred_check
      %p434 = pneg %p433
    $region42: #{wx_forward.18} parent=5 // pred_check_branch
      %436 = sbr.rel (%p434) target = $region44
    $region43: #{wx_forward.18} parent=5 // pred_region
      %s437 = ssub.s32 %s10, 2
      // Predicated region
      $region45: #{wx_forward.18} parent=43 // pred_check
        %p438 = pneg %p163
      $region46: #{wx_forward.18} parent=43 // pred_check_branch
        %440 = sbr.rel (%p438) target = $region48
      $region47: #{wx_forward.18} parent=43 // pred_region
        %p441 = scmp.lt.s32.totalorder %s21, 1
        %s442 = scalar_select %p441, %s21, 1
        %p443 = scmp.lt.s32.totalorder %s22, 3
        %s444 = scalar_select %p443, %s22, 3
        %s445 = smul.addr %s444, 2
        %s446 = smul.addr %s442, 8
        %s447 = sadd.s32 %s445, %s446
        %s448 = smul.addr %s447, 4
        %s449 = scalar_lea.vmem %s4, %s448
      $region48: #{wx_forward.18} parent=43 // pred_fallthru
        _
    $region44: #{wx_forward.18} parent=5 // pred_fallthru
      _
  $region6: #{wx_forward.18} parent=0 // loop_footer
    %s14 = sadd.s32 1, %s10
  $region7: #{wx_forward.18} parent=0 // loop_footer_branch
    %9 = sbr.rel target = $region3
  $region8: #{wx_forward.18} parent=0 // loop_exit
    _

// kernel: wx_forward.20
$region0: #{wx_forward.20}
  #allocation0 [shape = 'u32[]', space=smem, size = 0x4, offset = 0x4, fixed_abs, tag = 'smem constant byte address 0x4 - core index']
  #allocation1 [shape = 'u32[72,128]{1,0:T(1,128)}', space=vmem, size = 0x9000, scoped, tag = 'internal scratch']
  #allocation2 [shape = 'f32[24,64]{1,0:T(8,128)}', space=vmem, size = 0x3000, scoped, tag = 'scratch operand']
  %s0 = inlined_call_operand.vmem [shape: f32[24,32], index: 0, kind: input, shape index: {}]
  %s1 = inlined_call_operand.vmem [shape: bf16[32,64], index: 1, kind: input, shape index: {}]
  %s2 = inlined_call_operand.vmem [shape: f32[1,64], index: 2, kind: input, shape index: {}]
  %s3 = inlined_call_operand.vmem [shape: bf16[24,64], index: 3, kind: output, shape index: {}]
  %s4 = sld [smem:[#allocation0]]
  $region30: #{wx_forward.20} parent=0
    _
  %s6 = ssub.s32 1, %s4
  %s7 = scalar_select 0, %s6, %s4
  // Predicated region
  $region2: #{wx_forward.20} parent=0 // pred_check
    _
  $region3: #{wx_forward.20} parent=0 // pred_check_branch
    %9 = sbr.rel (0) target = $region5
  $region4: #{wx_forward.20} parent=0 // pred_region
    _
  $region5: #{wx_forward.20} parent=0 // pred_fallthru
    _
  // Predicated region
  $region6: #{wx_forward.20} parent=0 // pred_check
    _
  $region7: #{wx_forward.20} parent=0 // pred_check_branch
    %11 = sbr.rel (0) target = $region9
  $region8: #{wx_forward.20} parent=0 // pred_region
    _
  $region9: #{wx_forward.20} parent=0 // pred_fallthru
    _
  // Predicated region
  $region10: #{wx_forward.20} parent=0 // pred_check
    _
  $region11: #{wx_forward.20} parent=0 // pred_check_branch
    %13 = sbr.rel (0) target = $region13
  $region12: #{wx_forward.20} parent=0 // pred_region
    _
  $region13: #{wx_forward.20} parent=0 // pred_fallthru
    _
  %p15 = scmp.eq.s32.totalorder 0, 0
  // Predicated region
  $region14: #{wx_forward.20} parent=0 // pred_check
    %p16 = pneg %p15
  $region15: #{wx_forward.20} parent=0 // pred_check_branch
    %18 = sbr.rel (%p16) target = $region17
  $region16: #{wx_forward.20} parent=0 // pred_region
    %vm19 = vcmask 523264
    %20 = vst.msk [vmem:[#allocation2] sm:$0xff] %vm19, 0.0
    %21 = vst.msk [vmem:[#allocation2 + $0x8] sm:$0xff] %vm19, 0.0
    %22 = vst.msk [vmem:[#allocation2 + $0x10] sm:$0xff] %vm19, 0.0
  $region17: #{wx_forward.20} parent=0 // pred_fallthru
    _
  %v23 = vld [vmem:[#allocation2] sm:$0xff]
  %v24 = vld [vmem:[#allocation2 + $0x8] sm:$0xff]
  %v25 = vld [vmem:[#allocation2 + $0x10] sm:$0xff]
  %v26 = vld [vmem:[%s0] sm:$0xff]
  %v27 = vld [vmem:[%s0 + $0x8] sm:$0xff]
  %v28 = vld [vmem:[%s0 + $0x10] sm:$0xff]
  %v29 = vpack.c.bf16 %v27, %v26
  %v30 = vpack.c.bf16 %v28, %v28
  %v31 = vld [vmem:[%s1] sm:$0xf]
  %v32 = vld [vmem:[%s1 + $0x4] sm:$0xf]
  %v33 = vld [vmem:[%s1 + $0x8] sm:$0xf]
  %v34 = vld [vmem:[%s1 + $0xc] sm:$0xf]
  %v39 = vunpack.c.l.b16 %v31
  %v40 = vunpack.c.l.b16 %v32
  %v41 = vunpack.c.l.b16 %v33
  %v42 = vunpack.c.l.b16 %v34
  %v43 = vpack.c.b16 %v40, %v39
  %v44 = vpack.c.b16 %v42, %v41
  %vm47 = vcmask 261120
  %v49 = vsel %vm47, %v29, 0
  %v52 = vsel %vm47, %v30, 0
  %54 = vmatpush.bf16.msra.mxu0 0
  %55 = vmatpush.bf16.msra.mxu0 0
  %56 = vmatpush.bf16.msra.mxu0 0
  %57 = vmatpush.bf16.msra.mxu0 0
  %58 = vmatpush.bf16.msra.mxu0 0
  %59 = vmatpush.bf16.msra.mxu0 0
  %60 = vmatpush.bf16.msra.mxu0 %v44
  %61 = vmatpush.bf16.msra.mxu0 %v43
  %62 = vmatmul.bf16.gmra.mxu0 %v49
  %v63 = vpop.f32.mrf.mxu0
  %v64 = vadd.f32 0.0, %v63
  %v65 = vpop.f32.mrf.mxu0
  %v66 = vadd.f32 0.0, %v65
  %67 = vmatmul.bf16.gmra.mxu0 %v52
  %v68 = vpop.f32.mrf.mxu0
  %v69 = vadd.f32 0.0, %v68
  %v70 = vpop.f32.mrf.mxu0
  %71 = vdwg.mxu0
  %v72 = vadd.f32 %v23, %v64
  %v73 = vadd.f32 %v24, %v66
  %v74 = vadd.f32 %v25, %v69
  %vm75 = vcmask 523264
  %76 = vst.msk [vmem:[#allocation2] sm:$0xff] %vm75, %v72
  %77 = vst.msk [vmem:[#allocation2 + $0x8] sm:$0xff] %vm75, %v73
  %78 = vst.msk [vmem:[#allocation2 + $0x10] sm:$0xff] %vm75, %v74
  // Predicated region
  $region18: #{wx_forward.20} parent=0 // pred_check
    %p79 = pneg %p15
  $region19: #{wx_forward.20} parent=0 // pred_check_branch
    %81 = sbr.rel (%p79) target = $region21
  $region20: #{wx_forward.20} parent=0 // pred_region
    %v82 = vld [vmem:[#allocation2] sm:$0xff]
    %v83 = vld [vmem:[#allocation2 + $0x8] sm:$0xff]
    %v84 = vld [vmem:[#allocation2 + $0x10] sm:$0xff]
    %v85 = vld [vmem:[%s2] sm:$0x1]
    %v87 = vperm.slane %v85, 0
    %v89 = vadd.f32 %v82, %v87
    %v90 = vadd.f32 %v83, %v87
    %v91 = vadd.f32 %v84, %v87
    %v92 = vmul.f32 %v89, 0.5
    %v93 = vmul.f32 %v90, 0.5
    %v94 = vmul.f32 %v91, 0.5
    %v95 = vmul.f32 %v89, 0.044715
    %v96 = vmul.f32 %v90, 0.044715
    %v97 = vmul.f32 %v91, 0.044715
    %v98 = vmul.f32 %v95, %v89
    %v99 = vmul.f32 %v96, %v90
    %v100 = vmul.f32 %v97, %v91
    %v101 = vmul.f32 %v98, %v89
    %v102 = vmul.f32 %v99, %v90
    %v103 = vmul.f32 %v100, %v91
    %v104 = vadd.f32 %v89, %v101
    %v105 = vadd.f32 %v90, %v102
    %v106 = vadd.f32 %v91, %v103
    %v107 = vmul.f32 %v104, 0.7978846
    %v108 = vmul.f32 %v105, 0.7978846
    %v109 = vmul.f32 %v106, 0.7978846
    %v110 = vtanh.pop %v107
    %v111 = vtanh.pop %v108
    %v112 = vtanh.pop %v109
    %v113 = vadd.f32 %v110, 1.0
    %v114 = vadd.f32 %v111, 1.0
    %v115 = vadd.f32 %v112, 1.0
    %v116 = vmul.f32 %v92, %v113
    %v117 = vmul.f32 %v93, %v114
    %v118 = vmul.f32 %v94, %v115
    %v119 = vpack.c.bf16 %v116, %v116
    %v120 = vpack.c.bf16 %v117, %v117
    %v121 = vpack.c.bf16 %v118, %v118
    %vm122 = vcmask 519168
    %123 = vst.msk [vmem:[%s3] sm:$0xf] %vm122, %v119
    %124 = vst.msk [vmem:[%s3 + $0x4] sm:$0xf] %vm122, %v120
    %125 = vst.msk [vmem:[%s3 + $0x8] sm:$0xf] %vm122, %v121
  $region21: #{wx_forward.20} parent=0 // pred_fallthru
    _
  // Predicated region
  $region22: #{wx_forward.20} parent=0 // pred_check
    _
  $region23: #{wx_forward.20} parent=0 // pred_check_branch
    %127 = sbr.rel (0) target = $region25
  $region24: #{wx_forward.20} parent=0 // pred_region
    _
  $region25: #{wx_forward.20} parent=0 // pred_fallthru
    _
  // Predicated region
  $region26: #{wx_forward.20} parent=0 // pred_check
    _
  $region27: #{wx_forward.20} parent=0 // pred_check_branch
    %129 = sbr.rel (0) target = $region29
  $region28: #{wx_forward.20} parent=0 // pred_region
    _
  $region29: #{wx_forward.20} parent=0 // pred_fallthru
    _

// kernel: wx_forward.21
$region0: #{wx_forward.21}
  #allocation0 [shape = 'u32[]', space=smem, size = 0x4, offset = 0x4, fixed_abs, tag = 'smem constant byte address 0x4 - core index']
  #allocation1 [shape = 'u32[72,128]{1,0:T(1,128)}', space=vmem, size = 0x9000, scoped, tag = 'internal scratch']
  #allocation2 [shape = 'f32[24,32]{1,0:T(8,128)}', space=vmem, size = 0x3000, scoped, tag = 'scratch operand']
  %s0 = inlined_call_operand.vmem [shape: bf16[24,64], index: 0, kind: input, shape index: {}]
  %s1 = inlined_call_operand.vmem [shape: bf16[64,32], index: 1, kind: input, shape index: {}]
  %s2 = inlined_call_operand.vmem [shape: f32[1,32], index: 2, kind: input, shape index: {}, may-alias: {2,5}]
  %s3 = inlined_call_operand.vmem [shape: f32[24,32], index: 3, kind: input, shape index: {}]
  %s4 = inlined_call_operand.vmem [shape: f32[1,32], index: 4, kind: input, shape index: {}]
  %s5 = inlined_call_operand.vmem [shape: f32[1,32], index: 5, kind: input, shape index: {}, may-alias: {2,5}]
  %s6 = inlined_call_operand.vmem [shape: f32[24,32], index: 6, kind: output, shape index: {}]
  %s7 = sld [smem:[#allocation0]]
  $region42: #{wx_forward.21} parent=0
    _
  %s9 = ssub.s32 1, %s7
  %s10 = scalar_select 0, %s9, %s7
  // Predicated region
  $region2: #{wx_forward.21} parent=0 // pred_check
    _
  $region3: #{wx_forward.21} parent=0 // pred_check_branch
    %12 = sbr.rel (0) target = $region5
  $region4: #{wx_forward.21} parent=0 // pred_region
    _
  $region5: #{wx_forward.21} parent=0 // pred_fallthru
    _
  // Predicated region
  $region6: #{wx_forward.21} parent=0 // pred_check
    _
  $region7: #{wx_forward.21} parent=0 // pred_check_branch
    %14 = sbr.rel (0) target = $region9
  $region8: #{wx_forward.21} parent=0 // pred_region
    _
  $region9: #{wx_forward.21} parent=0 // pred_fallthru
    _
  // Predicated region
  $region10: #{wx_forward.21} parent=0 // pred_check
    _
  $region11: #{wx_forward.21} parent=0 // pred_check_branch
    %16 = sbr.rel (0) target = $region13
  $region12: #{wx_forward.21} parent=0 // pred_region
    _
  $region13: #{wx_forward.21} parent=0 // pred_fallthru
    _
  // Predicated region
  $region14: #{wx_forward.21} parent=0 // pred_check
    _
  $region15: #{wx_forward.21} parent=0 // pred_check_branch
    %18 = sbr.rel (0) target = $region17
  $region16: #{wx_forward.21} parent=0 // pred_region
    _
  $region17: #{wx_forward.21} parent=0 // pred_fallthru
    _
  // Predicated region
  $region18: #{wx_forward.21} parent=0 // pred_check
    _
  $region19: #{wx_forward.21} parent=0 // pred_check_branch
    %20 = sbr.rel (0) target = $region21
  $region20: #{wx_forward.21} parent=0 // pred_region
    _
  $region21: #{wx_forward.21} parent=0 // pred_fallthru
    _
  // Predicated region
  $region22: #{wx_forward.21} parent=0 // pred_check
    _
  $region23: #{wx_forward.21} parent=0 // pred_check_branch
    %22 = sbr.rel (0) target = $region25
  $region24: #{wx_forward.21} parent=0 // pred_region
    _
  $region25: #{wx_forward.21} parent=0 // pred_fallthru
    _
  %p24 = scmp.eq.s32.totalorder 0, 0
  // Predicated region
  $region26: #{wx_forward.21} parent=0 // pred_check
    %p25 = pneg %p24
  $region27: #{wx_forward.21} parent=0 // pred_check_branch
    %27 = sbr.rel (%p25) target = $region29
  $region28: #{wx_forward.21} parent=0 // pred_region
    %vm28 = vcmask 261120
    %29 = vst.msk [vmem:[#allocation2] sm:$0xff] %vm28, 0.0
    %30 = vst.msk [vmem:[#allocation2 + $0x8] sm:$0xff] %vm28, 0.0
    %31 = vst.msk [vmem:[#allocation2 + $0x10] sm:$0xff] %vm28, 0.0
  $region29: #{wx_forward.21} parent=0 // pred_fallthru
    _
  %v32 = vld [vmem:[#allocation2] sm:$0xff]
  %v33 = vld [vmem:[#allocation2 + $0x8] sm:$0xff]
  %v34 = vld [vmem:[#allocation2 + $0x10] sm:$0xff]
  %v35 = vld [vmem:[%s0] sm:$0xf]
  %v36 = vld [vmem:[%s0 + $0x4] sm:$0xf]
  %v37 = vld [vmem:[%s0 + $0x8] sm:$0xf]
  %v38 = vld [vmem:[%s1] sm:$0xf]
  %v39 = vld [vmem:[%s1 + $0x4] sm:$0xf]
  %v40 = vld [vmem:[%s1 + $0x8] sm:$0xf]
  %v41 = vld [vmem:[%s1 + $0xc] sm:$0xf]
  %v42 = vld [vmem:[%s1 + $0x10] sm:$0xf]
  %v43 = vld [vmem:[%s1 + $0x14] sm:$0xf]
  %v44 = vld [vmem:[%s1 + $0x18] sm:$0xf]
  %v45 = vld [vmem:[%s1 + $0x1c] sm:$0xf]
  %v49 = vunpack.c.l.b16 %v35
  %v50 = vunpack.c.l.b16 %v36
  %v51 = vunpack.c.l.b16 %v37
  %v52 = vpack.c.b16 %v50, %v49
  %v53 = vpack.c.b16 %v51, %v51
  %v62 = vunpack.c.l.b16 %v38
  %v63 = vunpack.c.l.b16 %v39
  %v64 = vunpack.c.l.b16 %v40
  %v65 = vunpack.c.l.b16 %v41
  %v66 = vunpack.c.l.b16 %v42
  %v67 = vunpack.c.l.b16 %v43
  %v68 = vunpack.c.l.b16 %v44
  %v69 = vunpack.c.l.b16 %v45
  %v70 = vpack.c.b16 %v63, %v62
  %v71 = vpack.c.b16 %v65, %v64
  %v72 = vpack.c.b16 %v67, %v66
  %v73 = vpack.c.b16 %v69, %v68
  %vm78 = vcmask 523264
  %v80 = vsel %vm78, %v52, 0
  %v83 = vsel %vm78, %v53, 0
  %85 = vmatpush.bf16.msra.mxu0 0
  %86 = vmatpush.bf16.msra.mxu0 0
  %87 = vmatpush.bf16.msra.mxu0 0
  %88 = vmatpush.bf16.msra.mxu0 0
  %89 = vmatpush.bf16.msra.mxu0 %v73
  %90 = vmatpush.bf16.msra.mxu0 %v72
  %91 = vmatpush.bf16.msra.mxu0 %v71
  %92 = vmatpush.bf16.msra.mxu0 %v70
  %93 = vmatmul.bf16.gmra.mxu0 %v80
  %v94 = vpop.f32.mrf.mxu0
  %v95 = vadd.f32 0.0, %v94
  %v96 = vpop.f32.mrf.mxu0
  %v97 = vadd.f32 0.0, %v96
  %98 = vmatmul.bf16.gmra.mxu0 %v83
  %v99 = vpop.f32.mrf.mxu0
  %v100 = vadd.f32 0.0, %v99
  %v101 = vpop.f32.mrf.mxu0
  %102 = vdwg.mxu0
  %v103 = vadd.f32 %v32, %v95
  %v104 = vadd.f32 %v33, %v97
  %v105 = vadd.f32 %v34, %v100
  %vm106 = vcmask 261120
  %107 = vst.msk [vmem:[#allocation2] sm:$0xff] %vm106, %v103
  %108 = vst.msk [vmem:[#allocation2 + $0x8] sm:$0xff] %vm106, %v104
  %109 = vst.msk [vmem:[#allocation2 + $0x10] sm:$0xff] %vm106, %v105
  // Predicated region
  $region30: #{wx_forward.21} parent=0 // pred_check
    %p110 = pneg %p24
  $region31: #{wx_forward.21} parent=0 // pred_check_branch
    %112 = sbr.rel (%p110) target = $region33
  $region32: #{wx_forward.21} parent=0 // pred_region
    %v113 = vld [vmem:[#allocation2] sm:$0xff]
    %v114 = vld [vmem:[#allocation2 + $0x8] sm:$0xff]
    %v115 = vld [vmem:[#allocation2 + $0x10] sm:$0xff]
    %v116 = vld [vmem:[%s2] sm:$0x1]
    %v118 = vperm.slane %v116, 0
    %v120 = vadd.f32 %v113, %v118
    %v121 = vadd.f32 %v114, %v118
    %v122 = vadd.f32 %v115, %v118
    %v123 = vld [vmem:[%s3] sm:$0xff]
    %v124 = vld [vmem:[%s3 + $0x8] sm:$0xff]
    %v125 = vld [vmem:[%s3 + $0x10] sm:$0xff]
    %v126 = vadd.f32 %v120, %v123
    %v127 = vadd.f32 %v121, %v124
    %v128 = vadd.f32 %v122, %v125
    %v129 = vsel %vm106, %v126, 0.0
    %130 = vadd.xlane.f32.xlu0 %v129
    %v131 = vpop.xlane.xlu0 %130
    %v132 = vsel %vm106, %v127, 0.0
    %133 = vadd.xlane.f32.xlu0 %v132
    %v134 = vpop.xlane.xlu0 %133
    %v135 = vsel %vm106, %v128, 0.0
    %136 = vadd.xlane.f32.xlu0 %v135
    %v137 = vpop.xlane.xlu0 %136
    %v138 = vrcp.pop 32.0
    %v139 = vmul.f32 32.0, %v138
    %v140 = vsub.f32 1.0, %v139
    %v141 = vmul.f32 %v138, %v140
    %v142 = vadd.f32 %v138, %v141
    %vm143 = vweird.f32 %v138
    %v144 = vsel %vm143, %v138, %v142
    %v145 = vmul.f32 %v131, %v144
    %v146 = vmul.f32 %v134, %v144
    %v147 = vmul.f32 %v137, %v144
    %v148 = vsub.f32 %v126, %v145
    %v149 = vsub.f32 %v127, %v146
    %v150 = vsub.f32 %v128, %v147
    %v151 = vmul.f32 %v148, %v148
    %v152 = vmul.f32 %v149, %v149
    %v153 = vmul.f32 %v150, %v150
    %v154 = vsel %vm106, %v151, 0.0
    %155 = vadd.xlane.f32.xlu0 %v154
    %v156 = vpop.xlane.xlu0 %155
    %v157 = vsel %vm106, %v152, 0.0
    %158 = vadd.xlane.f32.xlu0 %v157
    %v159 = vpop.xlane.xlu0 %158
    %v160 = vsel %vm106, %v153, 0.0
    %161 = vadd.xlane.f32.xlu0 %v160
    %v162 = vpop.xlane.xlu0 %161
    %v163 = vmul.f32 %v156, %v144
    %v164 = vmul.f32 %v159, %v144
    %v165 = vmul.f32 %v162, %v144
    %v166 = vadd.f32 %v163, 1e-12
    %v167 = vadd.f32 %v164, 1e-12
    %v168 = vadd.f32 %v165, 1e-12
    %v169 = vrsqrt.pop %v166
    %v170 = vmul.f32 %v169, %v166
    %v171 = vmul.f32 %v170, %v169
    %v172 = vmul.f32 0.5, %v171
    %v173 = vsub.f32 1.5, %v172
    %v174 = vmul.f32 %v169, %v173
    %vm175 = vweird.f32 %v166
    %vm176 = vweird.f32 %v169
    %vm177 = vmor %vm175, %vm176
    %v178 = vsel %vm177, %v169, %v174
    %v179 = vrsqrt.pop %v167
    %v180 = vmul.f32 %v179, %v167
    %v181 = vmul.f32 %v180, %v179
    %v182 = vmul.f32 0.5, %v181
    %v183 = vsub.f32 1.5, %v182
    %v184 = vmul.f32 %v179, %v183
    %vm185 = vweird.f32 %v167
    %vm186 = vweird.f32 %v179
    %vm187 = vmor %vm185, %vm186
    %v188 = vsel %vm187, %v179, %v184
    %v189 = vrsqrt.pop %v168
    %v190 = vmul.f32 %v189, %v168
    %v191 = vmul.f32 %v190, %v189
    %v192 = vmul.f32 0.5, %v191
    %v193 = vsub.f32 1.5, %v192
    %v194 = vmul.f32 %v189, %v193
    %vm195 = vweird.f32 %v168
    %vm196 = vweird.f32 %v189
    %vm197 = vmor %vm195, %vm196
    %v198 = vsel %vm197, %v189, %v194
    %v199 = vmul.f32 %v148, %v178
    %v200 = vmul.f32 %v149, %v188
    %v201 = vmul.f32 %v150, %v198
    %v202 = vld [vmem:[%s4] sm:$0x1]
    %v204 = vperm.slane %v202, 0
    %v206 = vmul.f32 %v199, %v204
    %v207 = vmul.f32 %v200, %v204
    %v208 = vmul.f32 %v201, %v204
    %v209 = vld [vmem:[%s5] sm:$0x1]
    %v211 = vperm.slane %v209, 0
    %v213 = vadd.f32 %v206, %v211
    %v214 = vadd.f32 %v207, %v211
    %v215 = vadd.f32 %v208, %v211
    %216 = vst.msk [vmem:[%s6] sm:$0xff] %vm106, %v213
    %217 = vst.msk [vmem:[%s6 + $0x8] sm:$0xff] %vm106, %v214
    %218 = vst.msk [vmem:[%s6 + $0x10] sm:$0xff] %vm106, %v215
  $region33: #{wx_forward.21} parent=0 // pred_fallthru
    _
  // Predicated region
  $region34: #{wx_forward.21} parent=0 // pred_check
    _
  $region35: #{wx_forward.21} parent=0 // pred_check_branch
    %220 = sbr.rel (0) target = $region37
  $region36: #{wx_forward.21} parent=0 // pred_region
    _
  $region37: #{wx_forward.21} parent=0 // pred_fallthru
    _
  // Predicated region
  $region38: #{wx_forward.21} parent=0 // pred_check
    _
  $region39: #{wx_forward.21} parent=0 // pred_check_branch
    %222 = sbr.rel (0) target = $region41
  $region40: #{wx_forward.21} parent=0 // pred_region
    _
  $region41: #{wx_forward.21} parent=0 // pred_fallthru
    _

// kernel: wx_forward.27
$region0: #{wx_forward.27}
  #allocation0 [shape = 'u32[]', space=smem, size = 0x4, offset = 0x4, fixed_abs, tag = 'smem constant byte address 0x4 - core index']
  #allocation1 [shape = 'u32[72,128]{1,0:T(1,128)}', space=vmem, size = 0x9000, scoped, tag = 'internal scratch']
  %s0 = inlined_call_operand.vmem [shape: f32[2,12,32], index: 0, kind: input, shape index: {}]
  %s1 = inlined_call_operand.vmem [shape: f32[2,1,12], index: 1, kind: input, shape index: {}]
  %s2 = inlined_call_operand.vmem [shape: f32[64,3], index: 2, kind: input, shape index: {}]
  %s3 = inlined_call_operand.vmem [shape: f32[1,3], index: 3, kind: input, shape index: {}]
  %s4 = inlined_call_operand.hbm [shape: f32[2,1,3], index: 4, kind: output, shape index: {}]
  %s5 = sld [smem:[#allocation0]]
  $region49: #{wx_forward.27} parent=0
    _
  %s7 = ssub.s32 1, %s5
  %s8 = scalar_select 0, %s7, %s5
  $region1: #{wx_forward.27} parent=0
    #allocation2 [shape = 'u8[1024]{0}', space=vmem, size = 0x400, scoped, tag = 'output window, operand 0']
    #allocation3 [shape = 's32[2]{0}', space=sflag, size = 0x8, scoped, tag = 'scoped memory for wx_forward.27']
    %9 = vsyncpa [#allocation3], 0
    %s10 = scalar_lea.sflag [#allocation3], 1
    %11 = vsyncpa %s10, 0
    loop: start=0, step=1, limit=4
    $region2: #{wx_forward.27} parent=1 // loop_pre_header
      _
    $region3: #{wx_forward.27} parent=1 // loop_header
      %s13 = sphi 0, %s17
      %p14 = scmp.ge.s32.totalorder %s13, 4
      %s23 = sphi 0, %s25
      %s26 = sphi 0, %s23
      %s27 = sphi 0, %s26
      %s43 = sphi 0, %s27
      %s49 = sphi 0, %s51
      %s52 = sphi 0, %s49
      %s53 = sphi 0, %s52
      %s69 = sphi 0, %s53
      %s73 = sphi 0, %s73
      %s75 = sphi 0, %s73
      %s76 = sphi 0, %s75
      %s90 = sphi 0, %s76
      %s94 = sphi 0, %s94
      %s96 = sphi 0, %s94
      %s97 = sphi 0, %s96
      %s111 = sphi 0, %s97
      %s117 = sphi 0, %s119
      %s120 = sphi 0, %s117
      %s121 = sphi 0, %s120
      %s137 = sphi 0, %s121
    $region4: #{wx_forward.27} parent=1 // loop_header_branch
      %16 = sbr.rel (%p14) target = $region8
    $region5: #{wx_forward.27} parent=1 // loop_body
      %s18 = ssub.s32 %s13, 1
      %s19 = ssub.s32 %s13, 2
      %s20 = sadd.s32 %s13, 1
      %s21 = ssub.s32 %s13, %s20
      %p22 = scmp.eq.s32.totalorder %s21, 0
      %s24 = sadd.s32 %s23, 1
      %s25 = scalar_select %p22, %s23, %s24
      %p28 = pneg %p22
      %p29 = scmp.eq.s32.totalorder %s13, 1
      %p30 = por %p28, %p29
      %p31 = scmp.ne.s32.totalorder %s23, %s26
      %p32 = scmp.eq.s32.totalorder %s13, 0
      %p33 = por %p31, %p32
      %p34 = scmp.ne.s32.totalorder %s23, %s26
      %p35 = scmp.eq.s32.totalorder %s18, 1
      %p36 = por %p34, %p35
      %p37 = scmp.ne.s32.totalorder %s26, %s27
      %p38 = scmp.eq.s32.totalorder %s18, 0
      %p39 = por %p37, %p38
      %p40 = scmp.ne.s32.totalorder %s26, %s27
      %p41 = scmp.eq.s32.totalorder %s19, 1
      %p42 = por %p40, %p41
      %p44 = scmp.ne.s32.totalorder %s27, %s43
      %p45 = scmp.eq.s32.totalorder %s19, 0
      %p46 = por %p44, %p45
      %s47 = ssub.s32 %s13, %s20
      %p48 = scmp.eq.s32.totalorder %s47, 0
      %s50 = sadd.s32 %s49, 1
      %s51 = scalar_select %p48, %s49, %s50
      %p54 = pneg %p48
      %p55 = scmp.eq.s32.totalorder %s13, 1
      %p56 = por %p54, %p55
      %p57 = scmp.ne.s32.totalorder %s49, %s52
      %p58 = scmp.eq.s32.totalorder %s13, 0
      %p59 = por %p57, %p58
      %p60 = scmp.ne.s32.totalorder %s49, %s52
      %p61 = scmp.eq.s32.totalorder %s18, 1
      %p62 = por %p60, %p61
      %p63 = scmp.ne.s32.totalorder %s52, %s53
      %p64 = scmp.eq.s32.totalorder %s18, 0
      %p65 = por %p63, %p64
      %p66 = scmp.ne.s32.totalorder %s52, %s53
      %p67 = scmp.eq.s32.totalorder %s19, 1
      %p68 = por %p66, %p67
      %p70 = scmp.ne.s32.totalorder %s53, %s69
      %p71 = scmp.eq.s32.totalorder %s19, 0
      %p72 = por %p70, %p71
      %s74 = sadd.s32 %s73, 1
      %p77 = scmp.eq.s32.totalorder %s13, 1
      %p78 = scmp.ne.s32.totalorder %s73, %s75
      %p79 = scmp.eq.s32.totalorder %s13, 0
      %p80 = por %p78, %p79
      %p81 = scmp.ne.s32.totalorder %s73, %s75
      %p82 = scmp.eq.s32.totalorder %s18, 1
      %p83 = por %p81, %p82
      %p84 = scmp.ne.s32.totalorder %s75, %s76
      %p85 = scmp.eq.s32.totalorder %s18, 0
      %p86 = por %p84, %p85
      %p87 = scmp.ne.s32.totalorder %s75, %s76
      %p88 = scmp.eq.s32.totalorder %s19, 1
      %p89 = por %p87, %p88
      %p91 = scmp.ne.s32.totalorder %s76, %s90
      %p92 = scmp.eq.s32.totalorder %s19, 0
      %p93 = por %p91, %p92
      %s95 = sadd.s32 %s94, 1
      %p98 = scmp.eq.s32.totalorder %s13, 1
      %p99 = scmp.ne.s32.totalorder %s94, %s96
      %p100 = scmp.eq.s32.totalorder %s13, 0
      %p101 = por %p99, %p100
      %p102 = scmp.ne.s32.totalorder %s94, %s96
      %p103 = scmp.eq.s32.totalorder %s18, 1
      %p104 = por %p102, %p103
      %p105 = scmp.ne.s32.totalorder %s96, %s97
      %p106 = scmp.eq.s32.totalorder %s18, 0
      %p107 = por %p105, %p106
      %p108 = scmp.ne.s32.totalorder %s96, %s97
      %p109 = scmp.eq.s32.totalorder %s19, 1
      %p110 = por %p108, %p109
      %p112 = scmp.ne.s32.totalorder %s97, %s111
      %p113 = scmp.eq.s32.totalorder %s19, 0
      %p114 = por %p112, %p113
      %s115 = ssub.s32 %s13, %s20
      %p116 = scmp.eq.s32.totalorder %s115, 0
      %s118 = sadd.s32 %s117, 1
      %s119 = scalar_select %p116, %s117, %s118
      %p122 = pneg %p116
      %p123 = scmp.eq.s32.totalorder %s13, 1
      %p124 = por %p122, %p123
      %p125 = scmp.ne.s32.totalorder %s117, %s120
      %p126 = scmp.eq.s32.totalorder %s13, 0
      %p127 = por %p125, %p126
      %p128 = scmp.ne.s32.totalorder %s117, %s120
      %p129 = scmp.eq.s32.totalorder %s18, 1
      %p130 = por %p128, %p129
      %p131 = scmp.ne.s32.totalorder %s120, %s121
      %p132 = scmp.eq.s32.totalorder %s18, 0
      %p133 = por %p131, %p132
      %p134 = scmp.ne.s32.totalorder %s120, %s121
      %p135 = scmp.eq.s32.totalorder %s19, 1
      %p136 = por %p134, %p135
      %p138 = scmp.ne.s32.totalorder %s121, %s137
      %p139 = scmp.eq.s32.totalorder %s19, 0
      %p140 = por %p138, %p139
      %p141 = scmp.le.s32.totalorder 1, %s13
      %p142 = scmp.lt.s32.totalorder %s13, 3
      %p143 = pnand %p141, %p142
      %p144 = pneg %p143
      // Predicated region
      $region9: #{wx_forward.27} parent=5 // pred_check
        _
      $region10: #{wx_forward.27} parent=5 // pred_check_branch
        %146 = sbr.rel (%p143) target = $region12
      $region11: #{wx_forward.27} parent=5 // pred_region
        %s147 = ssub.s32 %s13, 1
        // Predicated region
        $region13: #{wx_forward.27} parent=11 // pred_check
          %p148 = pneg %p86
        $region14: #{wx_forward.27} parent=11 // pred_check_branch
          %150 = sbr.rel (%p148) target = $region16
        $region15: #{wx_forward.27} parent=11 // pred_region
          _
        $region16: #{wx_forward.27} parent=11 // pred_fallthru
          _
        // Predicated region
        $region17: #{wx_forward.27} parent=11 // pred_check
          %p151 = pneg %p107
        $region18: #{wx_forward.27} parent=11 // pred_check_branch
          %153 = sbr.rel (%p151) target = $region20
        $region19: #{wx_forward.27} parent=11 // pred_region
          _
        $region20: #{wx_forward.27} parent=11 // pred_fallthru
          _
      $region12: #{wx_forward.27} parent=5 // pred_fallthru
        _
      %p154 = scmp.lt.s32.totalorder %s13, 2
      // Predicated region
      $region21: #{wx_forward.27} parent=5 // pred_check
        %p155 = pneg %p154
      $region22: #{wx_forward.27} parent=5 // pred_check_branch
        %157 = sbr.rel (%p155) target = $region24
      $region23: #{wx_forward.27} parent=5 // pred_region
        // Predicated region
        $region25: #{wx_forward.27} parent=23 // pred_check
          %p158 = pneg %p33
        $region26: #{wx_forward.27} parent=23 // pred_check_branch
          %160 = sbr.rel (%p158) target = $region28
        $region27: #{wx_forward.27} parent=23 // pred_region
          %p161 = scmp.lt.s32.totalorder %s13, 1
          %s162 = scalar_select %p161, %s13, 1
          %s163 = smul.addr %s162, 2
          %s164 = smul.addr %s163, 8
          %s165 = scalar_lea.vmem %s0, %s164
        $region28: #{wx_forward.27} parent=23 // pred_fallthru
          _
        // Predicated region
        $region29: #{wx_forward.27} parent=23 // pred_check
          %p166 = pneg %p59
        $region30: #{wx_forward.27} parent=23 // pred_check_branch
          %168 = sbr.rel (%p166) target = $region32
        $region31: #{wx_forward.27} parent=23 // pred_region
          %p169 = scmp.lt.s32.totalorder %s13, 1
          %s170 = scalar_select %p169, %s13, 1
          %s171 = scalar_lea.vmem %s1, %s170
        $region32: #{wx_forward.27} parent=23 // pred_fallthru
          _
      $region24: #{wx_forward.27} parent=5 // pred_fallthru
        _
      %p172 = scmp.le.s32.totalorder 1, %s13
      %p173 = scmp.lt.s32.totalorder %s13, 3
      %p174 = pnand %p172, %p173
      %p175 = pneg %p174
      // Predicated region
      $region33: #{wx_forward.27} parent=5 // pred_check
        _
      $region34: #{wx_forward.27} parent=5 // pred_check_branch
        %177 = sbr.rel (%p174) target = $region36
      $region35: #{wx_forward.27} parent=5 // pred_region
        %s178 = ssub.s32 %s13, 1
        %p179 = scmp.lt.s32.totalorder %s18, 1
        %s180 = scalar_select %p179, %s18, 1
        %s181 = smul.addr %s180, 2
        %s182 = smul.addr %s181, 8
        %s183 = scalar_lea.vmem %s0, %s182
        %p184 = pneg %p39
        %p185 = pneg %p36
        %p186 = scmp.lt.s32.totalorder %s18, 1
        %s187 = scalar_select %p186, %s18, 1
        %s188 = scalar_lea.vmem %s1, %s187
        %p189 = pneg %p65
        %p190 = pneg %p62
        %p191 = pneg %p86
        %p192 = pneg %p83
        %p193 = pneg %p107
        %p194 = pneg %p104
        %p195 = pneg %p133
        %p196 = pneg %p130
        %s197 = sand.u32 %s120, 1
        %s198 = scalar_lea.sflag [#allocation3], %s197
        %s199 = sand.u32 %s120, 1
        %s200 = scalar_lea.vmem [#allocation2], %s199
        %p201 = scmp.lt.s32.totalorder %s18, 1
        %s202 = scalar_select %p201, %s18, 1
        %s203 = smul.addr %s202, 2
        %s204 = smul.addr %s203, 8
        %s205 = scalar_lea.vmem %s0, %s204
        %p206 = scmp.lt.s32.totalorder %s18, 1
        %s207 = scalar_select %p206, %s18, 1
        %s208 = scalar_lea.vmem %s1, %s207
        %v209 = vld [vmem:[%s205] sm:$0xff]
        %v210 = vld [vmem:[%s205 + $0x8] sm:$0xf]
        %v211 = vld [vmem:[%s208] sm:$0x1]
        %vm212 = vcmask 97280
        %v214 = vsel %vm212, %v211, 0
        %vm216 = vcmask 1043456
        %v218 = vsel %vm216, %v210, 0
        %220 = vmatpush.msra.mxu0 0.0
        %221 = vmatpush.msra.mxu0 0.0
        %222 = vmatpush.msra.mxu0 0.0
        %223 = vmatpush.msra.mxu0 0.0
        %224 = vmatpush.msra.mxu0 0.0
        %225 = vmatpush.msra.mxu0 0.0
        %226 = vmatpush.msra.mxu0 0.0
        %227 = vmatpush.msra.mxu0 0.0
        %228 = vmatpush.msra.mxu0 0.0
        %229 = vmatpush.msra.mxu0 0.0
        %230 = vmatpush.msra.mxu0 0.0
        %231 = vmatpush.msra.mxu0 0.0
        %232 = vmatpush.msra.mxu0 0.0
        %233 = vmatpush.msra.mxu0 0.0
        %234 = vmatpush.msra.mxu0 %v218
        %235 = vmatpush.msra.mxu0 %v209
        %236 = vmatmul.f32.gmra.mxu0 %v214
        %v237 = vpop.f32.mrf.mxu0
        %v238 = vadd.f32 0.0, %v237
        %239 = vdwg.mxu0
        %vm240 = vcmask 90112
        %v241 = vsel %vm240, %v211, 0.0
        %242 = vadd.xlane.f32.xlu0 %v241
        %v243 = vpop.xlane.xlu0 %242
        %v244 = vrot.slane %v243, 4
        %v245 = vadd.f32 %v243, %v244
        %v246 = vrot.slane %v245, 2
        %v247 = vadd.f32 %v245, %v246
        %v248 = vrot.slane %v247, 1
        %v249 = vadd.f32 %v247, %v248
        %s250 = vtos %v249
        %s251 = smax.f32 %s250, 1e-09
        %v252 = vstv %s251
        %v253 = vrcp.pop %v252
        %v254 = vmul.f32 %v252, %v253
        %v255 = vsub.f32 1.0, %v254
        %v256 = vmul.f32 %v253, %v255
        %v257 = vadd.f32 %v253, %v256
        %vm258 = vweird.f32 %v252
        %vm259 = vweird.f32 %v253
        %vm260 = vmor %vm258, %vm259
        %v261 = vsel %vm260, %v253, %v257
        %v262 = vand.u32 2147483647, %v252
        %vm263 = vcmp.eq.f32.partialorder %v262, 8.507059e+37
        %v264 = vand.u32 %v252, 2147483648
        %v265 = vor.u32 1.1754944e-38, %v264
        %v266 = vsel %vm263, %v265, %v261
        %v267 = vmul.f32 %v238, %v266
        %v268 = vld [vmem:[%s205] sm:$0x1]
        %v269 = vld [vmem:[%s2] sm:$0xff]
        %v270 = vld [vmem:[%s2 + $0x8] sm:$0xff]
        %v271 = vld [vmem:[%s2 + $0x10] sm:$0xff]
        %v272 = vld [vmem:[%s2 + $0x18] sm:$0xff]
        %v273 = vld [vmem:[%s2 + $0x20] sm:$0xff]
        %v274 = vld [vmem:[%s2 + $0x28] sm:$0xff]
        %v275 = vld [vmem:[%s2 + $0x30] sm:$0xff]
        %v276 = vld [vmem:[%s2 + $0x38] sm:$0xff]
        %vm277 = vcmask 261120
        %v279 = vsel %vm277, %v268, 0
        %281 = vmatpush.msra.mxu0 0.0
        %282 = vmatpush.msra.mxu0 0.0
        %283 = vmatpush.msra.mxu0 0.0
        %284 = vmatpush.msra.mxu0 0.0
        %285 = vmatpush.msra.mxu0 0.0
        %286 = vmatpush.msra.mxu0 0.0
        %287 = vmatpush.msra.mxu0 0.0
        %288 = vmatpush.msra.mxu0 0.0
        %289 = vmatpush.msra.mxu0 0.0
        %290 = vmatpush.msra.mxu0 0.0
        %291 = vmatpush.msra.mxu0 0.0
        %292 = vmatpush.msra.mxu0 0.0
        %293 = vmatpush.msra.mxu0 %v276
        %294 = vmatpush.msra.mxu0 %v275
        %295 = vmatpush.msra.mxu0 %v274
        %296 = vmatpush.msra.mxu0 %v273
        %297 = vmatmul.f32.gmra.mxu0 %v279
        %v298 = vpop.f32.mrf.mxu0
        %v299 = vadd.f32 0.0, %v298
        %300 = vdwg.mxu0
        %v302 = vsel %vm277, %v267, 0
        %304 = vmatpush.msra.mxu0 0.0
        %305 = vmatpush.msra.mxu0 0.0
        %306 = vmatpush.msra.mxu0 0.0
        %307 = vmatpush.msra.mxu0 0.0
        %308 = vmatpush.msra.mxu0 0.0
        %309 = vmatpush.msra.mxu0 0.0
        %310 = vmatpush.msra.mxu0 0.0
        %311 = vmatpush.msra.mxu0 0.0
        %312 = vmatpush.msra.mxu0 0.0
        %313 = vmatpush.msra.mxu0 0.0
        %314 = vmatpush.msra.mxu0 0.0
        %315 = vmatpush.msra.mxu0 0.0
        %316 = vmatpush.msra.mxu0 %v272
        %317 = vmatpush.msra.mxu0 %v271
        %318 = vmatpush.msra.mxu0 %v270
        %319 = vmatpush.msra.mxu0 %v269
        %320 = vmatmul.f32.gmra.mxu0 %v302
        %v321 = vpop.f32.mrf.mxu0
        %v322 = vadd.f32 %v299, %v321
        %323 = vdwg.mxu0
        %v324 = vld [vmem:[%s3] sm:$0x1]
        %v325 = vadd.f32 %v322, %v324
        %vm326 = vcmask 16384
        %v327 = vsel %vm326, %v325, -inf
        %328 = vmax.xlane.f32.xlu0 %v327
        %v329 = vpop.xlane.xlu0 %328
        %v330 = vsub.f32 %v325, %v329
        %v331 = vmul.f32 %v330, 1.442695
        %v332 = vpow.pop %v331
        %v333 = vsel %vm326, %v332, 0.0
        %334 = vadd.xlane.f32.xlu0 %v333
        %v335 = vpop.xlane.xlu0 %334
        %v336 = vrcp.pop %v335
        %v337 = vmul.f32 %v335, %v336
        %v338 = vsub.f32 1.0, %v337
        %v339 = vmul.f32 %v336, %v338
        %v340 = vadd.f32 %v336, %v339
        %vm341 = vweird.f32 %v335
        %vm342 = vweird.f32 %v336
        %vm343 = vmor %vm341, %vm342
        %v344 = vsel %vm343, %v336, %v340
        %v345 = vand.u32 2147483647, %v335
        %vm346 = vcmp.eq.f32.partialorder %v345, 8.507059e+37
        %v347 = vand.u32 %v335, 2147483648
        %v348 = vor.u32 1.1754944e-38, %v347
        %v349 = vsel %vm346, %v348, %v344
        %v350 = vmul.f32 %v332, %v349
        %351 = vst.msk [vmem:[%s200] sm:$0x1] %vm326, %v350
        %s352 = sand.u32 %s120, 1
        %s353 = scalar_lea.sflag [#allocation3], %s352
        %s354 = sand.u32 %s120, 1
        %s355 = scalar_lea.vmem [#allocation2], %s354
        // Predicated region
        $region37: #{wx_forward.27} parent=35 // pred_check
          %p356 = pneg %p130
        $region38: #{wx_forward.27} parent=35 // pred_check_branch
          %358 = sbr.rel (%p356) target = $region40
        $region39: #{wx_forward.27} parent=35 // pred_region
          %360 = vsyncadd %s353, 0
          %s361 = scalar_lea.hbm %s4, %s18
          %s363 = sshll.u32 %s355, 4
          %s364 = int_to_ptr.vmem [resolvable:$true] %s363
          %s365 = sshll.u32 %s361, 4
          %s366 = int_to_ptr.hbm [resolvable:$true] %s365
          %368 = dma.vmem_to_hbm [thread:$0]  %s364, 16, %s366, %s353
        $region40: #{wx_forward.27} parent=35 // pred_fallthru
          _
      $region36: #{wx_forward.27} parent=5 // pred_fallthru
        _
      %p369 = scmp.le.s32.totalorder 2, %s13
      // Predicated region
      $region41: #{wx_forward.27} parent=5 // pred_check
        %p370 = pneg %p369
      $region42: #{wx_forward.27} parent=5 // pred_check_branch
        %372 = sbr.rel (%p370) target = $region44
      $region43: #{wx_forward.27} parent=5 // pred_region
        %s373 = ssub.s32 %s13, 2
        // Predicated region
        $region45: #{wx_forward.27} parent=43 // pred_check
          %p374 = pneg %p136
        $region46: #{wx_forward.27} parent=43 // pred_check_branch
          %376 = sbr.rel (%p374) target = $region48
        $region47: #{wx_forward.27} parent=43 // pred_region
          %s377 = sand.u32 %s121, 1
          %s378 = scalar_lea.sflag [#allocation3], %s377
          %s379 = sand.u32 %s121, 1
          %s380 = scalar_lea.vmem [#allocation2], %s379
          %382 = dma.done %s378, 16
        $region48: #{wx_forward.27} parent=43 // pred_fallthru
          _
      $region44: #{wx_forward.27} parent=5 // pred_fallthru
        _
    $region6: #{wx_forward.27} parent=1 // loop_footer
      %s17 = sadd.s32 1, %s13
    $region7: #{wx_forward.27} parent=1 // loop_footer_branch
      %12 = sbr.rel target = $region3
    $region8: #{wx_forward.27} parent=1 // loop_exit
      _
    %383 = vsyncpa [#allocation3], 1
    %s384 = scalar_lea.sflag [#allocation3], 1
    %385 = vsyncpa %s384, 1

</llo_original>
